<compile_context>
chip_gen: v7x
topology: tpu7x:2x2x1
jax: 0.10.0
libtpu: 0.0.40
codegen_flags: <defaults>
</compile_context>

<pallas_src>
import jax
import jax.numpy as jnp
from jax.experimental import pallas as pl
from jax.experimental.pallas import tpu as pltpu

LATENT_DIM = 100
K_PAD = 128                 # latent dim padded to a lane multiple
H1, H2, H3 = 256, 512, 1024
OUT_DIM = 28 * 28           # 784 (kept unpadded; last-dim-==-full-dim block)


def _round_up(x, m):
    return ((x + m - 1) // m) * m


def _leaky_relu(x, slope=0.2):
    return jnp.where(x > 0, x, slope * x)


def _bf16_elementwise_ok():
    """bf16 VPU exists on v6e/v7x; keep f32 elementwise on v2-v5."""
    try:
        kind = jax.devices()[0].device_kind.lower()
    except Exception:
        return False
    return not any(tag in kind for tag in ("v2", "v3", "v4", "v5"))


def _make_kernel(compute_dtype):
    def kernel(z_ref,
               w1_ref, b1_ref,
               w2_ref, b2_ref,
               w3_ref, b3_ref,
               w4_ref, b4_ref,
               out_ref):
        # All weights + z are bf16; matmuls accumulate in f32 on the MXU.
        # Hidden-layer bias add / LeakyReLU run in `compute_dtype`
        # (bf16 on v6e/v7x, f32 on v5e and older).
        def hidden(h, w_ref, b_ref):
            acc = jnp.dot(h.astype(jnp.bfloat16), w_ref[...],
                          preferred_element_type=jnp.float32)
            return _leaky_relu(acc.astype(compute_dtype)
                               + b_ref[...].astype(compute_dtype))

        h = hidden(z_ref[...], w1_ref, b1_ref)      # (TM, 256)
        h = hidden(h, w2_ref, b2_ref)               # (TM, 512)
        h = hidden(h, w3_ref, b3_ref)               # (TM, 1024)

        # Final layer: keep tanh input + output store in f32.
        acc = jnp.dot(h.astype(jnp.bfloat16), w4_ref[...],
                      preferred_element_type=jnp.float32)
        out_ref[...] = jnp.tanh(acc + b4_ref[...]).astype(out_ref.dtype)

    return kernel


def _pick_batch_tile(B):
    """Biggest tile up to 256 rows; prefer >=2 grid steps so v7x megacore
    can shard the batch axis across TensorCores."""
    TM = min(256, _round_up(max(B, 1), 8))
    if B > 8 and _round_up(B, TM) // TM < 2:
        TM = max(8, _round_up(pl.cdiv(B, 2), 8))
    return TM


def generator_forward(z, params):
    """z: (B, latent_dim) f32 -> img: (B, 1, 28, 28) f32."""
    B = z.shape[0]
    w1, b1, w2, b2, w3, b3, w4, b4 = params  # bf16 weights / f32 biases

    TM = _pick_batch_tile(B)
    B_pad = _round_up(B, TM)
    grid = (B_pad // TM,)

    # Zero-pad batch rows and latent columns; padded K columns (and the
    # matching zero rows of w1) contribute nothing to the matmul.
    z_pad = jnp.zeros((B_pad, K_PAD), jnp.bfloat16)
    z_pad = z_pad.at[:B, :LATENT_DIM].set(z.astype(jnp.bfloat16))

    compute_dtype = jnp.bfloat16 if _bf16_elementwise_ok() else jnp.float32
    kernel = _make_kernel(compute_dtype)

    flops = 2 * B_pad * (K_PAD * H1 + H1 * H2 + H2 * H3 + H3 * OUT_DIM)
    bytes_accessed = (
        z_pad.size * z_pad.dtype.itemsize
        + sum(int(p.size) * p.dtype.itemsize for p in params)
        + B_pad * OUT_DIM * 4
    )
    cost = pl.CostEstimate(flops=flops,
                           transcendentals=B_pad * OUT_DIM,
                           bytes_accessed=bytes_accessed)

    const = lambda i: (0, 0)   # weights / biases: same block every iteration
    flat = pl.pallas_call(
        kernel,
        out_shape=jax.ShapeDtypeStruct((B_pad, OUT_DIM), jnp.float32),
        grid=grid,
        in_specs=[
            pl.BlockSpec((TM, K_PAD), lambda i: (i, 0)),   # z tile
            pl.BlockSpec((K_PAD, H1), const),              # w1
            pl.BlockSpec((1, H1), const),                  # b1
            pl.BlockSpec((H1, H2), const),                 # w2
            pl.BlockSpec((1, H2), const),                  # b2
            pl.BlockSpec((H2, H3), const),                 # w3
            pl.BlockSpec((1, H3), const),                  # b3
            pl.BlockSpec((H3, OUT_DIM), const),            # w4
            pl.BlockSpec((1, OUT_DIM), const),             # b4
        ],
        out_specs=pl.BlockSpec((TM, OUT_DIM), lambda i: (i, 0)),
        compiler_params=pltpu.CompilerParams(
            dimension_semantics=("parallel",),
            vmem_limit_bytes=32 * 1024 * 1024),
        cost_estimate=cost,
    )(z_pad, w1, b1, w2, b2, w3, b3, w4, b4)

    # Batch-pad slice (no-op when B == B_pad) + metadata-only NCHW view.
    return flat[:B].reshape(-1, 1, 28, 28)


def init_params(key):
    """PyTorch-like uniform(-1/sqrt(fan_in), +) init.
    Weights -> bf16 (w1 lane-padded on K); biases -> f32."""
    dims = [(LATENT_DIM, H1), (H1, H2), (H2, H3), (H3, OUT_DIM)]
    raw = []
    for fan_in, fan_out in dims:
        kw, kb, key = jax.random.split(key, 3)
        bound = 1.0 / jnp.sqrt(float(fan_in))
        w = jax.random.uniform(kw, (fan_in, fan_out), jnp.float32, -bound, bound)
        b = jax.random.uniform(kb, (1, fan_out), jnp.float32, -bound, bound)
        raw.append((w, b))

    (w1, b1), (w2, b2), (w3, b3), (w4, b4) = raw

    w1p = jnp.zeros((K_PAD, H1), jnp.float32).at[:LATENT_DIM, :].set(w1)

    return (w1p.astype(jnp.bfloat16), b1,
            w2.astype(jnp.bfloat16), b2,
            w3.astype(jnp.bfloat16), b3,
            w4.astype(jnp.bfloat16), b4)


def _reference_forward(z, params, compute_dtype):
    """Pure-JAX reference mirroring the kernel's exact dtype flow."""
    w1, b1, w2, b2, w3, b3, w4, b4 = params
    B = z.shape[0]
    h = jnp.zeros((B, K_PAD), jnp.bfloat16).at[:, :LATENT_DIM].set(
        z.astype(jnp.bfloat16))
    for w, b in ((w1, b1), (w2, b2), (w3, b3)):
        acc = jnp.dot(h.astype(jnp.bfloat16), w,
                      preferred_element_type=jnp.float32)
        h = _leaky_relu(acc.astype(compute_dtype) + b.astype(compute_dtype))
    acc = jnp.dot(h.astype(jnp.bfloat16), w4,
                  preferred_element_type=jnp.float32)
    out = jnp.tanh(acc + b4).astype(jnp.float32)
    return out.reshape(-1, 1, 28, 28)


if __name__ == "__main__":
    key = jax.random.PRNGKey(0)
    kz, kp = jax.random.split(key)

    batch = 8
    z = jax.random.normal(kz, (batch, LATENT_DIM), dtype=jnp.float32)
    params = init_params(kp)

    img = generator_forward(z, params)
    img = jax.block_until_ready(img)

    assert img.shape == (batch, 1, 28, 28), img.shape
    assert img.dtype == jnp.float32
    # tanh output range sanity check
    assert bool(jnp.all(jnp.abs(img) <= 1.0 + 1e-6))

    # Tolerance check vs. a pure-JAX reference with identical dtype flow.
    compute_dtype = jnp.bfloat16 if _bf16_elementwise_ok() else jnp.float32
    ref = _reference_forward(z, params, compute_dtype)
    assert bool(jnp.allclose(img, ref, atol=2e-2, rtol=2e-2))

    print("KERNEL_OK")
</pallas_src>

<mosaic_0001>
module attributes {stable_mosaic.version = 11 : i64} {
  func.func @kernel(%arg0: i32, %arg1: memref<8x128xbf16, #tpu.memory_space<vmem>>, %arg2: memref<128x256xbf16, #tpu.memory_space<vmem>>, %arg3: memref<1x256xf32, #tpu.memory_space<vmem>>, %arg4: memref<256x512xbf16, #tpu.memory_space<vmem>>, %arg5: memref<1x512xf32, #tpu.memory_space<vmem>>, %arg6: memref<512x1024xbf16, #tpu.memory_space<vmem>>, %arg7: memref<1x1024xf32, #tpu.memory_space<vmem>>, %arg8: memref<1024x784xbf16, #tpu.memory_space<vmem>>, %arg9: memref<1x784xf32, #tpu.memory_space<vmem>>, %arg10: memref<8x784xf32, #tpu.memory_space<vmem>>) attributes {dimension_semantics = [#tpu.dimension_semantics<parallel>], iteration_bounds = array<i64: 1>, scalar_prefetch = 0 : i64, scratch_operands = 0 : i64, tpu.core_type = #tpu.core_type<tc>, window_params = [{transform_indices = @transform_0, window_bounds = array<i64: 8, 128>}, {pipeline_mode = #tpu.pipeline_mode<synchronous>, transform_indices = @transform_1, window_bounds = array<i64: 128, 256>}, {pipeline_mode = #tpu.pipeline_mode<synchronous>, transform_indices = @transform_2, window_bounds = array<i64: 1, 256>}, {pipeline_mode = #tpu.pipeline_mode<synchronous>, transform_indices = @transform_3, window_bounds = array<i64: 256, 512>}, {pipeline_mode = #tpu.pipeline_mode<synchronous>, transform_indices = @transform_4, window_bounds = array<i64: 1, 512>}, {pipeline_mode = #tpu.pipeline_mode<synchronous>, transform_indices = @transform_5, window_bounds = array<i64: 512, 1024>}, {pipeline_mode = #tpu.pipeline_mode<synchronous>, transform_indices = @transform_6, window_bounds = array<i64: 1, 1024>}, {pipeline_mode = #tpu.pipeline_mode<synchronous>, transform_indices = @transform_7, window_bounds = array<i64: 1024, 784>}, {pipeline_mode = #tpu.pipeline_mode<synchronous>, transform_indices = @transform_8, window_bounds = array<i64: 1, 784>}, {transform_indices = @transform_9, window_bounds = array<i64: 8, 784>}]} {
    %c0 = arith.constant 0 : index
    %c0_0 = arith.constant 0 : index
    %0 = vector.load %arg1[%c0, %c0_0] : memref<8x128xbf16, #tpu.memory_space<vmem>>, vector<8x128xbf16>
    %c0_1 = arith.constant 0 : index
    %c0_2 = arith.constant 0 : index
    %1 = vector.load %arg2[%c0_1, %c0_2] : memref<128x256xbf16, #tpu.memory_space<vmem>>, vector<128x256xbf16>
    %cst = arith.constant dense<0.000000e+00> : vector<8x256xf32>
    %2 = tpu.matmul %0, %1, %cst {dimension_numbers = #tpu.dot_dimension_numbers<[1], [0], [0], [1], [0, 0, 1, 1], [], []>} : vector<8x128xbf16>, vector<128x256xbf16>, vector<8x256xf32> -> vector<8x256xf32>
    %3 = arith.truncf %2 : vector<8x256xf32> to vector<8x256xbf16>
    %c0_3 = arith.constant 0 : index
    %c0_4 = arith.constant 0 : index
    %4 = vector.load %arg3[%c0_3, %c0_4] : memref<1x256xf32, #tpu.memory_space<vmem>>, vector<1x256xf32>
    %5 = arith.truncf %4 : vector<1x256xf32> to vector<1x256xbf16>
    %6 = vector.broadcast %5 : vector<1x256xbf16> to vector<8x256xbf16>
    %7 = arith.addf %3, %6 : vector<8x256xbf16>
    %cst_5 = arith.constant 0.000000e+00 : bf16
    %8 = vector.broadcast %cst_5 : bf16 to vector<8x256xbf16>
    %9 = arith.cmpf ogt, %7, %8 : vector<8x256xbf16>
    %cst_6 = arith.constant 2.001950e-01 : bf16
    %10 = vector.broadcast %cst_6 : bf16 to vector<8x256xbf16>
    %11 = arith.mulf %10, %7 : vector<8x256xbf16>
    %12 = arith.select %9, %7, %11 : vector<8x256xi1>, vector<8x256xbf16>
    %c0_7 = arith.constant 0 : index
    %c0_8 = arith.constant 0 : index
    %13 = vector.load %arg4[%c0_7, %c0_8] : memref<256x512xbf16, #tpu.memory_space<vmem>>, vector<256x512xbf16>
    %cst_9 = arith.constant dense<0.000000e+00> : vector<8x512xf32>
    %14 = tpu.matmul %12, %13, %cst_9 {dimension_numbers = #tpu.dot_dimension_numbers<[1], [0], [0], [1], [0, 0, 1, 1], [], []>} : vector<8x256xbf16>, vector<256x512xbf16>, vector<8x512xf32> -> vector<8x512xf32>
    %15 = arith.truncf %14 : vector<8x512xf32> to vector<8x512xbf16>
    %c0_10 = arith.constant 0 : index
    %c0_11 = arith.constant 0 : index
    %16 = vector.load %arg5[%c0_10, %c0_11] : memref<1x512xf32, #tpu.memory_space<vmem>>, vector<1x512xf32>
    %17 = arith.truncf %16 : vector<1x512xf32> to vector<1x512xbf16>
    %18 = vector.broadcast %17 : vector<1x512xbf16> to vector<8x512xbf16>
    %19 = arith.addf %15, %18 : vector<8x512xbf16>
    %cst_12 = arith.constant 0.000000e+00 : bf16
    %20 = vector.broadcast %cst_12 : bf16 to vector<8x512xbf16>
    %21 = arith.cmpf ogt, %19, %20 : vector<8x512xbf16>
    %cst_13 = arith.constant 2.001950e-01 : bf16
    %22 = vector.broadcast %cst_13 : bf16 to vector<8x512xbf16>
    %23 = arith.mulf %22, %19 : vector<8x512xbf16>
    %24 = arith.select %21, %19, %23 : vector<8x512xi1>, vector<8x512xbf16>
    %c0_14 = arith.constant 0 : index
    %c0_15 = arith.constant 0 : index
    %25 = vector.load %arg6[%c0_14, %c0_15] : memref<512x1024xbf16, #tpu.memory_space<vmem>>, vector<512x1024xbf16>
    %cst_16 = arith.constant dense<0.000000e+00> : vector<8x1024xf32>
    %26 = tpu.matmul %24, %25, %cst_16 {dimension_numbers = #tpu.dot_dimension_numbers<[1], [0], [0], [1], [0, 0, 1, 1], [], []>} : vector<8x512xbf16>, vector<512x1024xbf16>, vector<8x1024xf32> -> vector<8x1024xf32>
    %27 = arith.truncf %26 : vector<8x1024xf32> to vector<8x1024xbf16>
    %c0_17 = arith.constant 0 : index
    %c0_18 = arith.constant 0 : index
    %28 = vector.load %arg7[%c0_17, %c0_18] : memref<1x1024xf32, #tpu.memory_space<vmem>>, vector<1x1024xf32>
    %29 = arith.truncf %28 : vector<1x1024xf32> to vector<1x1024xbf16>
    %30 = vector.broadcast %29 : vector<1x1024xbf16> to vector<8x1024xbf16>
    %31 = arith.addf %27, %30 : vector<8x1024xbf16>
    %cst_19 = arith.constant 0.000000e+00 : bf16
    %32 = vector.broadcast %cst_19 : bf16 to vector<8x1024xbf16>
    %33 = arith.cmpf ogt, %31, %32 : vector<8x1024xbf16>
    %cst_20 = arith.constant 2.001950e-01 : bf16
    %34 = vector.broadcast %cst_20 : bf16 to vector<8x1024xbf16>
    %35 = arith.mulf %34, %31 : vector<8x1024xbf16>
    %36 = arith.select %33, %31, %35 : vector<8x1024xi1>, vector<8x1024xbf16>
    %c0_21 = arith.constant 0 : index
    %c0_22 = arith.constant 0 : index
    %37 = vector.load %arg8[%c0_21, %c0_22] : memref<1024x784xbf16, #tpu.memory_space<vmem>>, vector<1024x784xbf16>
    %cst_23 = arith.constant dense<0.000000e+00> : vector<8x784xf32>
    %38 = tpu.matmul %36, %37, %cst_23 {dimension_numbers = #tpu.dot_dimension_numbers<[1], [0], [0], [1], [0, 0, 1, 1], [], []>} : vector<8x1024xbf16>, vector<1024x784xbf16>, vector<8x784xf32> -> vector<8x784xf32>
    %c0_24 = arith.constant 0 : index
    %c0_25 = arith.constant 0 : index
    %39 = vector.load %arg9[%c0_24, %c0_25] : memref<1x784xf32, #tpu.memory_space<vmem>>, vector<1x784xf32>
    %40 = vector.broadcast %39 : vector<1x784xf32> to vector<8x784xf32>
    %41 = arith.addf %38, %40 : vector<8x784xf32>
    %42 = math.tanh %41 : vector<8x784xf32>
    %c0_26 = arith.constant 0 : index
    %c0_27 = arith.constant 0 : index
    %43 = vector.load %arg10[%c0_26, %c0_27] : memref<8x784xf32, #tpu.memory_space<vmem>>, vector<8x784xf32>
    tpu.vector_store %arg10[%c0_26, %c0_27], %42 {strides = array<i32>} : memref<8x784xf32, #tpu.memory_space<vmem>>, vector<8x784xf32>,
    return
  }
  func.func @transform_0(%arg0: i32) -> (i32, i32) {
    %c0_i32 = arith.constant 0 : i32
    %c0_i32_0 = arith.constant 0 : i32
    return %arg0, %c0_i32 : i32, i32
  }
  func.func @transform_1(%arg0: i32) -> (i32, i32) {
    %c0_i32 = arith.constant 0 : i32
    %c0_i32_0 = arith.constant 0 : i32
    %c0_i32_1 = arith.constant 0 : i32
    return %c0_i32, %c0_i32_0 : i32, i32
  }
  func.func @transform_2(%arg0: i32) -> (i32, i32) {
    %c0_i32 = arith.constant 0 : i32
    %c0_i32_0 = arith.constant 0 : i32
    %c0_i32_1 = arith.constant 0 : i32
    return %c0_i32, %c0_i32_0 : i32, i32
  }
  func.func @transform_3(%arg0: i32) -> (i32, i32) {
    %c0_i32 = arith.constant 0 : i32
    %c0_i32_0 = arith.constant 0 : i32
    %c0_i32_1 = arith.constant 0 : i32
    return %c0_i32, %c0_i32_0 : i32, i32
  }
  func.func @transform_4(%arg0: i32) -> (i32, i32) {
    %c0_i32 = arith.constant 0 : i32
    %c0_i32_0 = arith.constant 0 : i32
    %c0_i32_1 = arith.constant 0 : i32
    return %c0_i32, %c0_i32_0 : i32, i32
  }
  func.func @transform_5(%arg0: i32) -> (i32, i32) {
    %c0_i32 = arith.constant 0 : i32
    %c0_i32_0 = arith.constant 0 : i32
    %c0_i32_1 = arith.constant 0 : i32
    return %c0_i32, %c0_i32_0 : i32, i32
  }
  func.func @transform_6(%arg0: i32) -> (i32, i32) {
    %c0_i32 = arith.constant 0 : i32
    %c0_i32_0 = arith.constant 0 : i32
    %c0_i32_1 = arith.constant 0 : i32
    return %c0_i32, %c0_i32_0 : i32, i32
  }
  func.func @transform_7(%arg0: i32) -> (i32, i32) {
    %c0_i32 = arith.constant 0 : i32
    %c0_i32_0 = arith.constant 0 : i32
    %c0_i32_1 = arith.constant 0 : i32
    return %c0_i32, %c0_i32_0 : i32, i32
  }
  func.func @transform_8(%arg0: i32) -> (i32, i32) {
    %c0_i32 = arith.constant 0 : i32
    %c0_i32_0 = arith.constant 0 : i32
    %c0_i32_1 = arith.constant 0 : i32
    return %c0_i32, %c0_i32_0 : i32, i32
  }
  func.func @transform_9(%arg0: i32) -> (i32, i32) {
    %c0_i32 = arith.constant 0 : i32
    %c0_i32_0 = arith.constant 0 : i32
    return %arg0, %c0_i32 : i32, i32
  }
}

</mosaic_0001>

<llo_original>
// kernel: tpu_custom_call.1
$region0: #{tpu_custom_call.1}
  #allocation0 [shape = 'u32[]', space=smem, size = 0x4, offset = 0x4, fixed_abs, tag = 'smem constant byte address 0x4 - core index']
  #allocation1 [shape = 'u32[144,128]{1,0:T(1,128)}', space=vmem, size = 0x12000, scoped, tag = 'internal scratch']
  %s0 = inlined_call_operand.vmem [shape: bf16[8,128], index: 0, kind: input, shape index: {}]
  %s1 = inlined_call_operand.vmem [shape: bf16[128,256], index: 1, kind: input, shape index: {}]
  %s2 = inlined_call_operand.vmem [shape: f32[1,256], index: 2, kind: input, shape index: {}]
  %s3 = inlined_call_operand.vmem [shape: bf16[256,512], index: 3, kind: input, shape index: {}]
  %s4 = inlined_call_operand.vmem [shape: f32[1,512], index: 4, kind: input, shape index: {}]
  %s5 = inlined_call_operand.vmem [shape: bf16[512,1024], index: 5, kind: input, shape index: {}]
  %s6 = inlined_call_operand.vmem [shape: f32[1,1024], index: 6, kind: input, shape index: {}]
  %s7 = inlined_call_operand.vmem [shape: bf16[1024,784], index: 7, kind: input, shape index: {}]
  %s8 = inlined_call_operand.vmem [shape: f32[1,784], index: 8, kind: input, shape index: {}]
  %s9 = inlined_call_operand.hbm [shape: f32[8,784], index: 9, kind: output, shape index: {}]
  %s10 = sld [smem:[#allocation0]]
  $region46: #{tpu_custom_call.1} parent=0
    _
  %s12 = ssub.s32 1, %s10
  %s13 = scalar_select 0, %s12, %s10
  $region1: #{tpu_custom_call.1} parent=0
    #allocation2 [shape = 'u8[28672]{0}', space=vmem, size = 0x7000, scoped, tag = 'output window, operand 0, single buffered']
    #allocation3 [shape = 's32[1]{0}', space=sflag, size = 0x4, scoped, tag = 'scoped memory for tpu_custom_call.1']
    %14 = vsyncpa [#allocation3], 0
    // Predicated region
    $region2: #{tpu_custom_call.1} parent=1 // pred_check
      _
    $region3: #{tpu_custom_call.1} parent=1 // pred_check_branch
      %16 = sbr.rel (0) target = $region5
    $region4: #{tpu_custom_call.1} parent=1 // pred_region
      _
    $region5: #{tpu_custom_call.1} parent=1 // pred_fallthru
      _
    // Predicated region
    $region6: #{tpu_custom_call.1} parent=1 // pred_check
      _
    $region7: #{tpu_custom_call.1} parent=1 // pred_check_branch
      %18 = sbr.rel (0) target = $region9
    $region8: #{tpu_custom_call.1} parent=1 // pred_region
      _
    $region9: #{tpu_custom_call.1} parent=1 // pred_fallthru
      _
    // Predicated region
    $region10: #{tpu_custom_call.1} parent=1 // pred_check
      _
    $region11: #{tpu_custom_call.1} parent=1 // pred_check_branch
      %20 = sbr.rel (0) target = $region13
    $region12: #{tpu_custom_call.1} parent=1 // pred_region
      _
    $region13: #{tpu_custom_call.1} parent=1 // pred_fallthru
      _
    // Predicated region
    $region14: #{tpu_custom_call.1} parent=1 // pred_check
      _
    $region15: #{tpu_custom_call.1} parent=1 // pred_check_branch
      %22 = sbr.rel (0) target = $region17
    $region16: #{tpu_custom_call.1} parent=1 // pred_region
      _
    $region17: #{tpu_custom_call.1} parent=1 // pred_fallthru
      _
    // Predicated region
    $region18: #{tpu_custom_call.1} parent=1 // pred_check
      _
    $region19: #{tpu_custom_call.1} parent=1 // pred_check_branch
      %24 = sbr.rel (0) target = $region21
    $region20: #{tpu_custom_call.1} parent=1 // pred_region
      _
    $region21: #{tpu_custom_call.1} parent=1 // pred_fallthru
      _
    // Predicated region
    $region22: #{tpu_custom_call.1} parent=1 // pred_check
      _
    $region23: #{tpu_custom_call.1} parent=1 // pred_check_branch
      %26 = sbr.rel (0) target = $region25
    $region24: #{tpu_custom_call.1} parent=1 // pred_region
      _
    $region25: #{tpu_custom_call.1} parent=1 // pred_fallthru
      _
    // Predicated region
    $region26: #{tpu_custom_call.1} parent=1 // pred_check
      _
    $region27: #{tpu_custom_call.1} parent=1 // pred_check_branch
      %28 = sbr.rel (0) target = $region29
    $region28: #{tpu_custom_call.1} parent=1 // pred_region
      _
    $region29: #{tpu_custom_call.1} parent=1 // pred_fallthru
      _
    // Predicated region
    $region30: #{tpu_custom_call.1} parent=1 // pred_check
      _
    $region31: #{tpu_custom_call.1} parent=1 // pred_check_branch
      %30 = sbr.rel (0) target = $region33
    $region32: #{tpu_custom_call.1} parent=1 // pred_region
      _
    $region33: #{tpu_custom_call.1} parent=1 // pred_fallthru
      _
    // Predicated region
    $region34: #{tpu_custom_call.1} parent=1 // pred_check
      _
    $region35: #{tpu_custom_call.1} parent=1 // pred_check_branch
      %32 = sbr.rel (0) target = $region37
    $region36: #{tpu_custom_call.1} parent=1 // pred_region
      _
    $region37: #{tpu_custom_call.1} parent=1 // pred_fallthru
      _
    %v35 = vld [vmem:[%s0] sm:$0xf]
    %v36 = vld [vmem:[%s1] sm:$0xff]
    %v37 = vld [vmem:[%s1 + $0x8] sm:$0xff]
    %v38 = vld [vmem:[%s1 + $0x10] sm:$0xff]
    %v39 = vld [vmem:[%s1 + $0x18] sm:$0xff]
    %v40 = vld [vmem:[%s1 + $0x20] sm:$0xff]
    %v41 = vld [vmem:[%s1 + $0x28] sm:$0xff]
    %v42 = vld [vmem:[%s1 + $0x30] sm:$0xff]
    %v43 = vld [vmem:[%s1 + $0x38] sm:$0xff]
    %v44 = vld [vmem:[%s1 + $0x40] sm:$0xff]
    %v45 = vld [vmem:[%s1 + $0x48] sm:$0xff]
    %v46 = vld [vmem:[%s1 + $0x50] sm:$0xff]
    %v47 = vld [vmem:[%s1 + $0x58] sm:$0xff]
    %v48 = vld [vmem:[%s1 + $0x60] sm:$0xff]
    %v49 = vld [vmem:[%s1 + $0x68] sm:$0xff]
    %v50 = vld [vmem:[%s1 + $0x70] sm:$0xff]
    %v51 = vld [vmem:[%s1 + $0x78] sm:$0xff]
    %v68 = vunpack.c.l.b16 %v36
    %v69 = vunpack.c.h.b16 %v36
    %v70 = vunpack.c.l.b16 %v37
    %v71 = vunpack.c.h.b16 %v37
    %v72 = vunpack.c.l.b16 %v38
    %v73 = vunpack.c.h.b16 %v38
    %v74 = vunpack.c.l.b16 %v39
    %v75 = vunpack.c.h.b16 %v39
    %v76 = vunpack.c.l.b16 %v40
    %v77 = vunpack.c.h.b16 %v40
    %v78 = vunpack.c.l.b16 %v41
    %v79 = vunpack.c.h.b16 %v41
    %v80 = vunpack.c.l.b16 %v42
    %v81 = vunpack.c.h.b16 %v42
    %v82 = vunpack.c.l.b16 %v43
    %v83 = vunpack.c.h.b16 %v43
    %v84 = vunpack.c.l.b16 %v44
    %v85 = vunpack.c.h.b16 %v44
    %v86 = vunpack.c.l.b16 %v45
    %v87 = vunpack.c.h.b16 %v45
    %v88 = vunpack.c.l.b16 %v46
    %v89 = vunpack.c.h.b16 %v46
    %v90 = vunpack.c.l.b16 %v47
    %v91 = vunpack.c.h.b16 %v47
    %v92 = vunpack.c.l.b16 %v48
    %v93 = vunpack.c.h.b16 %v48
    %v94 = vunpack.c.l.b16 %v49
    %v95 = vunpack.c.h.b16 %v49
    %v96 = vunpack.c.l.b16 %v50
    %v97 = vunpack.c.h.b16 %v50
    %v98 = vunpack.c.l.b16 %v51
    %v99 = vunpack.c.h.b16 %v51
    %v100 = vpack.c.b16 %v70, %v68
    %v101 = vpack.c.b16 %v71, %v69
    %v102 = vpack.c.b16 %v74, %v72
    %v103 = vpack.c.b16 %v75, %v73
    %v104 = vpack.c.b16 %v78, %v76
    %v105 = vpack.c.b16 %v79, %v77
    %v106 = vpack.c.b16 %v82, %v80
    %v107 = vpack.c.b16 %v83, %v81
    %v108 = vpack.c.b16 %v86, %v84
    %v109 = vpack.c.b16 %v87, %v85
    %v110 = vpack.c.b16 %v90, %v88
    %v111 = vpack.c.b16 %v91, %v89
    %v112 = vpack.c.b16 %v94, %v92
    %v113 = vpack.c.b16 %v95, %v93
    %v114 = vpack.c.b16 %v98, %v96
    %v115 = vpack.c.b16 %v99, %v97
    %132 = vmatprep.subr.bf16.mxu0 %v101
    %133 = vmatpush1.bf16.msra.mxu0 %v100
    %134 = vmatprep.subr.bf16.mxu0 %v103
    %135 = vmatpush1.bf16.msra.mxu0 %v102
    %136 = vmatprep.subr.bf16.mxu0 %v105
    %137 = vmatpush1.bf16.msra.mxu0 %v104
    %138 = vmatprep.subr.bf16.mxu0 %v107
    %139 = vmatpush1.bf16.msra.mxu0 %v106
    %140 = vmatprep.subr.bf16.mxu0 %v109
    %141 = vmatpush1.bf16.msra.mxu0 %v108
    %142 = vmatprep.subr.bf16.mxu0 %v111
    %143 = vmatpush1.bf16.msra.mxu0 %v110
    %144 = vmatprep.subr.bf16.mxu0 %v113
    %145 = vmatpush1.bf16.msra.mxu0 %v112
    %146 = vmatprep.subr.bf16.mxu0 %v115
    %147 = vmatpush1.bf16.msra.mxu0 %v114
    %148 = vmatprep.subr.bf16.mxu0 0
    %149 = vmatpush1.bf16.msra.mxu0 0
    %150 = vmatprep.subr.bf16.mxu0 0
    %151 = vmatpush1.bf16.msra.mxu0 0
    %152 = vmatprep.subr.bf16.mxu0 0
    %153 = vmatpush1.bf16.msra.mxu0 0
    %154 = vmatprep.subr.bf16.mxu0 0
    %155 = vmatpush1.bf16.msra.mxu0 0
    %156 = vmatprep.subr.bf16.mxu0 0
    %157 = vmatpush1.bf16.msra.mxu0 0
    %158 = vmatprep.subr.bf16.mxu0 0
    %159 = vmatpush1.bf16.msra.mxu0 0
    %160 = vmatprep.subr.bf16.mxu0 0
    %161 = vmatpush1.bf16.msra.mxu0 0
    %162 = vmatprep.subr.bf16.mxu0 0
    %163 = vmatpush1.bf16.msra.mxu0 0
    %164 = vmatprep.mubr.bf16.mxu0 0
    %165 = vmatmul.mubr.bf16.gmra.mrb[0].mxu0 %v35
    %v166 = vpop.f32.mrb[0].mxu0
    %v167 = vadd.f32 0.0, %v166
    %v168 = vpop.f32.mrb[0].mxu0
    %v169 = vadd.f32 0.0, %v168
    %v170 = vpop.f32.mrb[0].mxu0
    %v171 = vpop.f32.mrb[0].mxu0
    %172 = vdwg.mxu0
    %v173 = vpack.c.bf16 %v167, %v167
    %v174 = vpack.c.bf16 %v169, %v169
    %v175 = vld [vmem:[%s2] sm:$0x3]
    %v177 = vlaneseq
    %v178 = vshrl.u32 %v177, 7
    %v179 = vsub.s32 0, %v178
    %v180 = vrot.slane %v175, %v179
    %v181 = vlaneseq
    %v182 = vshrl.u32 %v181, 7
    %v183 = vsub.s32 1, %v182
    %v184 = vrot.slane %v175, %v183
    %v187 = vpack.c.bf16 %v180, %v180
    %v188 = vpack.c.bf16 %v184, %v184
    %v190 = vpack.i.b16 %v187, %v187
    %v192 = vlaneseq
    %v193 = vshrl.u32 %v192, 7
    %v194 = vsub.s32 0, %v193
    %v195 = vrot.slane %v190, %v194
    %v197 = vpack.i.b16 %v188, %v188
    %v199 = vlaneseq
    %v200 = vshrl.u32 %v199, 7
    %v201 = vsub.s32 0, %v200
    %v202 = vrot.slane %v197, %v201
    %v203 = vadd.bf16 %v173, %v195
    %v204 = vadd.bf16 %v174, %v202
    %vm205 = vcmp.gt.bf16.partialorder %v203, 0
    %vm206 = vcmp.gt.bf16.partialorder %v204, 0
    %v207 = vmul.bf16 %v203, 1045249613
    %v208 = vmul.bf16 %v204, 1045249613
    %v209 = vsel %vm205, %v203, %v207
    %v210 = vsel %vm206, %v204, %v208
    %v211 = vld [vmem:[%s3] sm:$0xff]
    %v212 = vld [vmem:[%s3 + $0x8] sm:$0xff]
    %v213 = vld [vmem:[%s3 + $0x10] sm:$0xff]
    %v214 = vld [vmem:[%s3 + $0x18] sm:$0xff]
    %v215 = vld [vmem:[%s3 + $0x20] sm:$0xff]
    %v216 = vld [vmem:[%s3 + $0x28] sm:$0xff]
    %v217 = vld [vmem:[%s3 + $0x30] sm:$0xff]
    %v218 = vld [vmem:[%s3 + $0x38] sm:$0xff]
    %v219 = vld [vmem:[%s3 + $0x40] sm:$0xff]
    %v220 = vld [vmem:[%s3 + $0x48] sm:$0xff]
    %v221 = vld [vmem:[%s3 + $0x50] sm:$0xff]
    %v222 = vld [vmem:[%s3 + $0x58] sm:$0xff]
    %v223 = vld [vmem:[%s3 + $0x60] sm:$0xff]
    %v224 = vld [vmem:[%s3 + $0x68] sm:$0xff]
    %v225 = vld [vmem:[%s3 + $0x70] sm:$0xff]
    %v226 = vld [vmem:[%s3 + $0x78] sm:$0xff]
    %v227 = vld [vmem:[%s3 + $0x80] sm:$0xff]
    %v228 = vld [vmem:[%s3 + $0x88] sm:$0xff]
    %v229 = vld [vmem:[%s3 + $0x90] sm:$0xff]
    %v230 = vld [vmem:[%s3 + $0x98] sm:$0xff]
    %v231 = vld [vmem:[%s3 + $0xa0] sm:$0xff]
    %v232 = vld [vmem:[%s3 + $0xa8] sm:$0xff]
    %v233 = vld [vmem:[%s3 + $0xb0] sm:$0xff]
    %v234 = vld [vmem:[%s3 + $0xb8] sm:$0xff]
    %v235 = vld [vmem:[%s3 + $0xc0] sm:$0xff]
    %v236 = vld [vmem:[%s3 + $0xc8] sm:$0xff]
    %v237 = vld [vmem:[%s3 + $0xd0] sm:$0xff]
    %v238 = vld [vmem:[%s3 + $0xd8] sm:$0xff]
    %v239 = vld [vmem:[%s3 + $0xe0] sm:$0xff]
    %v240 = vld [vmem:[%s3 + $0xe8] sm:$0xff]
    %v241 = vld [vmem:[%s3 + $0xf0] sm:$0xff]
    %v242 = vld [vmem:[%s3 + $0xf8] sm:$0xff]
    %v243 = vld [vmem:[%s3 + $0x100] sm:$0xff]
    %v244 = vld [vmem:[%s3 + $0x108] sm:$0xff]
    %v245 = vld [vmem:[%s3 + $0x110] sm:$0xff]
    %v246 = vld [vmem:[%s3 + $0x118] sm:$0xff]
    %v247 = vld [vmem:[%s3 + $0x120] sm:$0xff]
    %v248 = vld [vmem:[%s3 + $0x128] sm:$0xff]
    %v249 = vld [vmem:[%s3 + $0x130] sm:$0xff]
    %v250 = vld [vmem:[%s3 + $0x138] sm:$0xff]
    %v251 = vld [vmem:[%s3 + $0x140] sm:$0xff]
    %v252 = vld [vmem:[%s3 + $0x148] sm:$0xff]
    %v253 = vld [vmem:[%s3 + $0x150] sm:$0xff]
    %v254 = vld [vmem:[%s3 + $0x158] sm:$0xff]
    %v255 = vld [vmem:[%s3 + $0x160] sm:$0xff]
    %v256 = vld [vmem:[%s3 + $0x168] sm:$0xff]
    %v257 = vld [vmem:[%s3 + $0x170] sm:$0xff]
    %v258 = vld [vmem:[%s3 + $0x178] sm:$0xff]
    %v259 = vld [vmem:[%s3 + $0x180] sm:$0xff]
    %v260 = vld [vmem:[%s3 + $0x188] sm:$0xff]
    %v261 = vld [vmem:[%s3 + $0x190] sm:$0xff]
    %v262 = vld [vmem:[%s3 + $0x198] sm:$0xff]
    %v263 = vld [vmem:[%s3 + $0x1a0] sm:$0xff]
    %v264 = vld [vmem:[%s3 + $0x1a8] sm:$0xff]
    %v265 = vld [vmem:[%s3 + $0x1b0] sm:$0xff]
    %v266 = vld [vmem:[%s3 + $0x1b8] sm:$0xff]
    %v267 = vld [vmem:[%s3 + $0x1c0] sm:$0xff]
    %v268 = vld [vmem:[%s3 + $0x1c8] sm:$0xff]
    %v269 = vld [vmem:[%s3 + $0x1d0] sm:$0xff]
    %v270 = vld [vmem:[%s3 + $0x1d8] sm:$0xff]
    %v271 = vld [vmem:[%s3 + $0x1e0] sm:$0xff]
    %v272 = vld [vmem:[%s3 + $0x1e8] sm:$0xff]
    %v273 = vld [vmem:[%s3 + $0x1f0] sm:$0xff]
    %v274 = vld [vmem:[%s3 + $0x1f8] sm:$0xff]
    %v339 = vunpack.c.l.b16 %v211
    %v340 = vunpack.c.h.b16 %v211
    %v341 = vunpack.c.l.b16 %v212
    %v342 = vunpack.c.h.b16 %v212
    %v343 = vunpack.c.l.b16 %v213
    %v344 = vunpack.c.h.b16 %v213
    %v345 = vunpack.c.l.b16 %v214
    %v346 = vunpack.c.h.b16 %v214
    %v347 = vunpack.c.l.b16 %v215
    %v348 = vunpack.c.h.b16 %v215
    %v349 = vunpack.c.l.b16 %v216
    %v350 = vunpack.c.h.b16 %v216
    %v351 = vunpack.c.l.b16 %v217
    %v352 = vunpack.c.h.b16 %v217
    %v353 = vunpack.c.l.b16 %v218
    %v354 = vunpack.c.h.b16 %v218
    %v355 = vunpack.c.l.b16 %v219
    %v356 = vunpack.c.h.b16 %v219
    %v357 = vunpack.c.l.b16 %v220
    %v358 = vunpack.c.h.b16 %v220
    %v359 = vunpack.c.l.b16 %v221
    %v360 = vunpack.c.h.b16 %v221
    %v361 = vunpack.c.l.b16 %v222
    %v362 = vunpack.c.h.b16 %v222
    %v363 = vunpack.c.l.b16 %v223
    %v364 = vunpack.c.h.b16 %v223
    %v365 = vunpack.c.l.b16 %v224
    %v366 = vunpack.c.h.b16 %v224
    %v367 = vunpack.c.l.b16 %v225
    %v368 = vunpack.c.h.b16 %v225
    %v369 = vunpack.c.l.b16 %v226
    %v370 = vunpack.c.h.b16 %v226
    %v371 = vunpack.c.l.b16 %v227
    %v372 = vunpack.c.h.b16 %v227
    %v373 = vunpack.c.l.b16 %v228
    %v374 = vunpack.c.h.b16 %v228
    %v375 = vunpack.c.l.b16 %v229
    %v376 = vunpack.c.h.b16 %v229
    %v377 = vunpack.c.l.b16 %v230
    %v378 = vunpack.c.h.b16 %v230
    %v379 = vunpack.c.l.b16 %v231
    %v380 = vunpack.c.h.b16 %v231
    %v381 = vunpack.c.l.b16 %v232
    %v382 = vunpack.c.h.b16 %v232
    %v383 = vunpack.c.l.b16 %v233
    %v384 = vunpack.c.h.b16 %v233
    %v385 = vunpack.c.l.b16 %v234
    %v386 = vunpack.c.h.b16 %v234
    %v387 = vunpack.c.l.b16 %v235
    %v388 = vunpack.c.h.b16 %v235
    %v389 = vunpack.c.l.b16 %v236
    %v390 = vunpack.c.h.b16 %v236
    %v391 = vunpack.c.l.b16 %v237
    %v392 = vunpack.c.h.b16 %v237
    %v393 = vunpack.c.l.b16 %v238
    %v394 = vunpack.c.h.b16 %v238
    %v395 = vunpack.c.l.b16 %v239
    %v396 = vunpack.c.h.b16 %v239
    %v397 = vunpack.c.l.b16 %v240
    %v398 = vunpack.c.h.b16 %v240
    %v399 = vunpack.c.l.b16 %v241
    %v400 = vunpack.c.h.b16 %v241
    %v401 = vunpack.c.l.b16 %v242
    %v402 = vunpack.c.h.b16 %v242
    %v403 = vunpack.c.l.b16 %v243
    %v404 = vunpack.c.h.b16 %v243
    %v405 = vunpack.c.l.b16 %v244
    %v406 = vunpack.c.h.b16 %v244
    %v407 = vunpack.c.l.b16 %v245
    %v408 = vunpack.c.h.b16 %v245
    %v409 = vunpack.c.l.b16 %v246
    %v410 = vunpack.c.h.b16 %v246
    %v411 = vunpack.c.l.b16 %v247
    %v412 = vunpack.c.h.b16 %v247
    %v413 = vunpack.c.l.b16 %v248
    %v414 = vunpack.c.h.b16 %v248
    %v415 = vunpack.c.l.b16 %v249
    %v416 = vunpack.c.h.b16 %v249
    %v417 = vunpack.c.l.b16 %v250
    %v418 = vunpack.c.h.b16 %v250
    %v419 = vunpack.c.l.b16 %v251
    %v420 = vunpack.c.h.b16 %v251
    %v421 = vunpack.c.l.b16 %v252
    %v422 = vunpack.c.h.b16 %v252
    %v423 = vunpack.c.l.b16 %v253
    %v424 = vunpack.c.h.b16 %v253
    %v425 = vunpack.c.l.b16 %v254
    %v426 = vunpack.c.h.b16 %v254
    %v427 = vunpack.c.l.b16 %v255
    %v428 = vunpack.c.h.b16 %v255
    %v429 = vunpack.c.l.b16 %v256
    %v430 = vunpack.c.h.b16 %v256
    %v431 = vunpack.c.l.b16 %v257
    %v432 = vunpack.c.h.b16 %v257
    %v433 = vunpack.c.l.b16 %v258
    %v434 = vunpack.c.h.b16 %v258
    %v435 = vunpack.c.l.b16 %v259
    %v436 = vunpack.c.h.b16 %v259
    %v437 = vunpack.c.l.b16 %v260
    %v438 = vunpack.c.h.b16 %v260
    %v439 = vunpack.c.l.b16 %v261
    %v440 = vunpack.c.h.b16 %v261
    %v441 = vunpack.c.l.b16 %v262
    %v442 = vunpack.c.h.b16 %v262
    %v443 = vunpack.c.l.b16 %v263
    %v444 = vunpack.c.h.b16 %v263
    %v445 = vunpack.c.l.b16 %v264
    %v446 = vunpack.c.h.b16 %v264
    %v447 = vunpack.c.l.b16 %v265
    %v448 = vunpack.c.h.b16 %v265
    %v449 = vunpack.c.l.b16 %v266
    %v450 = vunpack.c.h.b16 %v266
    %v451 = vunpack.c.l.b16 %v267
    %v452 = vunpack.c.h.b16 %v267
    %v453 = vunpack.c.l.b16 %v268
    %v454 = vunpack.c.h.b16 %v268
    %v455 = vunpack.c.l.b16 %v269
    %v456 = vunpack.c.h.b16 %v269
    %v457 = vunpack.c.l.b16 %v270
    %v458 = vunpack.c.h.b16 %v270
    %v459 = vunpack.c.l.b16 %v271
    %v460 = vunpack.c.h.b16 %v271
    %v461 = vunpack.c.l.b16 %v272
    %v462 = vunpack.c.h.b16 %v272
    %v463 = vunpack.c.l.b16 %v273
    %v464 = vunpack.c.h.b16 %v273
    %v465 = vunpack.c.l.b16 %v274
    %v466 = vunpack.c.h.b16 %v274
    %v467 = vpack.c.b16 %v343, %v339
    %v468 = vpack.c.b16 %v344, %v340
    %v469 = vpack.c.b16 %v345, %v341
    %v470 = vpack.c.b16 %v346, %v342
    %v471 = vpack.c.b16 %v351, %v347
    %v472 = vpack.c.b16 %v352, %v348
    %v473 = vpack.c.b16 %v353, %v349
    %v474 = vpack.c.b16 %v354, %v350
    %v475 = vpack.c.b16 %v359, %v355
    %v476 = vpack.c.b16 %v360, %v356
    %v477 = vpack.c.b16 %v361, %v357
    %v478 = vpack.c.b16 %v362, %v358
    %v479 = vpack.c.b16 %v367, %v363
    %v480 = vpack.c.b16 %v368, %v364
    %v481 = vpack.c.b16 %v369, %v365
    %v482 = vpack.c.b16 %v370, %v366
    %v483 = vpack.c.b16 %v375, %v371
    %v484 = vpack.c.b16 %v376, %v372
    %v485 = vpack.c.b16 %v377, %v373
    %v486 = vpack.c.b16 %v378, %v374
    %v487 = vpack.c.b16 %v383, %v379
    %v488 = vpack.c.b16 %v384, %v380
    %v489 = vpack.c.b16 %v385, %v381
    %v490 = vpack.c.b16 %v386, %v382
    %v491 = vpack.c.b16 %v391, %v387
    %v492 = vpack.c.b16 %v392, %v388
    %v493 = vpack.c.b16 %v393, %v389
    %v494 = vpack.c.b16 %v394, %v390
    %v495 = vpack.c.b16 %v399, %v395
    %v496 = vpack.c.b16 %v400, %v396
    %v497 = vpack.c.b16 %v401, %v397
    %v498 = vpack.c.b16 %v402, %v398
    %v499 = vpack.c.b16 %v407, %v403
    %v500 = vpack.c.b16 %v408, %v404
    %v501 = vpack.c.b16 %v409, %v405
    %v502 = vpack.c.b16 %v410, %v406
    %v503 = vpack.c.b16 %v415, %v411
    %v504 = vpack.c.b16 %v416, %v412
    %v505 = vpack.c.b16 %v417, %v413
    %v506 = vpack.c.b16 %v418, %v414
    %v507 = vpack.c.b16 %v423, %v419
    %v508 = vpack.c.b16 %v424, %v420
    %v509 = vpack.c.b16 %v425, %v421
    %v510 = vpack.c.b16 %v426, %v422
    %v511 = vpack.c.b16 %v431, %v427
    %v512 = vpack.c.b16 %v432, %v428
    %v513 = vpack.c.b16 %v433, %v429
    %v514 = vpack.c.b16 %v434, %v430
    %v515 = vpack.c.b16 %v439, %v435
    %v516 = vpack.c.b16 %v440, %v436
    %v517 = vpack.c.b16 %v441, %v437
    %v518 = vpack.c.b16 %v442, %v438
    %v519 = vpack.c.b16 %v447, %v443
    %v520 = vpack.c.b16 %v448, %v444
    %v521 = vpack.c.b16 %v449, %v445
    %v522 = vpack.c.b16 %v450, %v446
    %v523 = vpack.c.b16 %v455, %v451
    %v524 = vpack.c.b16 %v456, %v452
    %v525 = vpack.c.b16 %v457, %v453
    %v526 = vpack.c.b16 %v458, %v454
    %v527 = vpack.c.b16 %v463, %v459
    %v528 = vpack.c.b16 %v464, %v460
    %v529 = vpack.c.b16 %v465, %v461
    %v530 = vpack.c.b16 %v466, %v462
    %595 = vmatprep.subr.bf16.mxu0 %v468
    %596 = vmatpush1.bf16.msra.mxu0 %v467
    %597 = vmatprep.subr.bf16.mxu0 %v472
    %598 = vmatpush1.bf16.msra.mxu0 %v471
    %599 = vmatprep.subr.bf16.mxu0 %v476
    %600 = vmatpush1.bf16.msra.mxu0 %v475
    %601 = vmatprep.subr.bf16.mxu0 %v480
    %602 = vmatpush1.bf16.msra.mxu0 %v479
    %603 = vmatprep.subr.bf16.mxu0 %v484
    %604 = vmatpush1.bf16.msra.mxu0 %v483
    %605 = vmatprep.subr.bf16.mxu0 %v488
    %606 = vmatpush1.bf16.msra.mxu0 %v487
    %607 = vmatprep.subr.bf16.mxu0 %v492
    %608 = vmatpush1.bf16.msra.mxu0 %v491
    %609 = vmatprep.subr.bf16.mxu0 %v496
    %610 = vmatpush1.bf16.msra.mxu0 %v495
    %611 = vmatprep.subr.bf16.mxu0 %v500
    %612 = vmatpush1.bf16.msra.mxu0 %v499
    %613 = vmatprep.subr.bf16.mxu0 %v504
    %614 = vmatpush1.bf16.msra.mxu0 %v503
    %615 = vmatprep.subr.bf16.mxu0 %v508
    %616 = vmatpush1.bf16.msra.mxu0 %v507
    %617 = vmatprep.subr.bf16.mxu0 %v512
    %618 = vmatpush1.bf16.msra.mxu0 %v511
    %619 = vmatprep.subr.bf16.mxu0 %v516
    %620 = vmatpush1.bf16.msra.mxu0 %v515
    %621 = vmatprep.subr.bf16.mxu0 %v520
    %622 = vmatpush1.bf16.msra.mxu0 %v519
    %623 = vmatprep.subr.bf16.mxu0 %v524
    %624 = vmatpush1.bf16.msra.mxu0 %v523
    %625 = vmatprep.subr.bf16.mxu0 %v528
    %626 = vmatpush1.bf16.msra.mxu0 %v527
    %627 = vmatprep.mubr.bf16.mxu0 %v210
    %628 = vmatmul.mubr.bf16.gmra.mrb[0].mxu0 %v209
    %v629 = vpop.f32.mrb[0].mxu0
    %v630 = vadd.f32 0.0, %v629
    %v631 = vpop.f32.mrb[0].mxu0
    %v632 = vadd.f32 0.0, %v631
    %v633 = vpop.f32.mrb[0].mxu0
    %v634 = vpop.f32.mrb[0].mxu0
    %635 = vdwg.mxu0
    %636 = vmatprep.subr.bf16.mxu0 %v470
    %637 = vmatpush1.bf16.msra.mxu0 %v469
    %638 = vmatprep.subr.bf16.mxu0 %v474
    %639 = vmatpush1.bf16.msra.mxu0 %v473
    %640 = vmatprep.subr.bf16.mxu0 %v478
    %641 = vmatpush1.bf16.msra.mxu0 %v477
    %642 = vmatprep.subr.bf16.mxu0 %v482
    %643 = vmatpush1.bf16.msra.mxu0 %v481
    %644 = vmatprep.subr.bf16.mxu0 %v486
    %645 = vmatpush1.bf16.msra.mxu0 %v485
    %646 = vmatprep.subr.bf16.mxu0 %v490
    %647 = vmatpush1.bf16.msra.mxu0 %v489
    %648 = vmatprep.subr.bf16.mxu0 %v494
    %649 = vmatpush1.bf16.msra.mxu0 %v493
    %650 = vmatprep.subr.bf16.mxu0 %v498
    %651 = vmatpush1.bf16.msra.mxu0 %v497
    %652 = vmatprep.subr.bf16.mxu0 %v502
    %653 = vmatpush1.bf16.msra.mxu0 %v501
    %654 = vmatprep.subr.bf16.mxu0 %v506
    %655 = vmatpush1.bf16.msra.mxu0 %v505
    %656 = vmatprep.subr.bf16.mxu0 %v510
    %657 = vmatpush1.bf16.msra.mxu0 %v509
    %658 = vmatprep.subr.bf16.mxu0 %v514
    %659 = vmatpush1.bf16.msra.mxu0 %v513
    %660 = vmatprep.subr.bf16.mxu0 %v518
    %661 = vmatpush1.bf16.msra.mxu0 %v517
    %662 = vmatprep.subr.bf16.mxu0 %v522
    %663 = vmatpush1.bf16.msra.mxu0 %v521
    %664 = vmatprep.subr.bf16.mxu0 %v526
    %665 = vmatpush1.bf16.msra.mxu0 %v525
    %666 = vmatprep.subr.bf16.mxu0 %v530
    %667 = vmatpush1.bf16.msra.mxu0 %v529
    %668 = vmatprep.mubr.bf16.mxu0 %v210
    %669 = vmatmul.mubr.bf16.gmra.mrb[0].mxu0 %v209
    %v670 = vpop.f32.mrb[0].mxu0
    %v671 = vadd.f32 0.0, %v670
    %v672 = vpop.f32.mrb[0].mxu0
    %v673 = vadd.f32 0.0, %v672
    %v674 = vpop.f32.mrb[0].mxu0
    %v675 = vpop.f32.mrb[0].mxu0
    %676 = vdwg.mxu0
    %v677 = vpack.c.bf16 %v630, %v630
    %v678 = vpack.c.bf16 %v632, %v632
    %v679 = vpack.c.bf16 %v671, %v671
    %v680 = vpack.c.bf16 %v673, %v673
    %v681 = vld [vmem:[%s4] sm:$0xf]
    %v683 = vlaneseq
    %v684 = vshrl.u32 %v683, 7
    %v685 = vsub.s32 0, %v684
    %v686 = vrot.slane %v681, %v685
    %v687 = vlaneseq
    %v688 = vshrl.u32 %v687, 7
    %v689 = vsub.s32 1, %v688
    %v690 = vrot.slane %v681, %v689
    %v691 = vlaneseq
    %v692 = vshrl.u32 %v691, 7
    %v693 = vsub.s32 2, %v692
    %v694 = vrot.slane %v681, %v693
    %v695 = vlaneseq
    %v696 = vshrl.u32 %v695, 7
    %v697 = vsub.s32 3, %v696
    %v698 = vrot.slane %v681, %v697
    %v703 = vpack.c.bf16 %v686, %v686
    %v704 = vpack.c.bf16 %v690, %v690
    %v705 = vpack.c.bf16 %v694, %v694
    %v706 = vpack.c.bf16 %v698, %v698
    %v708 = vpack.i.b16 %v703, %v703
    %v710 = vlaneseq
    %v711 = vshrl.u32 %v710, 7
    %v712 = vsub.s32 0, %v711
    %v713 = vrot.slane %v708, %v712
    %v715 = vpack.i.b16 %v704, %v704
    %v717 = vlaneseq
    %v718 = vshrl.u32 %v717, 7
    %v719 = vsub.s32 0, %v718
    %v720 = vrot.slane %v715, %v719
    %v722 = vpack.i.b16 %v705, %v705
    %v724 = vlaneseq
    %v725 = vshrl.u32 %v724, 7
    %v726 = vsub.s32 0, %v725
    %v727 = vrot.slane %v722, %v726
    %v729 = vpack.i.b16 %v706, %v706
    %v731 = vlaneseq
    %v732 = vshrl.u32 %v731, 7
    %v733 = vsub.s32 0, %v732
    %v734 = vrot.slane %v729, %v733
    %v735 = vadd.bf16 %v677, %v713
    %v736 = vadd.bf16 %v678, %v720
    %v737 = vadd.bf16 %v679, %v727
    %v738 = vadd.bf16 %v680, %v734
    %vm739 = vcmp.gt.bf16.partialorder %v735, 0
    %vm740 = vcmp.gt.bf16.partialorder %v736, 0
    %vm741 = vcmp.gt.bf16.partialorder %v737, 0
    %vm742 = vcmp.gt.bf16.partialorder %v738, 0
    %v743 = vmul.bf16 %v735, 1045249613
    %v744 = vmul.bf16 %v736, 1045249613
    %v745 = vmul.bf16 %v737, 1045249613
    %v746 = vmul.bf16 %v738, 1045249613
    %v747 = vsel %vm739, %v735, %v743
    %v748 = vsel %vm740, %v736, %v744
    %v749 = vsel %vm741, %v737, %v745
    %v750 = vsel %vm742, %v738, %v746
    %v751 = vld [vmem:[%s5] sm:$0xff]
    %v752 = vld [vmem:[%s5 + $0x8] sm:$0xff]
    %v753 = vld [vmem:[%s5 + $0x10] sm:$0xff]
    %v754 = vld [vmem:[%s5 + $0x18] sm:$0xff]
    %v755 = vld [vmem:[%s5 + $0x20] sm:$0xff]
    %v756 = vld [vmem:[%s5 + $0x28] sm:$0xff]
    %v757 = vld [vmem:[%s5 + $0x30] sm:$0xff]
    %v758 = vld [vmem:[%s5 + $0x38] sm:$0xff]
    %v759 = vld [vmem:[%s5 + $0x40] sm:$0xff]
    %v760 = vld [vmem:[%s5 + $0x48] sm:$0xff]
    %v761 = vld [vmem:[%s5 + $0x50] sm:$0xff]
    %v762 = vld [vmem:[%s5 + $0x58] sm:$0xff]
    %v763 = vld [vmem:[%s5 + $0x60] sm:$0xff]
    %v764 = vld [vmem:[%s5 + $0x68] sm:$0xff]
    %v765 = vld [vmem:[%s5 + $0x70] sm:$0xff]
    %v766 = vld [vmem:[%s5 + $0x78] sm:$0xff]
    %v767 = vld [vmem:[%s5 + $0x80] sm:$0xff]
    %v768 = vld [vmem:[%s5 + $0x88] sm:$0xff]
    %v769 = vld [vmem:[%s5 + $0x90] sm:$0xff]
    %v770 = vld [vmem:[%s5 + $0x98] sm:$0xff]
    %v771 = vld [vmem:[%s5 + $0xa0] sm:$0xff]
    %v772 = vld [vmem:[%s5 + $0xa8] sm:$0xff]
    %v773 = vld [vmem:[%s5 + $0xb0] sm:$0xff]
    %v774 = vld [vmem:[%s5 + $0xb8] sm:$0xff]
    %v775 = vld [vmem:[%s5 + $0xc0] sm:$0xff]
    %v776 = vld [vmem:[%s5 + $0xc8] sm:$0xff]
    %v777 = vld [vmem:[%s5 + $0xd0] sm:$0xff]
    %v778 = vld [vmem:[%s5 + $0xd8] sm:$0xff]
    %v779 = vld [vmem:[%s5 + $0xe0] sm:$0xff]
    %v780 = vld [vmem:[%s5 + $0xe8] sm:$0xff]
    %v781 = vld [vmem:[%s5 + $0xf0] sm:$0xff]
    %v782 = vld [vmem:[%s5 + $0xf8] sm:$0xff]
    %v783 = vld [vmem:[%s5 + $0x100] sm:$0xff]
    %v784 = vld [vmem:[%s5 + $0x108] sm:$0xff]
    %v785 = vld [vmem:[%s5 + $0x110] sm:$0xff]
    %v786 = vld [vmem:[%s5 + $0x118] sm:$0xff]
    %v787 = vld [vmem:[%s5 + $0x120] sm:$0xff]
    %v788 = vld [vmem:[%s5 + $0x128] sm:$0xff]
    %v789 = vld [vmem:[%s5 + $0x130] sm:$0xff]
    %v790 = vld [vmem:[%s5 + $0x138] sm:$0xff]
    %v791 = vld [vmem:[%s5 + $0x140] sm:$0xff]
    %v792 = vld [vmem:[%s5 + $0x148] sm:$0xff]
    %v793 = vld [vmem:[%s5 + $0x150] sm:$0xff]
    %v794 = vld [vmem:[%s5 + $0x158] sm:$0xff]
    %v795 = vld [vmem:[%s5 + $0x160] sm:$0xff]
    %v796 = vld [vmem:[%s5 + $0x168] sm:$0xff]
    %v797 = vld [vmem:[%s5 + $0x170] sm:$0xff]
    %v798 = vld [vmem:[%s5 + $0x178] sm:$0xff]
    %v799 = vld [vmem:[%s5 + $0x180] sm:$0xff]
    %v800 = vld [vmem:[%s5 + $0x188] sm:$0xff]
    %v801 = vld [vmem:[%s5 + $0x190] sm:$0xff]
    %v802 = vld [vmem:[%s5 + $0x198] sm:$0xff]
    %v803 = vld [vmem:[%s5 + $0x1a0] sm:$0xff]
    %v804 = vld [vmem:[%s5 + $0x1a8] sm:$0xff]
    %v805 = vld [vmem:[%s5 + $0x1b0] sm:$0xff]
    %v806 = vld [vmem:[%s5 + $0x1b8] sm:$0xff]
    %v807 = vld [vmem:[%s5 + $0x1c0] sm:$0xff]
    %v808 = vld [vmem:[%s5 + $0x1c8] sm:$0xff]
    %v809 = vld [vmem:[%s5 + $0x1d0] sm:$0xff]
    %v810 = vld [vmem:[%s5 + $0x1d8] sm:$0xff]
    %v811 = vld [vmem:[%s5 + $0x1e0] sm:$0xff]
    %v812 = vld [vmem:[%s5 + $0x1e8] sm:$0xff]
    %v813 = vld [vmem:[%s5 + $0x1f0] sm:$0xff]
    %v814 = vld [vmem:[%s5 + $0x1f8] sm:$0xff]
    %v815 = vld [vmem:[%s5 + $0x200] sm:$0xff]
    %v816 = vld [vmem:[%s5 + $0x208] sm:$0xff]
    %v817 = vld [vmem:[%s5 + $0x210] sm:$0xff]
    %v818 = vld [vmem:[%s5 + $0x218] sm:$0xff]
    %v819 = vld [vmem:[%s5 + $0x220] sm:$0xff]
    %v820 = vld [vmem:[%s5 + $0x228] sm:$0xff]
    %v821 = vld [vmem:[%s5 + $0x230] sm:$0xff]
    %v822 = vld [vmem:[%s5 + $0x238] sm:$0xff]
    %v823 = vld [vmem:[%s5 + $0x240] sm:$0xff]
    %v824 = vld [vmem:[%s5 + $0x248] sm:$0xff]
    %v825 = vld [vmem:[%s5 + $0x250] sm:$0xff]
    %v826 = vld [vmem:[%s5 + $0x258] sm:$0xff]
    %v827 = vld [vmem:[%s5 + $0x260] sm:$0xff]
    %v828 = vld [vmem:[%s5 + $0x268] sm:$0xff]
    %v829 = vld [vmem:[%s5 + $0x270] sm:$0xff]
    %v830 = vld [vmem:[%s5 + $0x278] sm:$0xff]
    %v831 = vld [vmem:[%s5 + $0x280] sm:$0xff]
    %v832 = vld [vmem:[%s5 + $0x288] sm:$0xff]
    %v833 = vld [vmem:[%s5 + $0x290] sm:$0xff]
    %v834 = vld [vmem:[%s5 + $0x298] sm:$0xff]
    %v835 = vld [vmem:[%s5 + $0x2a0] sm:$0xff]
    %v836 = vld [vmem:[%s5 + $0x2a8] sm:$0xff]
    %v837 = vld [vmem:[%s5 + $0x2b0] sm:$0xff]
    %v838 = vld [vmem:[%s5 + $0x2b8] sm:$0xff]
    %v839 = vld [vmem:[%s5 + $0x2c0] sm:$0xff]
    %v840 = vld [vmem:[%s5 + $0x2c8] sm:$0xff]
    %v841 = vld [vmem:[%s5 + $0x2d0] sm:$0xff]
    %v842 = vld [vmem:[%s5 + $0x2d8] sm:$0xff]
    %v843 = vld [vmem:[%s5 + $0x2e0] sm:$0xff]
    %v844 = vld [vmem:[%s5 + $0x2e8] sm:$0xff]
    %v845 = vld [vmem:[%s5 + $0x2f0] sm:$0xff]
    %v846 = vld [vmem:[%s5 + $0x2f8] sm:$0xff]
    %v847 = vld [vmem:[%s5 + $0x300] sm:$0xff]
    %v848 = vld [vmem:[%s5 + $0x308] sm:$0xff]
    %v849 = vld [vmem:[%s5 + $0x310] sm:$0xff]
    %v850 = vld [vmem:[%s5 + $0x318] sm:$0xff]
    %v851 = vld [vmem:[%s5 + $0x320] sm:$0xff]
    %v852 = vld [vmem:[%s5 + $0x328] sm:$0xff]
    %v853 = vld [vmem:[%s5 + $0x330] sm:$0xff]
    %v854 = vld [vmem:[%s5 + $0x338] sm:$0xff]
    %v855 = vld [vmem:[%s5 + $0x340] sm:$0xff]
    %v856 = vld [vmem:[%s5 + $0x348] sm:$0xff]
    %v857 = vld [vmem:[%s5 + $0x350] sm:$0xff]
    %v858 = vld [vmem:[%s5 + $0x358] sm:$0xff]
    %v859 = vld [vmem:[%s5 + $0x360] sm:$0xff]
    %v860 = vld [vmem:[%s5 + $0x368] sm:$0xff]
    %v861 = vld [vmem:[%s5 + $0x370] sm:$0xff]
    %v862 = vld [vmem:[%s5 + $0x378] sm:$0xff]
    %v863 = vld [vmem:[%s5 + $0x380] sm:$0xff]
    %v864 = vld [vmem:[%s5 + $0x388] sm:$0xff]
    %v865 = vld [vmem:[%s5 + $0x390] sm:$0xff]
    %v866 = vld [vmem:[%s5 + $0x398] sm:$0xff]
    %v867 = vld [vmem:[%s5 + $0x3a0] sm:$0xff]
    %v868 = vld [vmem:[%s5 + $0x3a8] sm:$0xff]
    %v869 = vld [vmem:[%s5 + $0x3b0] sm:$0xff]
    %v870 = vld [vmem:[%s5 + $0x3b8] sm:$0xff]
    %v871 = vld [vmem:[%s5 + $0x3c0] sm:$0xff]
    %v872 = vld [vmem:[%s5 + $0x3c8] sm:$0xff]
    %v873 = vld [vmem:[%s5 + $0x3d0] sm:$0xff]
    %v874 = vld [vmem:[%s5 + $0x3d8] sm:$0xff]
    %v875 = vld [vmem:[%s5 + $0x3e0] sm:$0xff]
    %v876 = vld [vmem:[%s5 + $0x3e8] sm:$0xff]
    %v877 = vld [vmem:[%s5 + $0x3f0] sm:$0xff]
    %v878 = vld [vmem:[%s5 + $0x3f8] sm:$0xff]
    %v879 = vld [vmem:[%s5 + $0x400] sm:$0xff]
    %v880 = vld [vmem:[%s5 + $0x408] sm:$0xff]
    %v881 = vld [vmem:[%s5 + $0x410] sm:$0xff]
    %v882 = vld [vmem:[%s5 + $0x418] sm:$0xff]
    %v883 = vld [vmem:[%s5 + $0x420] sm:$0xff]
    %v884 = vld [vmem:[%s5 + $0x428] sm:$0xff]
    %v885 = vld [vmem:[%s5 + $0x430] sm:$0xff]
    %v886 = vld [vmem:[%s5 + $0x438] sm:$0xff]
    %v887 = vld [vmem:[%s5 + $0x440] sm:$0xff]
    %v888 = vld [vmem:[%s5 + $0x448] sm:$0xff]
    %v889 = vld [vmem:[%s5 + $0x450] sm:$0xff]
    %v890 = vld [vmem:[%s5 + $0x458] sm:$0xff]
    %v891 = vld [vmem:[%s5 + $0x460] sm:$0xff]
    %v892 = vld [vmem:[%s5 + $0x468] sm:$0xff]
    %v893 = vld [vmem:[%s5 + $0x470] sm:$0xff]
    %v894 = vld [vmem:[%s5 + $0x478] sm:$0xff]
    %v895 = vld [vmem:[%s5 + $0x480] sm:$0xff]
    %v896 = vld [vmem:[%s5 + $0x488] sm:$0xff]
    %v897 = vld [vmem:[%s5 + $0x490] sm:$0xff]
    %v898 = vld [vmem:[%s5 + $0x498] sm:$0xff]
    %v899 = vld [vmem:[%s5 + $0x4a0] sm:$0xff]
    %v900 = vld [vmem:[%s5 + $0x4a8] sm:$0xff]
    %v901 = vld [vmem:[%s5 + $0x4b0] sm:$0xff]
    %v902 = vld [vmem:[%s5 + $0x4b8] sm:$0xff]
    %v903 = vld [vmem:[%s5 + $0x4c0] sm:$0xff]
    %v904 = vld [vmem:[%s5 + $0x4c8] sm:$0xff]
    %v905 = vld [vmem:[%s5 + $0x4d0] sm:$0xff]
    %v906 = vld [vmem:[%s5 + $0x4d8] sm:$0xff]
    %v907 = vld [vmem:[%s5 + $0x4e0] sm:$0xff]
    %v908 = vld [vmem:[%s5 + $0x4e8] sm:$0xff]
    %v909 = vld [vmem:[%s5 + $0x4f0] sm:$0xff]
    %v910 = vld [vmem:[%s5 + $0x4f8] sm:$0xff]
    %v911 = vld [vmem:[%s5 + $0x500] sm:$0xff]
    %v912 = vld [vmem:[%s5 + $0x508] sm:$0xff]
    %v913 = vld [vmem:[%s5 + $0x510] sm:$0xff]
    %v914 = vld [vmem:[%s5 + $0x518] sm:$0xff]
    %v915 = vld [vmem:[%s5 + $0x520] sm:$0xff]
    %v916 = vld [vmem:[%s5 + $0x528] sm:$0xff]
    %v917 = vld [vmem:[%s5 + $0x530] sm:$0xff]
    %v918 = vld [vmem:[%s5 + $0x538] sm:$0xff]
    %v919 = vld [vmem:[%s5 + $0x540] sm:$0xff]
    %v920 = vld [vmem:[%s5 + $0x548] sm:$0xff]
    %v921 = vld [vmem:[%s5 + $0x550] sm:$0xff]
    %v922 = vld [vmem:[%s5 + $0x558] sm:$0xff]
    %v923 = vld [vmem:[%s5 + $0x560] sm:$0xff]
    %v924 = vld [vmem:[%s5 + $0x568] sm:$0xff]
    %v925 = vld [vmem:[%s5 + $0x570] sm:$0xff]
    %v926 = vld [vmem:[%s5 + $0x578] sm:$0xff]
    %v927 = vld [vmem:[%s5 + $0x580] sm:$0xff]
    %v928 = vld [vmem:[%s5 + $0x588] sm:$0xff]
    %v929 = vld [vmem:[%s5 + $0x590] sm:$0xff]
    %v930 = vld [vmem:[%s5 + $0x598] sm:$0xff]
    %v931 = vld [vmem:[%s5 + $0x5a0] sm:$0xff]
    %v932 = vld [vmem:[%s5 + $0x5a8] sm:$0xff]
    %v933 = vld [vmem:[%s5 + $0x5b0] sm:$0xff]
    %v934 = vld [vmem:[%s5 + $0x5b8] sm:$0xff]
    %v935 = vld [vmem:[%s5 + $0x5c0] sm:$0xff]
    %v936 = vld [vmem:[%s5 + $0x5c8] sm:$0xff]
    %v937 = vld [vmem:[%s5 + $0x5d0] sm:$0xff]
    %v938 = vld [vmem:[%s5 + $0x5d8] sm:$0xff]
    %v939 = vld [vmem:[%s5 + $0x5e0] sm:$0xff]
    %v940 = vld [vmem:[%s5 + $0x5e8] sm:$0xff]
    %v941 = vld [vmem:[%s5 + $0x5f0] sm:$0xff]
    %v942 = vld [vmem:[%s5 + $0x5f8] sm:$0xff]
    %v943 = vld [vmem:[%s5 + $0x600] sm:$0xff]
    %v944 = vld [vmem:[%s5 + $0x608] sm:$0xff]
    %v945 = vld [vmem:[%s5 + $0x610] sm:$0xff]
    %v946 = vld [vmem:[%s5 + $0x618] sm:$0xff]
    %v947 = vld [vmem:[%s5 + $0x620] sm:$0xff]
    %v948 = vld [vmem:[%s5 + $0x628] sm:$0xff]
    %v949 = vld [vmem:[%s5 + $0x630] sm:$0xff]
    %v950 = vld [vmem:[%s5 + $0x638] sm:$0xff]
    %v951 = vld [vmem:[%s5 + $0x640] sm:$0xff]
    %v952 = vld [vmem:[%s5 + $0x648] sm:$0xff]
    %v953 = vld [vmem:[%s5 + $0x650] sm:$0xff]
    %v954 = vld [vmem:[%s5 + $0x658] sm:$0xff]
    %v955 = vld [vmem:[%s5 + $0x660] sm:$0xff]
    %v956 = vld [vmem:[%s5 + $0x668] sm:$0xff]
    %v957 = vld [vmem:[%s5 + $0x670] sm:$0xff]
    %v958 = vld [vmem:[%s5 + $0x678] sm:$0xff]
    %v959 = vld [vmem:[%s5 + $0x680] sm:$0xff]
    %v960 = vld [vmem:[%s5 + $0x688] sm:$0xff]
    %v961 = vld [vmem:[%s5 + $0x690] sm:$0xff]
    %v962 = vld [vmem:[%s5 + $0x698] sm:$0xff]
    %v963 = vld [vmem:[%s5 + $0x6a0] sm:$0xff]
    %v964 = vld [vmem:[%s5 + $0x6a8] sm:$0xff]
    %v965 = vld [vmem:[%s5 + $0x6b0] sm:$0xff]
    %v966 = vld [vmem:[%s5 + $0x6b8] sm:$0xff]
    %v967 = vld [vmem:[%s5 + $0x6c0] sm:$0xff]
    %v968 = vld [vmem:[%s5 + $0x6c8] sm:$0xff]
    %v969 = vld [vmem:[%s5 + $0x6d0] sm:$0xff]
    %v970 = vld [vmem:[%s5 + $0x6d8] sm:$0xff]
    %v971 = vld [vmem:[%s5 + $0x6e0] sm:$0xff]
    %v972 = vld [vmem:[%s5 + $0x6e8] sm:$0xff]
    %v973 = vld [vmem:[%s5 + $0x6f0] sm:$0xff]
    %v974 = vld [vmem:[%s5 + $0x6f8] sm:$0xff]
    %v975 = vld [vmem:[%s5 + $0x700] sm:$0xff]
    %v976 = vld [vmem:[%s5 + $0x708] sm:$0xff]
    %v977 = vld [vmem:[%s5 + $0x710] sm:$0xff]
    %v978 = vld [vmem:[%s5 + $0x718] sm:$0xff]
    %v979 = vld [vmem:[%s5 + $0x720] sm:$0xff]
    %v980 = vld [vmem:[%s5 + $0x728] sm:$0xff]
    %v981 = vld [vmem:[%s5 + $0x730] sm:$0xff]
    %v982 = vld [vmem:[%s5 + $0x738] sm:$0xff]
    %v983 = vld [vmem:[%s5 + $0x740] sm:$0xff]
    %v984 = vld [vmem:[%s5 + $0x748] sm:$0xff]
    %v985 = vld [vmem:[%s5 + $0x750] sm:$0xff]
    %v986 = vld [vmem:[%s5 + $0x758] sm:$0xff]
    %v987 = vld [vmem:[%s5 + $0x760] sm:$0xff]
    %v988 = vld [vmem:[%s5 + $0x768] sm:$0xff]
    %v989 = vld [vmem:[%s5 + $0x770] sm:$0xff]
    %v990 = vld [vmem:[%s5 + $0x778] sm:$0xff]
    %v991 = vld [vmem:[%s5 + $0x780] sm:$0xff]
    %v992 = vld [vmem:[%s5 + $0x788] sm:$0xff]
    %v993 = vld [vmem:[%s5 + $0x790] sm:$0xff]
    %v994 = vld [vmem:[%s5 + $0x798] sm:$0xff]
    %v995 = vld [vmem:[%s5 + $0x7a0] sm:$0xff]
    %v996 = vld [vmem:[%s5 + $0x7a8] sm:$0xff]
    %v997 = vld [vmem:[%s5 + $0x7b0] sm:$0xff]
    %v998 = vld [vmem:[%s5 + $0x7b8] sm:$0xff]
    %v999 = vld [vmem:[%s5 + $0x7c0] sm:$0xff]
    %v1000 = vld [vmem:[%s5 + $0x7c8] sm:$0xff]
    %v1001 = vld [vmem:[%s5 + $0x7d0] sm:$0xff]
    %v1002 = vld [vmem:[%s5 + $0x7d8] sm:$0xff]
    %v1003 = vld [vmem:[%s5 + $0x7e0] sm:$0xff]
    %v1004 = vld [vmem:[%s5 + $0x7e8] sm:$0xff]
    %v1005 = vld [vmem:[%s5 + $0x7f0] sm:$0xff]
    %v1006 = vld [vmem:[%s5 + $0x7f8] sm:$0xff]
    %v1263 = vunpack.c.l.b16 %v751
    %v1264 = vunpack.c.h.b16 %v751
    %v1265 = vunpack.c.l.b16 %v752
    %v1266 = vunpack.c.h.b16 %v752
    %v1267 = vunpack.c.l.b16 %v753
    %v1268 = vunpack.c.h.b16 %v753
    %v1269 = vunpack.c.l.b16 %v754
    %v1270 = vunpack.c.h.b16 %v754
    %v1271 = vunpack.c.l.b16 %v755
    %v1272 = vunpack.c.h.b16 %v755
    %v1273 = vunpack.c.l.b16 %v756
    %v1274 = vunpack.c.h.b16 %v756
    %v1275 = vunpack.c.l.b16 %v757
    %v1276 = vunpack.c.h.b16 %v757
    %v1277 = vunpack.c.l.b16 %v758
    %v1278 = vunpack.c.h.b16 %v758
    %v1279 = vunpack.c.l.b16 %v759
    %v1280 = vunpack.c.h.b16 %v759
    %v1281 = vunpack.c.l.b16 %v760
    %v1282 = vunpack.c.h.b16 %v760
    %v1283 = vunpack.c.l.b16 %v761
    %v1284 = vunpack.c.h.b16 %v761
    %v1285 = vunpack.c.l.b16 %v762
    %v1286 = vunpack.c.h.b16 %v762
    %v1287 = vunpack.c.l.b16 %v763
    %v1288 = vunpack.c.h.b16 %v763
    %v1289 = vunpack.c.l.b16 %v764
    %v1290 = vunpack.c.h.b16 %v764
    %v1291 = vunpack.c.l.b16 %v765
    %v1292 = vunpack.c.h.b16 %v765
    %v1293 = vunpack.c.l.b16 %v766
    %v1294 = vunpack.c.h.b16 %v766
    %v1295 = vunpack.c.l.b16 %v767
    %v1296 = vunpack.c.h.b16 %v767
    %v1297 = vunpack.c.l.b16 %v768
    %v1298 = vunpack.c.h.b16 %v768
    %v1299 = vunpack.c.l.b16 %v769
    %v1300 = vunpack.c.h.b16 %v769
    %v1301 = vunpack.c.l.b16 %v770
    %v1302 = vunpack.c.h.b16 %v770
    %v1303 = vunpack.c.l.b16 %v771
    %v1304 = vunpack.c.h.b16 %v771
    %v1305 = vunpack.c.l.b16 %v772
    %v1306 = vunpack.c.h.b16 %v772
    %v1307 = vunpack.c.l.b16 %v773
    %v1308 = vunpack.c.h.b16 %v773
    %v1309 = vunpack.c.l.b16 %v774
    %v1310 = vunpack.c.h.b16 %v774
    %v1311 = vunpack.c.l.b16 %v775
    %v1312 = vunpack.c.h.b16 %v775
    %v1313 = vunpack.c.l.b16 %v776
    %v1314 = vunpack.c.h.b16 %v776
    %v1315 = vunpack.c.l.b16 %v777
    %v1316 = vunpack.c.h.b16 %v777
    %v1317 = vunpack.c.l.b16 %v778
    %v1318 = vunpack.c.h.b16 %v778
    %v1319 = vunpack.c.l.b16 %v779
    %v1320 = vunpack.c.h.b16 %v779
    %v1321 = vunpack.c.l.b16 %v780
    %v1322 = vunpack.c.h.b16 %v780
    %v1323 = vunpack.c.l.b16 %v781
    %v1324 = vunpack.c.h.b16 %v781
    %v1325 = vunpack.c.l.b16 %v782
    %v1326 = vunpack.c.h.b16 %v782
    %v1327 = vunpack.c.l.b16 %v783
    %v1328 = vunpack.c.h.b16 %v783
    %v1329 = vunpack.c.l.b16 %v784
    %v1330 = vunpack.c.h.b16 %v784
    %v1331 = vunpack.c.l.b16 %v785
    %v1332 = vunpack.c.h.b16 %v785
    %v1333 = vunpack.c.l.b16 %v786
    %v1334 = vunpack.c.h.b16 %v786
    %v1335 = vunpack.c.l.b16 %v787
    %v1336 = vunpack.c.h.b16 %v787
    %v1337 = vunpack.c.l.b16 %v788
    %v1338 = vunpack.c.h.b16 %v788
    %v1339 = vunpack.c.l.b16 %v789
    %v1340 = vunpack.c.h.b16 %v789
    %v1341 = vunpack.c.l.b16 %v790
    %v1342 = vunpack.c.h.b16 %v790
    %v1343 = vunpack.c.l.b16 %v791
    %v1344 = vunpack.c.h.b16 %v791
    %v1345 = vunpack.c.l.b16 %v792
    %v1346 = vunpack.c.h.b16 %v792
    %v1347 = vunpack.c.l.b16 %v793
    %v1348 = vunpack.c.h.b16 %v793
    %v1349 = vunpack.c.l.b16 %v794
    %v1350 = vunpack.c.h.b16 %v794
    %v1351 = vunpack.c.l.b16 %v795
    %v1352 = vunpack.c.h.b16 %v795
    %v1353 = vunpack.c.l.b16 %v796
    %v1354 = vunpack.c.h.b16 %v796
    %v1355 = vunpack.c.l.b16 %v797
    %v1356 = vunpack.c.h.b16 %v797
    %v1357 = vunpack.c.l.b16 %v798
    %v1358 = vunpack.c.h.b16 %v798
    %v1359 = vunpack.c.l.b16 %v799
    %v1360 = vunpack.c.h.b16 %v799
    %v1361 = vunpack.c.l.b16 %v800
    %v1362 = vunpack.c.h.b16 %v800
    %v1363 = vunpack.c.l.b16 %v801
    %v1364 = vunpack.c.h.b16 %v801
    %v1365 = vunpack.c.l.b16 %v802
    %v1366 = vunpack.c.h.b16 %v802
    %v1367 = vunpack.c.l.b16 %v803
    %v1368 = vunpack.c.h.b16 %v803
    %v1369 = vunpack.c.l.b16 %v804
    %v1370 = vunpack.c.h.b16 %v804
    %v1371 = vunpack.c.l.b16 %v805
    %v1372 = vunpack.c.h.b16 %v805
    %v1373 = vunpack.c.l.b16 %v806
    %v1374 = vunpack.c.h.b16 %v806
    %v1375 = vunpack.c.l.b16 %v807
    %v1376 = vunpack.c.h.b16 %v807
    %v1377 = vunpack.c.l.b16 %v808
    %v1378 = vunpack.c.h.b16 %v808
    %v1379 = vunpack.c.l.b16 %v809
    %v1380 = vunpack.c.h.b16 %v809
    %v1381 = vunpack.c.l.b16 %v810
    %v1382 = vunpack.c.h.b16 %v810
    %v1383 = vunpack.c.l.b16 %v811
    %v1384 = vunpack.c.h.b16 %v811
    %v1385 = vunpack.c.l.b16 %v812
    %v1386 = vunpack.c.h.b16 %v812
    %v1387 = vunpack.c.l.b16 %v813
    %v1388 = vunpack.c.h.b16 %v813
    %v1389 = vunpack.c.l.b16 %v814
    %v1390 = vunpack.c.h.b16 %v814
    %v1391 = vunpack.c.l.b16 %v815
    %v1392 = vunpack.c.h.b16 %v815
    %v1393 = vunpack.c.l.b16 %v816
    %v1394 = vunpack.c.h.b16 %v816
    %v1395 = vunpack.c.l.b16 %v817
    %v1396 = vunpack.c.h.b16 %v817
    %v1397 = vunpack.c.l.b16 %v818
    %v1398 = vunpack.c.h.b16 %v818
    %v1399 = vunpack.c.l.b16 %v819
    %v1400 = vunpack.c.h.b16 %v819
    %v1401 = vunpack.c.l.b16 %v820
    %v1402 = vunpack.c.h.b16 %v820
    %v1403 = vunpack.c.l.b16 %v821
    %v1404 = vunpack.c.h.b16 %v821
    %v1405 = vunpack.c.l.b16 %v822
    %v1406 = vunpack.c.h.b16 %v822
    %v1407 = vunpack.c.l.b16 %v823
    %v1408 = vunpack.c.h.b16 %v823
    %v1409 = vunpack.c.l.b16 %v824
    %v1410 = vunpack.c.h.b16 %v824
    %v1411 = vunpack.c.l.b16 %v825
    %v1412 = vunpack.c.h.b16 %v825
    %v1413 = vunpack.c.l.b16 %v826
    %v1414 = vunpack.c.h.b16 %v826
    %v1415 = vunpack.c.l.b16 %v827
    %v1416 = vunpack.c.h.b16 %v827
    %v1417 = vunpack.c.l.b16 %v828
    %v1418 = vunpack.c.h.b16 %v828
    %v1419 = vunpack.c.l.b16 %v829
    %v1420 = vunpack.c.h.b16 %v829
    %v1421 = vunpack.c.l.b16 %v830
    %v1422 = vunpack.c.h.b16 %v830
    %v1423 = vunpack.c.l.b16 %v831
    %v1424 = vunpack.c.h.b16 %v831
    %v1425 = vunpack.c.l.b16 %v832
    %v1426 = vunpack.c.h.b16 %v832
    %v1427 = vunpack.c.l.b16 %v833
    %v1428 = vunpack.c.h.b16 %v833
    %v1429 = vunpack.c.l.b16 %v834
    %v1430 = vunpack.c.h.b16 %v834
    %v1431 = vunpack.c.l.b16 %v835
    %v1432 = vunpack.c.h.b16 %v835
    %v1433 = vunpack.c.l.b16 %v836
    %v1434 = vunpack.c.h.b16 %v836
    %v1435 = vunpack.c.l.b16 %v837
    %v1436 = vunpack.c.h.b16 %v837
    %v1437 = vunpack.c.l.b16 %v838
    %v1438 = vunpack.c.h.b16 %v838
    %v1439 = vunpack.c.l.b16 %v839
    %v1440 = vunpack.c.h.b16 %v839
    %v1441 = vunpack.c.l.b16 %v840
    %v1442 = vunpack.c.h.b16 %v840
    %v1443 = vunpack.c.l.b16 %v841
    %v1444 = vunpack.c.h.b16 %v841
    %v1445 = vunpack.c.l.b16 %v842
    %v1446 = vunpack.c.h.b16 %v842
    %v1447 = vunpack.c.l.b16 %v843
    %v1448 = vunpack.c.h.b16 %v843
    %v1449 = vunpack.c.l.b16 %v844
    %v1450 = vunpack.c.h.b16 %v844
    %v1451 = vunpack.c.l.b16 %v845
    %v1452 = vunpack.c.h.b16 %v845
    %v1453 = vunpack.c.l.b16 %v846
    %v1454 = vunpack.c.h.b16 %v846
    %v1455 = vunpack.c.l.b16 %v847
    %v1456 = vunpack.c.h.b16 %v847
    %v1457 = vunpack.c.l.b16 %v848
    %v1458 = vunpack.c.h.b16 %v848
    %v1459 = vunpack.c.l.b16 %v849
    %v1460 = vunpack.c.h.b16 %v849
    %v1461 = vunpack.c.l.b16 %v850
    %v1462 = vunpack.c.h.b16 %v850
    %v1463 = vunpack.c.l.b16 %v851
    %v1464 = vunpack.c.h.b16 %v851
    %v1465 = vunpack.c.l.b16 %v852
    %v1466 = vunpack.c.h.b16 %v852
    %v1467 = vunpack.c.l.b16 %v853
    %v1468 = vunpack.c.h.b16 %v853
    %v1469 = vunpack.c.l.b16 %v854
    %v1470 = vunpack.c.h.b16 %v854
    %v1471 = vunpack.c.l.b16 %v855
    %v1472 = vunpack.c.h.b16 %v855
    %v1473 = vunpack.c.l.b16 %v856
    %v1474 = vunpack.c.h.b16 %v856
    %v1475 = vunpack.c.l.b16 %v857
    %v1476 = vunpack.c.h.b16 %v857
    %v1477 = vunpack.c.l.b16 %v858
    %v1478 = vunpack.c.h.b16 %v858
    %v1479 = vunpack.c.l.b16 %v859
    %v1480 = vunpack.c.h.b16 %v859
    %v1481 = vunpack.c.l.b16 %v860
    %v1482 = vunpack.c.h.b16 %v860
    %v1483 = vunpack.c.l.b16 %v861
    %v1484 = vunpack.c.h.b16 %v861
    %v1485 = vunpack.c.l.b16 %v862
    %v1486 = vunpack.c.h.b16 %v862
    %v1487 = vunpack.c.l.b16 %v863
    %v1488 = vunpack.c.h.b16 %v863
    %v1489 = vunpack.c.l.b16 %v864
    %v1490 = vunpack.c.h.b16 %v864
    %v1491 = vunpack.c.l.b16 %v865
    %v1492 = vunpack.c.h.b16 %v865
    %v1493 = vunpack.c.l.b16 %v866
    %v1494 = vunpack.c.h.b16 %v866
    %v1495 = vunpack.c.l.b16 %v867
    %v1496 = vunpack.c.h.b16 %v867
    %v1497 = vunpack.c.l.b16 %v868
    %v1498 = vunpack.c.h.b16 %v868
    %v1499 = vunpack.c.l.b16 %v869
    %v1500 = vunpack.c.h.b16 %v869
    %v1501 = vunpack.c.l.b16 %v870
    %v1502 = vunpack.c.h.b16 %v870
    %v1503 = vunpack.c.l.b16 %v871
    %v1504 = vunpack.c.h.b16 %v871
    %v1505 = vunpack.c.l.b16 %v872
    %v1506 = vunpack.c.h.b16 %v872
    %v1507 = vunpack.c.l.b16 %v873
    %v1508 = vunpack.c.h.b16 %v873
    %v1509 = vunpack.c.l.b16 %v874
    %v1510 = vunpack.c.h.b16 %v874
    %v1511 = vunpack.c.l.b16 %v875
    %v1512 = vunpack.c.h.b16 %v875
    %v1513 = vunpack.c.l.b16 %v876
    %v1514 = vunpack.c.h.b16 %v876
    %v1515 = vunpack.c.l.b16 %v877
    %v1516 = vunpack.c.h.b16 %v877
    %v1517 = vunpack.c.l.b16 %v878
    %v1518 = vunpack.c.h.b16 %v878
    %v1519 = vunpack.c.l.b16 %v879
    %v1520 = vunpack.c.h.b16 %v879
    %v1521 = vunpack.c.l.b16 %v880
    %v1522 = vunpack.c.h.b16 %v880
    %v1523 = vunpack.c.l.b16 %v881
    %v1524 = vunpack.c.h.b16 %v881
    %v1525 = vunpack.c.l.b16 %v882
    %v1526 = vunpack.c.h.b16 %v882
    %v1527 = vunpack.c.l.b16 %v883
    %v1528 = vunpack.c.h.b16 %v883
    %v1529 = vunpack.c.l.b16 %v884
    %v1530 = vunpack.c.h.b16 %v884
    %v1531 = vunpack.c.l.b16 %v885
    %v1532 = vunpack.c.h.b16 %v885
    %v1533 = vunpack.c.l.b16 %v886
    %v1534 = vunpack.c.h.b16 %v886
    %v1535 = vunpack.c.l.b16 %v887
    %v1536 = vunpack.c.h.b16 %v887
    %v1537 = vunpack.c.l.b16 %v888
    %v1538 = vunpack.c.h.b16 %v888
    %v1539 = vunpack.c.l.b16 %v889
    %v1540 = vunpack.c.h.b16 %v889
    %v1541 = vunpack.c.l.b16 %v890
    %v1542 = vunpack.c.h.b16 %v890
    %v1543 = vunpack.c.l.b16 %v891
    %v1544 = vunpack.c.h.b16 %v891
    %v1545 = vunpack.c.l.b16 %v892
    %v1546 = vunpack.c.h.b16 %v892
    %v1547 = vunpack.c.l.b16 %v893
    %v1548 = vunpack.c.h.b16 %v893
    %v1549 = vunpack.c.l.b16 %v894
    %v1550 = vunpack.c.h.b16 %v894
    %v1551 = vunpack.c.l.b16 %v895
    %v1552 = vunpack.c.h.b16 %v895
    %v1553 = vunpack.c.l.b16 %v896
    %v1554 = vunpack.c.h.b16 %v896
    %v1555 = vunpack.c.l.b16 %v897
    %v1556 = vunpack.c.h.b16 %v897
    %v1557 = vunpack.c.l.b16 %v898
    %v1558 = vunpack.c.h.b16 %v898
    %v1559 = vunpack.c.l.b16 %v899
    %v1560 = vunpack.c.h.b16 %v899
    %v1561 = vunpack.c.l.b16 %v900
    %v1562 = vunpack.c.h.b16 %v900
    %v1563 = vunpack.c.l.b16 %v901
    %v1564 = vunpack.c.h.b16 %v901
    %v1565 = vunpack.c.l.b16 %v902
    %v1566 = vunpack.c.h.b16 %v902
    %v1567 = vunpack.c.l.b16 %v903
    %v1568 = vunpack.c.h.b16 %v903
    %v1569 = vunpack.c.l.b16 %v904
    %v1570 = vunpack.c.h.b16 %v904
    %v1571 = vunpack.c.l.b16 %v905
    %v1572 = vunpack.c.h.b16 %v905
    %v1573 = vunpack.c.l.b16 %v906
    %v1574 = vunpack.c.h.b16 %v906
    %v1575 = vunpack.c.l.b16 %v907
    %v1576 = vunpack.c.h.b16 %v907
    %v1577 = vunpack.c.l.b16 %v908
    %v1578 = vunpack.c.h.b16 %v908
    %v1579 = vunpack.c.l.b16 %v909
    %v1580 = vunpack.c.h.b16 %v909
    %v1581 = vunpack.c.l.b16 %v910
    %v1582 = vunpack.c.h.b16 %v910
    %v1583 = vunpack.c.l.b16 %v911
    %v1584 = vunpack.c.h.b16 %v911
    %v1585 = vunpack.c.l.b16 %v912
    %v1586 = vunpack.c.h.b16 %v912
    %v1587 = vunpack.c.l.b16 %v913
    %v1588 = vunpack.c.h.b16 %v913
    %v1589 = vunpack.c.l.b16 %v914
    %v1590 = vunpack.c.h.b16 %v914
    %v1591 = vunpack.c.l.b16 %v915
    %v1592 = vunpack.c.h.b16 %v915
    %v1593 = vunpack.c.l.b16 %v916
    %v1594 = vunpack.c.h.b16 %v916
    %v1595 = vunpack.c.l.b16 %v917
    %v1596 = vunpack.c.h.b16 %v917
    %v1597 = vunpack.c.l.b16 %v918
    %v1598 = vunpack.c.h.b16 %v918
    %v1599 = vunpack.c.l.b16 %v919
    %v1600 = vunpack.c.h.b16 %v919
    %v1601 = vunpack.c.l.b16 %v920
    %v1602 = vunpack.c.h.b16 %v920
    %v1603 = vunpack.c.l.b16 %v921
    %v1604 = vunpack.c.h.b16 %v921
    %v1605 = vunpack.c.l.b16 %v922
    %v1606 = vunpack.c.h.b16 %v922
    %v1607 = vunpack.c.l.b16 %v923
    %v1608 = vunpack.c.h.b16 %v923
    %v1609 = vunpack.c.l.b16 %v924
    %v1610 = vunpack.c.h.b16 %v924
    %v1611 = vunpack.c.l.b16 %v925
    %v1612 = vunpack.c.h.b16 %v925
    %v1613 = vunpack.c.l.b16 %v926
    %v1614 = vunpack.c.h.b16 %v926
    %v1615 = vunpack.c.l.b16 %v927
    %v1616 = vunpack.c.h.b16 %v927
    %v1617 = vunpack.c.l.b16 %v928
    %v1618 = vunpack.c.h.b16 %v928
    %v1619 = vunpack.c.l.b16 %v929
    %v1620 = vunpack.c.h.b16 %v929
    %v1621 = vunpack.c.l.b16 %v930
    %v1622 = vunpack.c.h.b16 %v930
    %v1623 = vunpack.c.l.b16 %v931
    %v1624 = vunpack.c.h.b16 %v931
    %v1625 = vunpack.c.l.b16 %v932
    %v1626 = vunpack.c.h.b16 %v932
    %v1627 = vunpack.c.l.b16 %v933
    %v1628 = vunpack.c.h.b16 %v933
    %v1629 = vunpack.c.l.b16 %v934
    %v1630 = vunpack.c.h.b16 %v934
    %v1631 = vunpack.c.l.b16 %v935
    %v1632 = vunpack.c.h.b16 %v935
    %v1633 = vunpack.c.l.b16 %v936
    %v1634 = vunpack.c.h.b16 %v936
    %v1635 = vunpack.c.l.b16 %v937
    %v1636 = vunpack.c.h.b16 %v937
    %v1637 = vunpack.c.l.b16 %v938
    %v1638 = vunpack.c.h.b16 %v938
    %v1639 = vunpack.c.l.b16 %v939
    %v1640 = vunpack.c.h.b16 %v939
    %v1641 = vunpack.c.l.b16 %v940
    %v1642 = vunpack.c.h.b16 %v940
    %v1643 = vunpack.c.l.b16 %v941
    %v1644 = vunpack.c.h.b16 %v941
    %v1645 = vunpack.c.l.b16 %v942
    %v1646 = vunpack.c.h.b16 %v942
    %v1647 = vunpack.c.l.b16 %v943
    %v1648 = vunpack.c.h.b16 %v943
    %v1649 = vunpack.c.l.b16 %v944
    %v1650 = vunpack.c.h.b16 %v944
    %v1651 = vunpack.c.l.b16 %v945
    %v1652 = vunpack.c.h.b16 %v945
    %v1653 = vunpack.c.l.b16 %v946
    %v1654 = vunpack.c.h.b16 %v946
    %v1655 = vunpack.c.l.b16 %v947
    %v1656 = vunpack.c.h.b16 %v947
    %v1657 = vunpack.c.l.b16 %v948
    %v1658 = vunpack.c.h.b16 %v948
    %v1659 = vunpack.c.l.b16 %v949
    %v1660 = vunpack.c.h.b16 %v949
    %v1661 = vunpack.c.l.b16 %v950
    %v1662 = vunpack.c.h.b16 %v950
    %v1663 = vunpack.c.l.b16 %v951
    %v1664 = vunpack.c.h.b16 %v951
    %v1665 = vunpack.c.l.b16 %v952
    %v1666 = vunpack.c.h.b16 %v952
    %v1667 = vunpack.c.l.b16 %v953
    %v1668 = vunpack.c.h.b16 %v953
    %v1669 = vunpack.c.l.b16 %v954
    %v1670 = vunpack.c.h.b16 %v954
    %v1671 = vunpack.c.l.b16 %v955
    %v1672 = vunpack.c.h.b16 %v955
    %v1673 = vunpack.c.l.b16 %v956
    %v1674 = vunpack.c.h.b16 %v956
    %v1675 = vunpack.c.l.b16 %v957
    %v1676 = vunpack.c.h.b16 %v957
    %v1677 = vunpack.c.l.b16 %v958
    %v1678 = vunpack.c.h.b16 %v958
    %v1679 = vunpack.c.l.b16 %v959
    %v1680 = vunpack.c.h.b16 %v959
    %v1681 = vunpack.c.l.b16 %v960
    %v1682 = vunpack.c.h.b16 %v960
    %v1683 = vunpack.c.l.b16 %v961
    %v1684 = vunpack.c.h.b16 %v961
    %v1685 = vunpack.c.l.b16 %v962
    %v1686 = vunpack.c.h.b16 %v962
    %v1687 = vunpack.c.l.b16 %v963
    %v1688 = vunpack.c.h.b16 %v963
    %v1689 = vunpack.c.l.b16 %v964
    %v1690 = vunpack.c.h.b16 %v964
    %v1691 = vunpack.c.l.b16 %v965
    %v1692 = vunpack.c.h.b16 %v965
    %v1693 = vunpack.c.l.b16 %v966
    %v1694 = vunpack.c.h.b16 %v966
    %v1695 = vunpack.c.l.b16 %v967
    %v1696 = vunpack.c.h.b16 %v967
    %v1697 = vunpack.c.l.b16 %v968
    %v1698 = vunpack.c.h.b16 %v968
    %v1699 = vunpack.c.l.b16 %v969
    %v1700 = vunpack.c.h.b16 %v969
    %v1701 = vunpack.c.l.b16 %v970
    %v1702 = vunpack.c.h.b16 %v970
    %v1703 = vunpack.c.l.b16 %v971
    %v1704 = vunpack.c.h.b16 %v971
    %v1705 = vunpack.c.l.b16 %v972
    %v1706 = vunpack.c.h.b16 %v972
    %v1707 = vunpack.c.l.b16 %v973
    %v1708 = vunpack.c.h.b16 %v973
    %v1709 = vunpack.c.l.b16 %v974
    %v1710 = vunpack.c.h.b16 %v974
    %v1711 = vunpack.c.l.b16 %v975
    %v1712 = vunpack.c.h.b16 %v975
    %v1713 = vunpack.c.l.b16 %v976
    %v1714 = vunpack.c.h.b16 %v976
    %v1715 = vunpack.c.l.b16 %v977
    %v1716 = vunpack.c.h.b16 %v977
    %v1717 = vunpack.c.l.b16 %v978
    %v1718 = vunpack.c.h.b16 %v978
    %v1719 = vunpack.c.l.b16 %v979
    %v1720 = vunpack.c.h.b16 %v979
    %v1721 = vunpack.c.l.b16 %v980
    %v1722 = vunpack.c.h.b16 %v980
    %v1723 = vunpack.c.l.b16 %v981
    %v1724 = vunpack.c.h.b16 %v981
    %v1725 = vunpack.c.l.b16 %v982
    %v1726 = vunpack.c.h.b16 %v982
    %v1727 = vunpack.c.l.b16 %v983
    %v1728 = vunpack.c.h.b16 %v983
    %v1729 = vunpack.c.l.b16 %v984
    %v1730 = vunpack.c.h.b16 %v984
    %v1731 = vunpack.c.l.b16 %v985
    %v1732 = vunpack.c.h.b16 %v985
    %v1733 = vunpack.c.l.b16 %v986
    %v1734 = vunpack.c.h.b16 %v986
    %v1735 = vunpack.c.l.b16 %v987
    %v1736 = vunpack.c.h.b16 %v987
    %v1737 = vunpack.c.l.b16 %v988
    %v1738 = vunpack.c.h.b16 %v988
    %v1739 = vunpack.c.l.b16 %v989
    %v1740 = vunpack.c.h.b16 %v989
    %v1741 = vunpack.c.l.b16 %v990
    %v1742 = vunpack.c.h.b16 %v990
    %v1743 = vunpack.c.l.b16 %v991
    %v1744 = vunpack.c.h.b16 %v991
    %v1745 = vunpack.c.l.b16 %v992
    %v1746 = vunpack.c.h.b16 %v992
    %v1747 = vunpack.c.l.b16 %v993
    %v1748 = vunpack.c.h.b16 %v993
    %v1749 = vunpack.c.l.b16 %v994
    %v1750 = vunpack.c.h.b16 %v994
    %v1751 = vunpack.c.l.b16 %v995
    %v1752 = vunpack.c.h.b16 %v995
    %v1753 = vunpack.c.l.b16 %v996
    %v1754 = vunpack.c.h.b16 %v996
    %v1755 = vunpack.c.l.b16 %v997
    %v1756 = vunpack.c.h.b16 %v997
    %v1757 = vunpack.c.l.b16 %v998
    %v1758 = vunpack.c.h.b16 %v998
    %v1759 = vunpack.c.l.b16 %v999
    %v1760 = vunpack.c.h.b16 %v999
    %v1761 = vunpack.c.l.b16 %v1000
    %v1762 = vunpack.c.h.b16 %v1000
    %v1763 = vunpack.c.l.b16 %v1001
    %v1764 = vunpack.c.h.b16 %v1001
    %v1765 = vunpack.c.l.b16 %v1002
    %v1766 = vunpack.c.h.b16 %v1002
    %v1767 = vunpack.c.l.b16 %v1003
    %v1768 = vunpack.c.h.b16 %v1003
    %v1769 = vunpack.c.l.b16 %v1004
    %v1770 = vunpack.c.h.b16 %v1004
    %v1771 = vunpack.c.l.b16 %v1005
    %v1772 = vunpack.c.h.b16 %v1005
    %v1773 = vunpack.c.l.b16 %v1006
    %v1774 = vunpack.c.h.b16 %v1006
    %v1775 = vpack.c.b16 %v1271, %v1263
    %v1776 = vpack.c.b16 %v1272, %v1264
    %v1777 = vpack.c.b16 %v1273, %v1265
    %v1778 = vpack.c.b16 %v1274, %v1266
    %v1779 = vpack.c.b16 %v1275, %v1267
    %v1780 = vpack.c.b16 %v1276, %v1268
    %v1781 = vpack.c.b16 %v1277, %v1269
    %v1782 = vpack.c.b16 %v1278, %v1270
    %v1783 = vpack.c.b16 %v1287, %v1279
    %v1784 = vpack.c.b16 %v1288, %v1280
    %v1785 = vpack.c.b16 %v1289, %v1281
    %v1786 = vpack.c.b16 %v1290, %v1282
    %v1787 = vpack.c.b16 %v1291, %v1283
    %v1788 = vpack.c.b16 %v1292, %v1284
    %v1789 = vpack.c.b16 %v1293, %v1285
    %v1790 = vpack.c.b16 %v1294, %v1286
    %v1791 = vpack.c.b16 %v1303, %v1295
    %v1792 = vpack.c.b16 %v1304, %v1296
    %v1793 = vpack.c.b16 %v1305, %v1297
    %v1794 = vpack.c.b16 %v1306, %v1298
    %v1795 = vpack.c.b16 %v1307, %v1299
    %v1796 = vpack.c.b16 %v1308, %v1300
    %v1797 = vpack.c.b16 %v1309, %v1301
    %v1798 = vpack.c.b16 %v1310, %v1302
    %v1799 = vpack.c.b16 %v1319, %v1311
    %v1800 = vpack.c.b16 %v1320, %v1312
    %v1801 = vpack.c.b16 %v1321, %v1313
    %v1802 = vpack.c.b16 %v1322, %v1314
    %v1803 = vpack.c.b16 %v1323, %v1315
    %v1804 = vpack.c.b16 %v1324, %v1316
    %v1805 = vpack.c.b16 %v1325, %v1317
    %v1806 = vpack.c.b16 %v1326, %v1318
    %v1807 = vpack.c.b16 %v1335, %v1327
    %v1808 = vpack.c.b16 %v1336, %v1328
    %v1809 = vpack.c.b16 %v1337, %v1329
    %v1810 = vpack.c.b16 %v1338, %v1330
    %v1811 = vpack.c.b16 %v1339, %v1331
    %v1812 = vpack.c.b16 %v1340, %v1332
    %v1813 = vpack.c.b16 %v1341, %v1333
    %v1814 = vpack.c.b16 %v1342, %v1334
    %v1815 = vpack.c.b16 %v1351, %v1343
    %v1816 = vpack.c.b16 %v1352, %v1344
    %v1817 = vpack.c.b16 %v1353, %v1345
    %v1818 = vpack.c.b16 %v1354, %v1346
    %v1819 = vpack.c.b16 %v1355, %v1347
    %v1820 = vpack.c.b16 %v1356, %v1348
    %v1821 = vpack.c.b16 %v1357, %v1349
    %v1822 = vpack.c.b16 %v1358, %v1350
    %v1823 = vpack.c.b16 %v1367, %v1359
    %v1824 = vpack.c.b16 %v1368, %v1360
    %v1825 = vpack.c.b16 %v1369, %v1361
    %v1826 = vpack.c.b16 %v1370, %v1362
    %v1827 = vpack.c.b16 %v1371, %v1363
    %v1828 = vpack.c.b16 %v1372, %v1364
    %v1829 = vpack.c.b16 %v1373, %v1365
    %v1830 = vpack.c.b16 %v1374, %v1366
    %v1831 = vpack.c.b16 %v1383, %v1375
    %v1832 = vpack.c.b16 %v1384, %v1376
    %v1833 = vpack.c.b16 %v1385, %v1377
    %v1834 = vpack.c.b16 %v1386, %v1378
    %v1835 = vpack.c.b16 %v1387, %v1379
    %v1836 = vpack.c.b16 %v1388, %v1380
    %v1837 = vpack.c.b16 %v1389, %v1381
    %v1838 = vpack.c.b16 %v1390, %v1382
    %v1839 = vpack.c.b16 %v1399, %v1391
    %v1840 = vpack.c.b16 %v1400, %v1392
    %v1841 = vpack.c.b16 %v1401, %v1393
    %v1842 = vpack.c.b16 %v1402, %v1394
    %v1843 = vpack.c.b16 %v1403, %v1395
    %v1844 = vpack.c.b16 %v1404, %v1396
    %v1845 = vpack.c.b16 %v1405, %v1397
    %v1846 = vpack.c.b16 %v1406, %v1398
    %v1847 = vpack.c.b16 %v1415, %v1407
    %v1848 = vpack.c.b16 %v1416, %v1408
    %v1849 = vpack.c.b16 %v1417, %v1409
    %v1850 = vpack.c.b16 %v1418, %v1410
    %v1851 = vpack.c.b16 %v1419, %v1411
    %v1852 = vpack.c.b16 %v1420, %v1412
    %v1853 = vpack.c.b16 %v1421, %v1413
    %v1854 = vpack.c.b16 %v1422, %v1414
    %v1855 = vpack.c.b16 %v1431, %v1423
    %v1856 = vpack.c.b16 %v1432, %v1424
    %v1857 = vpack.c.b16 %v1433, %v1425
    %v1858 = vpack.c.b16 %v1434, %v1426
    %v1859 = vpack.c.b16 %v1435, %v1427
    %v1860 = vpack.c.b16 %v1436, %v1428
    %v1861 = vpack.c.b16 %v1437, %v1429
    %v1862 = vpack.c.b16 %v1438, %v1430
    %v1863 = vpack.c.b16 %v1447, %v1439
    %v1864 = vpack.c.b16 %v1448, %v1440
    %v1865 = vpack.c.b16 %v1449, %v1441
    %v1866 = vpack.c.b16 %v1450, %v1442
    %v1867 = vpack.c.b16 %v1451, %v1443
    %v1868 = vpack.c.b16 %v1452, %v1444
    %v1869 = vpack.c.b16 %v1453, %v1445
    %v1870 = vpack.c.b16 %v1454, %v1446
    %v1871 = vpack.c.b16 %v1463, %v1455
    %v1872 = vpack.c.b16 %v1464, %v1456
    %v1873 = vpack.c.b16 %v1465, %v1457
    %v1874 = vpack.c.b16 %v1466, %v1458
    %v1875 = vpack.c.b16 %v1467, %v1459
    %v1876 = vpack.c.b16 %v1468, %v1460
    %v1877 = vpack.c.b16 %v1469, %v1461
    %v1878 = vpack.c.b16 %v1470, %v1462
    %v1879 = vpack.c.b16 %v1479, %v1471
    %v1880 = vpack.c.b16 %v1480, %v1472
    %v1881 = vpack.c.b16 %v1481, %v1473
    %v1882 = vpack.c.b16 %v1482, %v1474
    %v1883 = vpack.c.b16 %v1483, %v1475
    %v1884 = vpack.c.b16 %v1484, %v1476
    %v1885 = vpack.c.b16 %v1485, %v1477
    %v1886 = vpack.c.b16 %v1486, %v1478
    %v1887 = vpack.c.b16 %v1495, %v1487
    %v1888 = vpack.c.b16 %v1496, %v1488
    %v1889 = vpack.c.b16 %v1497, %v1489
    %v1890 = vpack.c.b16 %v1498, %v1490
    %v1891 = vpack.c.b16 %v1499, %v1491
    %v1892 = vpack.c.b16 %v1500, %v1492
    %v1893 = vpack.c.b16 %v1501, %v1493
    %v1894 = vpack.c.b16 %v1502, %v1494
    %v1895 = vpack.c.b16 %v1511, %v1503
    %v1896 = vpack.c.b16 %v1512, %v1504
    %v1897 = vpack.c.b16 %v1513, %v1505
    %v1898 = vpack.c.b16 %v1514, %v1506
    %v1899 = vpack.c.b16 %v1515, %v1507
    %v1900 = vpack.c.b16 %v1516, %v1508
    %v1901 = vpack.c.b16 %v1517, %v1509
    %v1902 = vpack.c.b16 %v1518, %v1510
    %v1903 = vpack.c.b16 %v1527, %v1519
    %v1904 = vpack.c.b16 %v1528, %v1520
    %v1905 = vpack.c.b16 %v1529, %v1521
    %v1906 = vpack.c.b16 %v1530, %v1522
    %v1907 = vpack.c.b16 %v1531, %v1523
    %v1908 = vpack.c.b16 %v1532, %v1524
    %v1909 = vpack.c.b16 %v1533, %v1525
    %v1910 = vpack.c.b16 %v1534, %v1526
    %v1911 = vpack.c.b16 %v1543, %v1535
    %v1912 = vpack.c.b16 %v1544, %v1536
    %v1913 = vpack.c.b16 %v1545, %v1537
    %v1914 = vpack.c.b16 %v1546, %v1538
    %v1915 = vpack.c.b16 %v1547, %v1539
    %v1916 = vpack.c.b16 %v1548, %v1540
    %v1917 = vpack.c.b16 %v1549, %v1541
    %v1918 = vpack.c.b16 %v1550, %v1542
    %v1919 = vpack.c.b16 %v1559, %v1551
    %v1920 = vpack.c.b16 %v1560, %v1552
    %v1921 = vpack.c.b16 %v1561, %v1553
    %v1922 = vpack.c.b16 %v1562, %v1554
    %v1923 = vpack.c.b16 %v1563, %v1555
    %v1924 = vpack.c.b16 %v1564, %v1556
    %v1925 = vpack.c.b16 %v1565, %v1557
    %v1926 = vpack.c.b16 %v1566, %v1558
    %v1927 = vpack.c.b16 %v1575, %v1567
    %v1928 = vpack.c.b16 %v1576, %v1568
    %v1929 = vpack.c.b16 %v1577, %v1569
    %v1930 = vpack.c.b16 %v1578, %v1570
    %v1931 = vpack.c.b16 %v1579, %v1571
    %v1932 = vpack.c.b16 %v1580, %v1572
    %v1933 = vpack.c.b16 %v1581, %v1573
    %v1934 = vpack.c.b16 %v1582, %v1574
    %v1935 = vpack.c.b16 %v1591, %v1583
    %v1936 = vpack.c.b16 %v1592, %v1584
    %v1937 = vpack.c.b16 %v1593, %v1585
    %v1938 = vpack.c.b16 %v1594, %v1586
    %v1939 = vpack.c.b16 %v1595, %v1587
    %v1940 = vpack.c.b16 %v1596, %v1588
    %v1941 = vpack.c.b16 %v1597, %v1589
    %v1942 = vpack.c.b16 %v1598, %v1590
    %v1943 = vpack.c.b16 %v1607, %v1599
    %v1944 = vpack.c.b16 %v1608, %v1600
    %v1945 = vpack.c.b16 %v1609, %v1601
    %v1946 = vpack.c.b16 %v1610, %v1602
    %v1947 = vpack.c.b16 %v1611, %v1603
    %v1948 = vpack.c.b16 %v1612, %v1604
    %v1949 = vpack.c.b16 %v1613, %v1605
    %v1950 = vpack.c.b16 %v1614, %v1606
    %v1951 = vpack.c.b16 %v1623, %v1615
    %v1952 = vpack.c.b16 %v1624, %v1616
    %v1953 = vpack.c.b16 %v1625, %v1617
    %v1954 = vpack.c.b16 %v1626, %v1618
    %v1955 = vpack.c.b16 %v1627, %v1619
    %v1956 = vpack.c.b16 %v1628, %v1620
    %v1957 = vpack.c.b16 %v1629, %v1621
    %v1958 = vpack.c.b16 %v1630, %v1622
    %v1959 = vpack.c.b16 %v1639, %v1631
    %v1960 = vpack.c.b16 %v1640, %v1632
    %v1961 = vpack.c.b16 %v1641, %v1633
    %v1962 = vpack.c.b16 %v1642, %v1634
    %v1963 = vpack.c.b16 %v1643, %v1635
    %v1964 = vpack.c.b16 %v1644, %v1636
    %v1965 = vpack.c.b16 %v1645, %v1637
    %v1966 = vpack.c.b16 %v1646, %v1638
    %v1967 = vpack.c.b16 %v1655, %v1647
    %v1968 = vpack.c.b16 %v1656, %v1648
    %v1969 = vpack.c.b16 %v1657, %v1649
    %v1970 = vpack.c.b16 %v1658, %v1650
    %v1971 = vpack.c.b16 %v1659, %v1651
    %v1972 = vpack.c.b16 %v1660, %v1652
    %v1973 = vpack.c.b16 %v1661, %v1653
    %v1974 = vpack.c.b16 %v1662, %v1654
    %v1975 = vpack.c.b16 %v1671, %v1663
    %v1976 = vpack.c.b16 %v1672, %v1664
    %v1977 = vpack.c.b16 %v1673, %v1665
    %v1978 = vpack.c.b16 %v1674, %v1666
    %v1979 = vpack.c.b16 %v1675, %v1667
    %v1980 = vpack.c.b16 %v1676, %v1668
    %v1981 = vpack.c.b16 %v1677, %v1669
    %v1982 = vpack.c.b16 %v1678, %v1670
    %v1983 = vpack.c.b16 %v1687, %v1679
    %v1984 = vpack.c.b16 %v1688, %v1680
    %v1985 = vpack.c.b16 %v1689, %v1681
    %v1986 = vpack.c.b16 %v1690, %v1682
    %v1987 = vpack.c.b16 %v1691, %v1683
    %v1988 = vpack.c.b16 %v1692, %v1684
    %v1989 = vpack.c.b16 %v1693, %v1685
    %v1990 = vpack.c.b16 %v1694, %v1686
    %v1991 = vpack.c.b16 %v1703, %v1695
    %v1992 = vpack.c.b16 %v1704, %v1696
    %v1993 = vpack.c.b16 %v1705, %v1697
    %v1994 = vpack.c.b16 %v1706, %v1698
    %v1995 = vpack.c.b16 %v1707, %v1699
    %v1996 = vpack.c.b16 %v1708, %v1700
    %v1997 = vpack.c.b16 %v1709, %v1701
    %v1998 = vpack.c.b16 %v1710, %v1702
    %v1999 = vpack.c.b16 %v1719, %v1711
    %v2000 = vpack.c.b16 %v1720, %v1712
    %v2001 = vpack.c.b16 %v1721, %v1713
    %v2002 = vpack.c.b16 %v1722, %v1714
    %v2003 = vpack.c.b16 %v1723, %v1715
    %v2004 = vpack.c.b16 %v1724, %v1716
    %v2005 = vpack.c.b16 %v1725, %v1717
    %v2006 = vpack.c.b16 %v1726, %v1718
    %v2007 = vpack.c.b16 %v1735, %v1727
    %v2008 = vpack.c.b16 %v1736, %v1728
    %v2009 = vpack.c.b16 %v1737, %v1729
    %v2010 = vpack.c.b16 %v1738, %v1730
    %v2011 = vpack.c.b16 %v1739, %v1731
    %v2012 = vpack.c.b16 %v1740, %v1732
    %v2013 = vpack.c.b16 %v1741, %v1733
    %v2014 = vpack.c.b16 %v1742, %v1734
    %v2015 = vpack.c.b16 %v1751, %v1743
    %v2016 = vpack.c.b16 %v1752, %v1744
    %v2017 = vpack.c.b16 %v1753, %v1745
    %v2018 = vpack.c.b16 %v1754, %v1746
    %v2019 = vpack.c.b16 %v1755, %v1747
    %v2020 = vpack.c.b16 %v1756, %v1748
    %v2021 = vpack.c.b16 %v1757, %v1749
    %v2022 = vpack.c.b16 %v1758, %v1750
    %v2023 = vpack.c.b16 %v1767, %v1759
    %v2024 = vpack.c.b16 %v1768, %v1760
    %v2025 = vpack.c.b16 %v1769, %v1761
    %v2026 = vpack.c.b16 %v1770, %v1762
    %v2027 = vpack.c.b16 %v1771, %v1763
    %v2028 = vpack.c.b16 %v1772, %v1764
    %v2029 = vpack.c.b16 %v1773, %v1765
    %v2030 = vpack.c.b16 %v1774, %v1766
    %2287 = vmatprep.subr.bf16.mxu0 %v1776
    %2288 = vmatpush1.bf16.msra.mxu0 %v1775
    %2289 = vmatprep.subr.bf16.mxu0 %v1784
    %2290 = vmatpush1.bf16.msra.mxu0 %v1783
    %2291 = vmatprep.subr.bf16.mxu0 %v1792
    %2292 = vmatpush1.bf16.msra.mxu0 %v1791
    %2293 = vmatprep.subr.bf16.mxu0 %v1800
    %2294 = vmatpush1.bf16.msra.mxu0 %v1799
    %2295 = vmatprep.subr.bf16.mxu0 %v1808
    %2296 = vmatpush1.bf16.msra.mxu0 %v1807
    %2297 = vmatprep.subr.bf16.mxu0 %v1816
    %2298 = vmatpush1.bf16.msra.mxu0 %v1815
    %2299 = vmatprep.subr.bf16.mxu0 %v1824
    %2300 = vmatpush1.bf16.msra.mxu0 %v1823
    %2301 = vmatprep.subr.bf16.mxu0 %v1832
    %2302 = vmatpush1.bf16.msra.mxu0 %v1831
    %2303 = vmatprep.subr.bf16.mxu0 %v1840
    %2304 = vmatpush1.bf16.msra.mxu0 %v1839
    %2305 = vmatprep.subr.bf16.mxu0 %v1848
    %2306 = vmatpush1.bf16.msra.mxu0 %v1847
    %2307 = vmatprep.subr.bf16.mxu0 %v1856
    %2308 = vmatpush1.bf16.msra.mxu0 %v1855
    %2309 = vmatprep.subr.bf16.mxu0 %v1864
    %2310 = vmatpush1.bf16.msra.mxu0 %v1863
    %2311 = vmatprep.subr.bf16.mxu0 %v1872
    %2312 = vmatpush1.bf16.msra.mxu0 %v1871
    %2313 = vmatprep.subr.bf16.mxu0 %v1880
    %2314 = vmatpush1.bf16.msra.mxu0 %v1879
    %2315 = vmatprep.subr.bf16.mxu0 %v1888
    %2316 = vmatpush1.bf16.msra.mxu0 %v1887
    %2317 = vmatprep.subr.bf16.mxu0 %v1896
    %2318 = vmatpush1.bf16.msra.mxu0 %v1895
    %2319 = vmatprep.mubr.bf16.mxu0 %v748
    %2320 = vmatmul.mubr.bf16.gmra.mrb[0].mxu0 %v747
    %v2321 = vpop.f32.mrb[0].mxu0
    %v2322 = vadd.f32 0.0, %v2321
    %v2323 = vpop.f32.mrb[0].mxu0
    %v2324 = vadd.f32 0.0, %v2323
    %v2325 = vpop.f32.mrb[0].mxu0
    %v2326 = vpop.f32.mrb[0].mxu0
    %2327 = vdwg.mxu0
    %2328 = vmatprep.subr.bf16.mxu0 %v1904
    %2329 = vmatpush1.bf16.msra.mxu0 %v1903
    %2330 = vmatprep.subr.bf16.mxu0 %v1912
    %2331 = vmatpush1.bf16.msra.mxu0 %v1911
    %2332 = vmatprep.subr.bf16.mxu0 %v1920
    %2333 = vmatpush1.bf16.msra.mxu0 %v1919
    %2334 = vmatprep.subr.bf16.mxu0 %v1928
    %2335 = vmatpush1.bf16.msra.mxu0 %v1927
    %2336 = vmatprep.subr.bf16.mxu0 %v1936
    %2337 = vmatpush1.bf16.msra.mxu0 %v1935
    %2338 = vmatprep.subr.bf16.mxu0 %v1944
    %2339 = vmatpush1.bf16.msra.mxu0 %v1943
    %2340 = vmatprep.subr.bf16.mxu0 %v1952
    %2341 = vmatpush1.bf16.msra.mxu0 %v1951
    %2342 = vmatprep.subr.bf16.mxu0 %v1960
    %2343 = vmatpush1.bf16.msra.mxu0 %v1959
    %2344 = vmatprep.subr.bf16.mxu0 %v1968
    %2345 = vmatpush1.bf16.msra.mxu0 %v1967
    %2346 = vmatprep.subr.bf16.mxu0 %v1976
    %2347 = vmatpush1.bf16.msra.mxu0 %v1975
    %2348 = vmatprep.subr.bf16.mxu0 %v1984
    %2349 = vmatpush1.bf16.msra.mxu0 %v1983
    %2350 = vmatprep.subr.bf16.mxu0 %v1992
    %2351 = vmatpush1.bf16.msra.mxu0 %v1991
    %2352 = vmatprep.subr.bf16.mxu0 %v2000
    %2353 = vmatpush1.bf16.msra.mxu0 %v1999
    %2354 = vmatprep.subr.bf16.mxu0 %v2008
    %2355 = vmatpush1.bf16.msra.mxu0 %v2007
    %2356 = vmatprep.subr.bf16.mxu0 %v2016
    %2357 = vmatpush1.bf16.msra.mxu0 %v2015
    %2358 = vmatprep.subr.bf16.mxu0 %v2024
    %2359 = vmatpush1.bf16.msra.mxu0 %v2023
    %2360 = vmatprep.mubr.bf16.mxu0 %v750
    %2361 = vmatmul.mubr.bf16.gmra.mrb[0].mxu0 %v749
    %v2362 = vpop.f32.mrb[0].mxu0
    %v2363 = vadd.f32 %v2322, %v2362
    %v2364 = vpop.f32.mrb[0].mxu0
    %v2365 = vadd.f32 %v2324, %v2364
    %v2366 = vpop.f32.mrb[0].mxu0
    %v2367 = vpop.f32.mrb[0].mxu0
    %2368 = vdwg.mxu0
    %2369 = vmatprep.subr.bf16.mxu0 %v1778
    %2370 = vmatpush1.bf16.msra.mxu0 %v1777
    %2371 = vmatprep.subr.bf16.mxu0 %v1786
    %2372 = vmatpush1.bf16.msra.mxu0 %v1785
    %2373 = vmatprep.subr.bf16.mxu0 %v1794
    %2374 = vmatpush1.bf16.msra.mxu0 %v1793
    %2375 = vmatprep.subr.bf16.mxu0 %v1802
    %2376 = vmatpush1.bf16.msra.mxu0 %v1801
    %2377 = vmatprep.subr.bf16.mxu0 %v1810
    %2378 = vmatpush1.bf16.msra.mxu0 %v1809
    %2379 = vmatprep.subr.bf16.mxu0 %v1818
    %2380 = vmatpush1.bf16.msra.mxu0 %v1817
    %2381 = vmatprep.subr.bf16.mxu0 %v1826
    %2382 = vmatpush1.bf16.msra.mxu0 %v1825
    %2383 = vmatprep.subr.bf16.mxu0 %v1834
    %2384 = vmatpush1.bf16.msra.mxu0 %v1833
    %2385 = vmatprep.subr.bf16.mxu0 %v1842
    %2386 = vmatpush1.bf16.msra.mxu0 %v1841
    %2387 = vmatprep.subr.bf16.mxu0 %v1850
    %2388 = vmatpush1.bf16.msra.mxu0 %v1849
    %2389 = vmatprep.subr.bf16.mxu0 %v1858
    %2390 = vmatpush1.bf16.msra.mxu0 %v1857
    %2391 = vmatprep.subr.bf16.mxu0 %v1866
    %2392 = vmatpush1.bf16.msra.mxu0 %v1865
    %2393 = vmatprep.subr.bf16.mxu0 %v1874
    %2394 = vmatpush1.bf16.msra.mxu0 %v1873
    %2395 = vmatprep.subr.bf16.mxu0 %v1882
    %2396 = vmatpush1.bf16.msra.mxu0 %v1881
    %2397 = vmatprep.subr.bf16.mxu0 %v1890
    %2398 = vmatpush1.bf16.msra.mxu0 %v1889
    %2399 = vmatprep.subr.bf16.mxu0 %v1898
    %2400 = vmatpush1.bf16.msra.mxu0 %v1897
    %2401 = vmatprep.mubr.bf16.mxu0 %v748
    %2402 = vmatmul.mubr.bf16.gmra.mrb[0].mxu0 %v747
    %v2403 = vpop.f32.mrb[0].mxu0
    %v2404 = vadd.f32 0.0, %v2403
    %v2405 = vpop.f32.mrb[0].mxu0
    %v2406 = vadd.f32 0.0, %v2405
    %v2407 = vpop.f32.mrb[0].mxu0
    %v2408 = vpop.f32.mrb[0].mxu0
    %2409 = vdwg.mxu0
    %2410 = vmatprep.subr.bf16.mxu0 %v1906
    %2411 = vmatpush1.bf16.msra.mxu0 %v1905
    %2412 = vmatprep.subr.bf16.mxu0 %v1914
    %2413 = vmatpush1.bf16.msra.mxu0 %v1913
    %2414 = vmatprep.subr.bf16.mxu0 %v1922
    %2415 = vmatpush1.bf16.msra.mxu0 %v1921
    %2416 = vmatprep.subr.bf16.mxu0 %v1930
    %2417 = vmatpush1.bf16.msra.mxu0 %v1929
    %2418 = vmatprep.subr.bf16.mxu0 %v1938
    %2419 = vmatpush1.bf16.msra.mxu0 %v1937
    %2420 = vmatprep.subr.bf16.mxu0 %v1946
    %2421 = vmatpush1.bf16.msra.mxu0 %v1945
    %2422 = vmatprep.subr.bf16.mxu0 %v1954
    %2423 = vmatpush1.bf16.msra.mxu0 %v1953
    %2424 = vmatprep.subr.bf16.mxu0 %v1962
    %2425 = vmatpush1.bf16.msra.mxu0 %v1961
    %2426 = vmatprep.subr.bf16.mxu0 %v1970
    %2427 = vmatpush1.bf16.msra.mxu0 %v1969
    %2428 = vmatprep.subr.bf16.mxu0 %v1978
    %2429 = vmatpush1.bf16.msra.mxu0 %v1977
    %2430 = vmatprep.subr.bf16.mxu0 %v1986
    %2431 = vmatpush1.bf16.msra.mxu0 %v1985
    %2432 = vmatprep.subr.bf16.mxu0 %v1994
    %2433 = vmatpush1.bf16.msra.mxu0 %v1993
    %2434 = vmatprep.subr.bf16.mxu0 %v2002
    %2435 = vmatpush1.bf16.msra.mxu0 %v2001
    %2436 = vmatprep.subr.bf16.mxu0 %v2010
    %2437 = vmatpush1.bf16.msra.mxu0 %v2009
    %2438 = vmatprep.subr.bf16.mxu0 %v2018
    %2439 = vmatpush1.bf16.msra.mxu0 %v2017
    %2440 = vmatprep.subr.bf16.mxu0 %v2026
    %2441 = vmatpush1.bf16.msra.mxu0 %v2025
    %2442 = vmatprep.mubr.bf16.mxu0 %v750
    %2443 = vmatmul.mubr.bf16.gmra.mrb[0].mxu0 %v749
    %v2444 = vpop.f32.mrb[0].mxu0
    %v2445 = vadd.f32 %v2404, %v2444
    %v2446 = vpop.f32.mrb[0].mxu0
    %v2447 = vadd.f32 %v2406, %v2446
    %v2448 = vpop.f32.mrb[0].mxu0
    %v2449 = vpop.f32.mrb[0].mxu0
    %2450 = vdwg.mxu0
    %2451 = vmatprep.subr.bf16.mxu0 %v1780
    %2452 = vmatpush1.bf16.msra.mxu0 %v1779
    %2453 = vmatprep.subr.bf16.mxu0 %v1788
    %2454 = vmatpush1.bf16.msra.mxu0 %v1787
    %2455 = vmatprep.subr.bf16.mxu0 %v1796
    %2456 = vmatpush1.bf16.msra.mxu0 %v1795
    %2457 = vmatprep.subr.bf16.mxu0 %v1804
    %2458 = vmatpush1.bf16.msra.mxu0 %v1803
    %2459 = vmatprep.subr.bf16.mxu0 %v1812
    %2460 = vmatpush1.bf16.msra.mxu0 %v1811
    %2461 = vmatprep.subr.bf16.mxu0 %v1820
    %2462 = vmatpush1.bf16.msra.mxu0 %v1819
    %2463 = vmatprep.subr.bf16.mxu0 %v1828
    %2464 = vmatpush1.bf16.msra.mxu0 %v1827
    %2465 = vmatprep.subr.bf16.mxu0 %v1836
    %2466 = vmatpush1.bf16.msra.mxu0 %v1835
    %2467 = vmatprep.subr.bf16.mxu0 %v1844
    %2468 = vmatpush1.bf16.msra.mxu0 %v1843
    %2469 = vmatprep.subr.bf16.mxu0 %v1852
    %2470 = vmatpush1.bf16.msra.mxu0 %v1851
    %2471 = vmatprep.subr.bf16.mxu0 %v1860
    %2472 = vmatpush1.bf16.msra.mxu0 %v1859
    %2473 = vmatprep.subr.bf16.mxu0 %v1868
    %2474 = vmatpush1.bf16.msra.mxu0 %v1867
    %2475 = vmatprep.subr.bf16.mxu0 %v1876
    %2476 = vmatpush1.bf16.msra.mxu0 %v1875
    %2477 = vmatprep.subr.bf16.mxu0 %v1884
    %2478 = vmatpush1.bf16.msra.mxu0 %v1883
    %2479 = vmatprep.subr.bf16.mxu0 %v1892
    %2480 = vmatpush1.bf16.msra.mxu0 %v1891
    %2481 = vmatprep.subr.bf16.mxu0 %v1900
    %2482 = vmatpush1.bf16.msra.mxu0 %v1899
    %2483 = vmatprep.mubr.bf16.mxu0 %v748
    %2484 = vmatmul.mubr.bf16.gmra.mrb[0].mxu0 %v747
    %v2485 = vpop.f32.mrb[0].mxu0
    %v2486 = vadd.f32 0.0, %v2485
    %v2487 = vpop.f32.mrb[0].mxu0
    %v2488 = vadd.f32 0.0, %v2487
    %v2489 = vpop.f32.mrb[0].mxu0
    %v2490 = vpop.f32.mrb[0].mxu0
    %2491 = vdwg.mxu0
    %2492 = vmatprep.subr.bf16.mxu0 %v1908
    %2493 = vmatpush1.bf16.msra.mxu0 %v1907
    %2494 = vmatprep.subr.bf16.mxu0 %v1916
    %2495 = vmatpush1.bf16.msra.mxu0 %v1915
    %2496 = vmatprep.subr.bf16.mxu0 %v1924
    %2497 = vmatpush1.bf16.msra.mxu0 %v1923
    %2498 = vmatprep.subr.bf16.mxu0 %v1932
    %2499 = vmatpush1.bf16.msra.mxu0 %v1931
    %2500 = vmatprep.subr.bf16.mxu0 %v1940
    %2501 = vmatpush1.bf16.msra.mxu0 %v1939
    %2502 = vmatprep.subr.bf16.mxu0 %v1948
    %2503 = vmatpush1.bf16.msra.mxu0 %v1947
    %2504 = vmatprep.subr.bf16.mxu0 %v1956
    %2505 = vmatpush1.bf16.msra.mxu0 %v1955
    %2506 = vmatprep.subr.bf16.mxu0 %v1964
    %2507 = vmatpush1.bf16.msra.mxu0 %v1963
    %2508 = vmatprep.subr.bf16.mxu0 %v1972
    %2509 = vmatpush1.bf16.msra.mxu0 %v1971
    %2510 = vmatprep.subr.bf16.mxu0 %v1980
    %2511 = vmatpush1.bf16.msra.mxu0 %v1979
    %2512 = vmatprep.subr.bf16.mxu0 %v1988
    %2513 = vmatpush1.bf16.msra.mxu0 %v1987
    %2514 = vmatprep.subr.bf16.mxu0 %v1996
    %2515 = vmatpush1.bf16.msra.mxu0 %v1995
    %2516 = vmatprep.subr.bf16.mxu0 %v2004
    %2517 = vmatpush1.bf16.msra.mxu0 %v2003
    %2518 = vmatprep.subr.bf16.mxu0 %v2012
    %2519 = vmatpush1.bf16.msra.mxu0 %v2011
    %2520 = vmatprep.subr.bf16.mxu0 %v2020
    %2521 = vmatpush1.bf16.msra.mxu0 %v2019
    %2522 = vmatprep.subr.bf16.mxu0 %v2028
    %2523 = vmatpush1.bf16.msra.mxu0 %v2027
    %2524 = vmatprep.mubr.bf16.mxu0 %v750
    %2525 = vmatmul.mubr.bf16.gmra.mrb[0].mxu0 %v749
    %v2526 = vpop.f32.mrb[0].mxu0
    %v2527 = vadd.f32 %v2486, %v2526
    %v2528 = vpop.f32.mrb[0].mxu0
    %v2529 = vadd.f32 %v2488, %v2528
    %v2530 = vpop.f32.mrb[0].mxu0
    %v2531 = vpop.f32.mrb[0].mxu0
    %2532 = vdwg.mxu0
    %2533 = vmatprep.subr.bf16.mxu0 %v1782
    %2534 = vmatpush1.bf16.msra.mxu0 %v1781
    %2535 = vmatprep.subr.bf16.mxu0 %v1790
    %2536 = vmatpush1.bf16.msra.mxu0 %v1789
    %2537 = vmatprep.subr.bf16.mxu0 %v1798
    %2538 = vmatpush1.bf16.msra.mxu0 %v1797
    %2539 = vmatprep.subr.bf16.mxu0 %v1806
    %2540 = vmatpush1.bf16.msra.mxu0 %v1805
    %2541 = vmatprep.subr.bf16.mxu0 %v1814
    %2542 = vmatpush1.bf16.msra.mxu0 %v1813
    %2543 = vmatprep.subr.bf16.mxu0 %v1822
    %2544 = vmatpush1.bf16.msra.mxu0 %v1821
    %2545 = vmatprep.subr.bf16.mxu0 %v1830
    %2546 = vmatpush1.bf16.msra.mxu0 %v1829
    %2547 = vmatprep.subr.bf16.mxu0 %v1838
    %2548 = vmatpush1.bf16.msra.mxu0 %v1837
    %2549 = vmatprep.subr.bf16.mxu0 %v1846
    %2550 = vmatpush1.bf16.msra.mxu0 %v1845
    %2551 = vmatprep.subr.bf16.mxu0 %v1854
    %2552 = vmatpush1.bf16.msra.mxu0 %v1853
    %2553 = vmatprep.subr.bf16.mxu0 %v1862
    %2554 = vmatpush1.bf16.msra.mxu0 %v1861
    %2555 = vmatprep.subr.bf16.mxu0 %v1870
    %2556 = vmatpush1.bf16.msra.mxu0 %v1869
    %2557 = vmatprep.subr.bf16.mxu0 %v1878
    %2558 = vmatpush1.bf16.msra.mxu0 %v1877
    %2559 = vmatprep.subr.bf16.mxu0 %v1886
    %2560 = vmatpush1.bf16.msra.mxu0 %v1885
    %2561 = vmatprep.subr.bf16.mxu0 %v1894
    %2562 = vmatpush1.bf16.msra.mxu0 %v1893
    %2563 = vmatprep.subr.bf16.mxu0 %v1902
    %2564 = vmatpush1.bf16.msra.mxu0 %v1901
    %2565 = vmatprep.mubr.bf16.mxu0 %v748
    %2566 = vmatmul.mubr.bf16.gmra.mrb[0].mxu0 %v747
    %v2567 = vpop.f32.mrb[0].mxu0
    %v2568 = vadd.f32 0.0, %v2567
    %v2569 = vpop.f32.mrb[0].mxu0
    %v2570 = vadd.f32 0.0, %v2569
    %v2571 = vpop.f32.mrb[0].mxu0
    %v2572 = vpop.f32.mrb[0].mxu0
    %2573 = vdwg.mxu0
    %2574 = vmatprep.subr.bf16.mxu0 %v1910
    %2575 = vmatpush1.bf16.msra.mxu0 %v1909
    %2576 = vmatprep.subr.bf16.mxu0 %v1918
    %2577 = vmatpush1.bf16.msra.mxu0 %v1917
    %2578 = vmatprep.subr.bf16.mxu0 %v1926
    %2579 = vmatpush1.bf16.msra.mxu0 %v1925
    %2580 = vmatprep.subr.bf16.mxu0 %v1934
    %2581 = vmatpush1.bf16.msra.mxu0 %v1933
    %2582 = vmatprep.subr.bf16.mxu0 %v1942
    %2583 = vmatpush1.bf16.msra.mxu0 %v1941
    %2584 = vmatprep.subr.bf16.mxu0 %v1950
    %2585 = vmatpush1.bf16.msra.mxu0 %v1949
    %2586 = vmatprep.subr.bf16.mxu0 %v1958
    %2587 = vmatpush1.bf16.msra.mxu0 %v1957
    %2588 = vmatprep.subr.bf16.mxu0 %v1966
    %2589 = vmatpush1.bf16.msra.mxu0 %v1965
    %2590 = vmatprep.subr.bf16.mxu0 %v1974
    %2591 = vmatpush1.bf16.msra.mxu0 %v1973
    %2592 = vmatprep.subr.bf16.mxu0 %v1982
    %2593 = vmatpush1.bf16.msra.mxu0 %v1981
    %2594 = vmatprep.subr.bf16.mxu0 %v1990
    %2595 = vmatpush1.bf16.msra.mxu0 %v1989
    %2596 = vmatprep.subr.bf16.mxu0 %v1998
    %2597 = vmatpush1.bf16.msra.mxu0 %v1997
    %2598 = vmatprep.subr.bf16.mxu0 %v2006
    %2599 = vmatpush1.bf16.msra.mxu0 %v2005
    %2600 = vmatprep.subr.bf16.mxu0 %v2014
    %2601 = vmatpush1.bf16.msra.mxu0 %v2013
    %2602 = vmatprep.subr.bf16.mxu0 %v2022
    %2603 = vmatpush1.bf16.msra.mxu0 %v2021
    %2604 = vmatprep.subr.bf16.mxu0 %v2030
    %2605 = vmatpush1.bf16.msra.mxu0 %v2029
    %2606 = vmatprep.mubr.bf16.mxu0 %v750
    %2607 = vmatmul.mubr.bf16.gmra.mrb[0].mxu0 %v749
    %v2608 = vpop.f32.mrb[0].mxu0
    %v2609 = vadd.f32 %v2568, %v2608
    %v2610 = vpop.f32.mrb[0].mxu0
    %v2611 = vadd.f32 %v2570, %v2610
    %v2612 = vpop.f32.mrb[0].mxu0
    %v2613 = vpop.f32.mrb[0].mxu0
    %2614 = vdwg.mxu0
    %v2615 = vpack.c.bf16 %v2363, %v2363
    %v2616 = vpack.c.bf16 %v2365, %v2365
    %v2617 = vpack.c.bf16 %v2445, %v2445
    %v2618 = vpack.c.bf16 %v2447, %v2447
    %v2619 = vpack.c.bf16 %v2527, %v2527
    %v2620 = vpack.c.bf16 %v2529, %v2529
    %v2621 = vpack.c.bf16 %v2609, %v2609
    %v2622 = vpack.c.bf16 %v2611, %v2611
    %v2623 = vld [vmem:[%s6] sm:$0xff]
    %v2625 = vlaneseq
    %v2626 = vshrl.u32 %v2625, 7
    %v2627 = vsub.s32 0, %v2626
    %v2628 = vrot.slane %v2623, %v2627
    %v2629 = vlaneseq
    %v2630 = vshrl.u32 %v2629, 7
    %v2631 = vsub.s32 1, %v2630
    %v2632 = vrot.slane %v2623, %v2631
    %v2633 = vlaneseq
    %v2634 = vshrl.u32 %v2633, 7
    %v2635 = vsub.s32 2, %v2634
    %v2636 = vrot.slane %v2623, %v2635
    %v2637 = vlaneseq
    %v2638 = vshrl.u32 %v2637, 7
    %v2639 = vsub.s32 3, %v2638
    %v2640 = vrot.slane %v2623, %v2639
    %v2641 = vlaneseq
    %v2642 = vshrl.u32 %v2641, 7
    %v2643 = vsub.s32 4, %v2642
    %v2644 = vrot.slane %v2623, %v2643
    %v2645 = vlaneseq
    %v2646 = vshrl.u32 %v2645, 7
    %v2647 = vsub.s32 5, %v2646
    %v2648 = vrot.slane %v2623, %v2647
    %v2649 = vlaneseq
    %v2650 = vshrl.u32 %v2649, 7
    %v2651 = vsub.s32 6, %v2650
    %v2652 = vrot.slane %v2623, %v2651
    %v2653 = vlaneseq
    %v2654 = vshrl.u32 %v2653, 7
    %v2655 = vsub.s32 7, %v2654
    %v2656 = vrot.slane %v2623, %v2655
    %v2665 = vpack.c.bf16 %v2628, %v2628
    %v2666 = vpack.c.bf16 %v2632, %v2632
    %v2667 = vpack.c.bf16 %v2636, %v2636
    %v2668 = vpack.c.bf16 %v2640, %v2640
    %v2669 = vpack.c.bf16 %v2644, %v2644
    %v2670 = vpack.c.bf16 %v2648, %v2648
    %v2671 = vpack.c.bf16 %v2652, %v2652
    %v2672 = vpack.c.bf16 %v2656, %v2656
    %v2674 = vpack.i.b16 %v2665, %v2665
    %v2676 = vlaneseq
    %v2677 = vshrl.u32 %v2676, 7
    %v2678 = vsub.s32 0, %v2677
    %v2679 = vrot.slane %v2674, %v2678
    %v2681 = vpack.i.b16 %v2666, %v2666
    %v2683 = vlaneseq
    %v2684 = vshrl.u32 %v2683, 7
    %v2685 = vsub.s32 0, %v2684
    %v2686 = vrot.slane %v2681, %v2685
    %v2688 = vpack.i.b16 %v2667, %v2667
    %v2690 = vlaneseq
    %v2691 = vshrl.u32 %v2690, 7
    %v2692 = vsub.s32 0, %v2691
    %v2693 = vrot.slane %v2688, %v2692
    %v2695 = vpack.i.b16 %v2668, %v2668
    %v2697 = vlaneseq
    %v2698 = vshrl.u32 %v2697, 7
    %v2699 = vsub.s32 0, %v2698
    %v2700 = vrot.slane %v2695, %v2699
    %v2702 = vpack.i.b16 %v2669, %v2669
    %v2704 = vlaneseq
    %v2705 = vshrl.u32 %v2704, 7
    %v2706 = vsub.s32 0, %v2705
    %v2707 = vrot.slane %v2702, %v2706
    %v2709 = vpack.i.b16 %v2670, %v2670
    %v2711 = vlaneseq
    %v2712 = vshrl.u32 %v2711, 7
    %v2713 = vsub.s32 0, %v2712
    %v2714 = vrot.slane %v2709, %v2713
    %v2716 = vpack.i.b16 %v2671, %v2671
    %v2718 = vlaneseq
    %v2719 = vshrl.u32 %v2718, 7
    %v2720 = vsub.s32 0, %v2719
    %v2721 = vrot.slane %v2716, %v2720
    %v2723 = vpack.i.b16 %v2672, %v2672
    %v2725 = vlaneseq
    %v2726 = vshrl.u32 %v2725, 7
    %v2727 = vsub.s32 0, %v2726
    %v2728 = vrot.slane %v2723, %v2727
    %v2729 = vadd.bf16 %v2615, %v2679
    %v2730 = vadd.bf16 %v2616, %v2686
    %v2731 = vadd.bf16 %v2617, %v2693
    %v2732 = vadd.bf16 %v2618, %v2700
    %v2733 = vadd.bf16 %v2619, %v2707
    %v2734 = vadd.bf16 %v2620, %v2714
    %v2735 = vadd.bf16 %v2621, %v2721
    %v2736 = vadd.bf16 %v2622, %v2728
    %vm2737 = vcmp.gt.bf16.partialorder %v2729, 0
    %vm2738 = vcmp.gt.bf16.partialorder %v2730, 0
    %vm2739 = vcmp.gt.bf16.partialorder %v2731, 0
    %vm2740 = vcmp.gt.bf16.partialorder %v2732, 0
    %vm2741 = vcmp.gt.bf16.partialorder %v2733, 0
    %vm2742 = vcmp.gt.bf16.partialorder %v2734, 0
    %vm2743 = vcmp.gt.bf16.partialorder %v2735, 0
    %vm2744 = vcmp.gt.bf16.partialorder %v2736, 0
    %v2745 = vmul.bf16 %v2729, 1045249613
    %v2746 = vmul.bf16 %v2730, 1045249613
    %v2747 = vmul.bf16 %v2731, 1045249613
    %v2748 = vmul.bf16 %v2732, 1045249613
    %v2749 = vmul.bf16 %v2733, 1045249613
    %v2750 = vmul.bf16 %v2734, 1045249613
    %v2751 = vmul.bf16 %v2735, 1045249613
    %v2752 = vmul.bf16 %v2736, 1045249613
    %v2753 = vsel %vm2737, %v2729, %v2745
    %v2754 = vsel %vm2738, %v2730, %v2746
    %v2755 = vsel %vm2739, %v2731, %v2747
    %v2756 = vsel %vm2740, %v2732, %v2748
    %v2757 = vsel %vm2741, %v2733, %v2749
    %v2758 = vsel %vm2742, %v2734, %v2750
    %v2759 = vsel %vm2743, %v2735, %v2751
    %v2760 = vsel %vm2744, %v2736, %v2752
    %v2761 = vld [vmem:[%s7] sm:$0xff]
    %v2762 = vld [vmem:[%s7 + $0x8] sm:$0xff]
    %v2763 = vld [vmem:[%s7 + $0x10] sm:$0xff]
    %v2764 = vld [vmem:[%s7 + $0x18] sm:$0xf]
    %v2765 = vld [vmem:[%s7 + $0x1c] sm:$0xff]
    %v2766 = vld [vmem:[%s7 + $0x24] sm:$0xff]
    %v2767 = vld [vmem:[%s7 + $0x2c] sm:$0xff]
    %v2768 = vld [vmem:[%s7 + $0x34] sm:$0xf]
    %v2769 = vld [vmem:[%s7 + $0x38] sm:$0xff]
    %v2770 = vld [vmem:[%s7 + $0x40] sm:$0xff]
    %v2771 = vld [vmem:[%s7 + $0x48] sm:$0xff]
    %v2772 = vld [vmem:[%s7 + $0x50] sm:$0xf]
    %v2773 = vld [vmem:[%s7 + $0x54] sm:$0xff]
    %v2774 = vld [vmem:[%s7 + $0x5c] sm:$0xff]
    %v2775 = vld [vmem:[%s7 + $0x64] sm:$0xff]
    %v2776 = vld [vmem:[%s7 + $0x6c] sm:$0xf]
    %v2777 = vld [vmem:[%s7 + $0x70] sm:$0xff]
    %v2778 = vld [vmem:[%s7 + $0x78] sm:$0xff]
    %v2779 = vld [vmem:[%s7 + $0x80] sm:$0xff]
    %v2780 = vld [vmem:[%s7 + $0x88] sm:$0xf]
    %v2781 = vld [vmem:[%s7 + $0x8c] sm:$0xff]
    %v2782 = vld [vmem:[%s7 + $0x94] sm:$0xff]
    %v2783 = vld [vmem:[%s7 + $0x9c] sm:$0xff]
    %v2784 = vld [vmem:[%s7 + $0xa4] sm:$0xf]
    %v2785 = vld [vmem:[%s7 + $0xa8] sm:$0xff]
    %v2786 = vld [vmem:[%s7 + $0xb0] sm:$0xff]
    %v2787 = vld [vmem:[%s7 + $0xb8] sm:$0xff]
    %v2788 = vld [vmem:[%s7 + $0xc0] sm:$0xf]
    %v2789 = vld [vmem:[%s7 + $0xc4] sm:$0xff]
    %v2790 = vld [vmem:[%s7 + $0xcc] sm:$0xff]
    %v2791 = vld [vmem:[%s7 + $0xd4] sm:$0xff]
    %v2792 = vld [vmem:[%s7 + $0xdc] sm:$0xf]
    %v2793 = vld [vmem:[%s7 + $0xe0] sm:$0xff]
    %v2794 = vld [vmem:[%s7 + $0xe8] sm:$0xff]
    %v2795 = vld [vmem:[%s7 + $0xf0] sm:$0xff]
    %v2796 = vld [vmem:[%s7 + $0xf8] sm:$0xf]
    %v2797 = vld [vmem:[%s7 + $0xfc] sm:$0xff]
    %v2798 = vld [vmem:[%s7 + $0x104] sm:$0xff]
    %v2799 = vld [vmem:[%s7 + $0x10c] sm:$0xff]
    %v2800 = vld [vmem:[%s7 + $0x114] sm:$0xf]
    %v2801 = vld [vmem:[%s7 + $0x118] sm:$0xff]
    %v2802 = vld [vmem:[%s7 + $0x120] sm:$0xff]
    %v2803 = vld [vmem:[%s7 + $0x128] sm:$0xff]
    %v2804 = vld [vmem:[%s7 + $0x130] sm:$0xf]
    %v2805 = vld [vmem:[%s7 + $0x134] sm:$0xff]
    %v2806 = vld [vmem:[%s7 + $0x13c] sm:$0xff]
    %v2807 = vld [vmem:[%s7 + $0x144] sm:$0xff]
    %v2808 = vld [vmem:[%s7 + $0x14c] sm:$0xf]
    %v2809 = vld [vmem:[%s7 + $0x150] sm:$0xff]
    %v2810 = vld [vmem:[%s7 + $0x158] sm:$0xff]
    %v2811 = vld [vmem:[%s7 + $0x160] sm:$0xff]
    %v2812 = vld [vmem:[%s7 + $0x168] sm:$0xf]
    %v2813 = vld [vmem:[%s7 + $0x16c] sm:$0xff]
    %v2814 = vld [vmem:[%s7 + $0x174] sm:$0xff]
    %v2815 = vld [vmem:[%s7 + $0x17c] sm:$0xff]
    %v2816 = vld [vmem:[%s7 + $0x184] sm:$0xf]
    %v2817 = vld [vmem:[%s7 + $0x188] sm:$0xff]
    %v2818 = vld [vmem:[%s7 + $0x190] sm:$0xff]
    %v2819 = vld [vmem:[%s7 + $0x198] sm:$0xff]
    %v2820 = vld [vmem:[%s7 + $0x1a0] sm:$0xf]
    %v2821 = vld [vmem:[%s7 + $0x1a4] sm:$0xff]
    %v2822 = vld [vmem:[%s7 + $0x1ac] sm:$0xff]
    %v2823 = vld [vmem:[%s7 + $0x1b4] sm:$0xff]
    %v2824 = vld [vmem:[%s7 + $0x1bc] sm:$0xf]
    %v2825 = vld [vmem:[%s7 + $0x1c0] sm:$0xff]
    %v2826 = vld [vmem:[%s7 + $0x1c8] sm:$0xff]
    %v2827 = vld [vmem:[%s7 + $0x1d0] sm:$0xff]
    %v2828 = vld [vmem:[%s7 + $0x1d8] sm:$0xf]
    %v2829 = vld [vmem:[%s7 + $0x1dc] sm:$0xff]
    %v2830 = vld [vmem:[%s7 + $0x1e4] sm:$0xff]
    %v2831 = vld [vmem:[%s7 + $0x1ec] sm:$0xff]
    %v2832 = vld [vmem:[%s7 + $0x1f4] sm:$0xf]
    %v2833 = vld [vmem:[%s7 + $0x1f8] sm:$0xff]
    %v2834 = vld [vmem:[%s7 + $0x200] sm:$0xff]
    %v2835 = vld [vmem:[%s7 + $0x208] sm:$0xff]
    %v2836 = vld [vmem:[%s7 + $0x210] sm:$0xf]
    %v2837 = vld [vmem:[%s7 + $0x214] sm:$0xff]
    %v2838 = vld [vmem:[%s7 + $0x21c] sm:$0xff]
    %v2839 = vld [vmem:[%s7 + $0x224] sm:$0xff]
    %v2840 = vld [vmem:[%s7 + $0x22c] sm:$0xf]
    %v2841 = vld [vmem:[%s7 + $0x230] sm:$0xff]
    %v2842 = vld [vmem:[%s7 + $0x238] sm:$0xff]
    %v2843 = vld [vmem:[%s7 + $0x240] sm:$0xff]
    %v2844 = vld [vmem:[%s7 + $0x248] sm:$0xf]
    %v2845 = vld [vmem:[%s7 + $0x24c] sm:$0xff]
    %v2846 = vld [vmem:[%s7 + $0x254] sm:$0xff]
    %v2847 = vld [vmem:[%s7 + $0x25c] sm:$0xff]
    %v2848 = vld [vmem:[%s7 + $0x264] sm:$0xf]
    %v2849 = vld [vmem:[%s7 + $0x268] sm:$0xff]
    %v2850 = vld [vmem:[%s7 + $0x270] sm:$0xff]
    %v2851 = vld [vmem:[%s7 + $0x278] sm:$0xff]
    %v2852 = vld [vmem:[%s7 + $0x280] sm:$0xf]
    %v2853 = vld [vmem:[%s7 + $0x284] sm:$0xff]
    %v2854 = vld [vmem:[%s7 + $0x28c] sm:$0xff]
    %v2855 = vld [vmem:[%s7 + $0x294] sm:$0xff]
    %v2856 = vld [vmem:[%s7 + $0x29c] sm:$0xf]
    %v2857 = vld [vmem:[%s7 + $0x2a0] sm:$0xff]
    %v2858 = vld [vmem:[%s7 + $0x2a8] sm:$0xff]
    %v2859 = vld [vmem:[%s7 + $0x2b0] sm:$0xff]
    %v2860 = vld [vmem:[%s7 + $0x2b8] sm:$0xf]
    %v2861 = vld [vmem:[%s7 + $0x2bc] sm:$0xff]
    %v2862 = vld [vmem:[%s7 + $0x2c4] sm:$0xff]
    %v2863 = vld [vmem:[%s7 + $0x2cc] sm:$0xff]
    %v2864 = vld [vmem:[%s7 + $0x2d4] sm:$0xf]
    %v2865 = vld [vmem:[%s7 + $0x2d8] sm:$0xff]
    %v2866 = vld [vmem:[%s7 + $0x2e0] sm:$0xff]
    %v2867 = vld [vmem:[%s7 + $0x2e8] sm:$0xff]
    %v2868 = vld [vmem:[%s7 + $0x2f0] sm:$0xf]
    %v2869 = vld [vmem:[%s7 + $0x2f4] sm:$0xff]
    %v2870 = vld [vmem:[%s7 + $0x2fc] sm:$0xff]
    %v2871 = vld [vmem:[%s7 + $0x304] sm:$0xff]
    %v2872 = vld [vmem:[%s7 + $0x30c] sm:$0xf]
    %v2873 = vld [vmem:[%s7 + $0x310] sm:$0xff]
    %v2874 = vld [vmem:[%s7 + $0x318] sm:$0xff]
    %v2875 = vld [vmem:[%s7 + $0x320] sm:$0xff]
    %v2876 = vld [vmem:[%s7 + $0x328] sm:$0xf]
    %v2877 = vld [vmem:[%s7 + $0x32c] sm:$0xff]
    %v2878 = vld [vmem:[%s7 + $0x334] sm:$0xff]
    %v2879 = vld [vmem:[%s7 + $0x33c] sm:$0xff]
    %v2880 = vld [vmem:[%s7 + $0x344] sm:$0xf]
    %v2881 = vld [vmem:[%s7 + $0x348] sm:$0xff]
    %v2882 = vld [vmem:[%s7 + $0x350] sm:$0xff]
    %v2883 = vld [vmem:[%s7 + $0x358] sm:$0xff]
    %v2884 = vld [vmem:[%s7 + $0x360] sm:$0xf]
    %v2885 = vld [vmem:[%s7 + $0x364] sm:$0xff]
    %v2886 = vld [vmem:[%s7 + $0x36c] sm:$0xff]
    %v2887 = vld [vmem:[%s7 + $0x374] sm:$0xff]
    %v2888 = vld [vmem:[%s7 + $0x37c] sm:$0xf]
    %v2889 = vld [vmem:[%s7 + $0x380] sm:$0xff]
    %v2890 = vld [vmem:[%s7 + $0x388] sm:$0xff]
    %v2891 = vld [vmem:[%s7 + $0x390] sm:$0xff]
    %v2892 = vld [vmem:[%s7 + $0x398] sm:$0xf]
    %v2893 = vld [vmem:[%s7 + $0x39c] sm:$0xff]
    %v2894 = vld [vmem:[%s7 + $0x3a4] sm:$0xff]
    %v2895 = vld [vmem:[%s7 + $0x3ac] sm:$0xff]
    %v2896 = vld [vmem:[%s7 + $0x3b4] sm:$0xf]
    %v2897 = vld [vmem:[%s7 + $0x3b8] sm:$0xff]
    %v2898 = vld [vmem:[%s7 + $0x3c0] sm:$0xff]
    %v2899 = vld [vmem:[%s7 + $0x3c8] sm:$0xff]
    %v2900 = vld [vmem:[%s7 + $0x3d0] sm:$0xf]
    %v2901 = vld [vmem:[%s7 + $0x3d4] sm:$0xff]
    %v2902 = vld [vmem:[%s7 + $0x3dc] sm:$0xff]
    %v2903 = vld [vmem:[%s7 + $0x3e4] sm:$0xff]
    %v2904 = vld [vmem:[%s7 + $0x3ec] sm:$0xf]
    %v2905 = vld [vmem:[%s7 + $0x3f0] sm:$0xff]
    %v2906 = vld [vmem:[%s7 + $0x3f8] sm:$0xff]
    %v2907 = vld [vmem:[%s7 + $0x400] sm:$0xff]
    %v2908 = vld [vmem:[%s7 + $0x408] sm:$0xf]
    %v2909 = vld [vmem:[%s7 + $0x40c] sm:$0xff]
    %v2910 = vld [vmem:[%s7 + $0x414] sm:$0xff]
    %v2911 = vld [vmem:[%s7 + $0x41c] sm:$0xff]
    %v2912 = vld [vmem:[%s7 + $0x424] sm:$0xf]
    %v2913 = vld [vmem:[%s7 + $0x428] sm:$0xff]
    %v2914 = vld [vmem:[%s7 + $0x430] sm:$0xff]
    %v2915 = vld [vmem:[%s7 + $0x438] sm:$0xff]
    %v2916 = vld [vmem:[%s7 + $0x440] sm:$0xf]
    %v2917 = vld [vmem:[%s7 + $0x444] sm:$0xff]
    %v2918 = vld [vmem:[%s7 + $0x44c] sm:$0xff]
    %v2919 = vld [vmem:[%s7 + $0x454] sm:$0xff]
    %v2920 = vld [vmem:[%s7 + $0x45c] sm:$0xf]
    %v2921 = vld [vmem:[%s7 + $0x460] sm:$0xff]
    %v2922 = vld [vmem:[%s7 + $0x468] sm:$0xff]
    %v2923 = vld [vmem:[%s7 + $0x470] sm:$0xff]
    %v2924 = vld [vmem:[%s7 + $0x478] sm:$0xf]
    %v2925 = vld [vmem:[%s7 + $0x47c] sm:$0xff]
    %v2926 = vld [vmem:[%s7 + $0x484] sm:$0xff]
    %v2927 = vld [vmem:[%s7 + $0x48c] sm:$0xff]
    %v2928 = vld [vmem:[%s7 + $0x494] sm:$0xf]
    %v2929 = vld [vmem:[%s7 + $0x498] sm:$0xff]
    %v2930 = vld [vmem:[%s7 + $0x4a0] sm:$0xff]
    %v2931 = vld [vmem:[%s7 + $0x4a8] sm:$0xff]
    %v2932 = vld [vmem:[%s7 + $0x4b0] sm:$0xf]
    %v2933 = vld [vmem:[%s7 + $0x4b4] sm:$0xff]
    %v2934 = vld [vmem:[%s7 + $0x4bc] sm:$0xff]
    %v2935 = vld [vmem:[%s7 + $0x4c4] sm:$0xff]
    %v2936 = vld [vmem:[%s7 + $0x4cc] sm:$0xf]
    %v2937 = vld [vmem:[%s7 + $0x4d0] sm:$0xff]
    %v2938 = vld [vmem:[%s7 + $0x4d8] sm:$0xff]
    %v2939 = vld [vmem:[%s7 + $0x4e0] sm:$0xff]
    %v2940 = vld [vmem:[%s7 + $0x4e8] sm:$0xf]
    %v2941 = vld [vmem:[%s7 + $0x4ec] sm:$0xff]
    %v2942 = vld [vmem:[%s7 + $0x4f4] sm:$0xff]
    %v2943 = vld [vmem:[%s7 + $0x4fc] sm:$0xff]
    %v2944 = vld [vmem:[%s7 + $0x504] sm:$0xf]
    %v2945 = vld [vmem:[%s7 + $0x508] sm:$0xff]
    %v2946 = vld [vmem:[%s7 + $0x510] sm:$0xff]
    %v2947 = vld [vmem:[%s7 + $0x518] sm:$0xff]
    %v2948 = vld [vmem:[%s7 + $0x520] sm:$0xf]
    %v2949 = vld [vmem:[%s7 + $0x524] sm:$0xff]
    %v2950 = vld [vmem:[%s7 + $0x52c] sm:$0xff]
    %v2951 = vld [vmem:[%s7 + $0x534] sm:$0xff]
    %v2952 = vld [vmem:[%s7 + $0x53c] sm:$0xf]
    %v2953 = vld [vmem:[%s7 + $0x540] sm:$0xff]
    %v2954 = vld [vmem:[%s7 + $0x548] sm:$0xff]
    %v2955 = vld [vmem:[%s7 + $0x550] sm:$0xff]
    %v2956 = vld [vmem:[%s7 + $0x558] sm:$0xf]
    %v2957 = vld [vmem:[%s7 + $0x55c] sm:$0xff]
    %v2958 = vld [vmem:[%s7 + $0x564] sm:$0xff]
    %v2959 = vld [vmem:[%s7 + $0x56c] sm:$0xff]
    %v2960 = vld [vmem:[%s7 + $0x574] sm:$0xf]
    %v2961 = vld [vmem:[%s7 + $0x578] sm:$0xff]
    %v2962 = vld [vmem:[%s7 + $0x580] sm:$0xff]
    %v2963 = vld [vmem:[%s7 + $0x588] sm:$0xff]
    %v2964 = vld [vmem:[%s7 + $0x590] sm:$0xf]
    %v2965 = vld [vmem:[%s7 + $0x594] sm:$0xff]
    %v2966 = vld [vmem:[%s7 + $0x59c] sm:$0xff]
    %v2967 = vld [vmem:[%s7 + $0x5a4] sm:$0xff]
    %v2968 = vld [vmem:[%s7 + $0x5ac] sm:$0xf]
    %v2969 = vld [vmem:[%s7 + $0x5b0] sm:$0xff]
    %v2970 = vld [vmem:[%s7 + $0x5b8] sm:$0xff]
    %v2971 = vld [vmem:[%s7 + $0x5c0] sm:$0xff]
    %v2972 = vld [vmem:[%s7 + $0x5c8] sm:$0xf]
    %v2973 = vld [vmem:[%s7 + $0x5cc] sm:$0xff]
    %v2974 = vld [vmem:[%s7 + $0x5d4] sm:$0xff]
    %v2975 = vld [vmem:[%s7 + $0x5dc] sm:$0xff]
    %v2976 = vld [vmem:[%s7 + $0x5e4] sm:$0xf]
    %v2977 = vld [vmem:[%s7 + $0x5e8] sm:$0xff]
    %v2978 = vld [vmem:[%s7 + $0x5f0] sm:$0xff]
    %v2979 = vld [vmem:[%s7 + $0x5f8] sm:$0xff]
    %v2980 = vld [vmem:[%s7 + $0x600] sm:$0xf]
    %v2981 = vld [vmem:[%s7 + $0x604] sm:$0xff]
    %v2982 = vld [vmem:[%s7 + $0x60c] sm:$0xff]
    %v2983 = vld [vmem:[%s7 + $0x614] sm:$0xff]
    %v2984 = vld [vmem:[%s7 + $0x61c] sm:$0xf]
    %v2985 = vld [vmem:[%s7 + $0x620] sm:$0xff]
    %v2986 = vld [vmem:[%s7 + $0x628] sm:$0xff]
    %v2987 = vld [vmem:[%s7 + $0x630] sm:$0xff]
    %v2988 = vld [vmem:[%s7 + $0x638] sm:$0xf]
    %v2989 = vld [vmem:[%s7 + $0x63c] sm:$0xff]
    %v2990 = vld [vmem:[%s7 + $0x644] sm:$0xff]
    %v2991 = vld [vmem:[%s7 + $0x64c] sm:$0xff]
    %v2992 = vld [vmem:[%s7 + $0x654] sm:$0xf]
    %v2993 = vld [vmem:[%s7 + $0x658] sm:$0xff]
    %v2994 = vld [vmem:[%s7 + $0x660] sm:$0xff]
    %v2995 = vld [vmem:[%s7 + $0x668] sm:$0xff]
    %v2996 = vld [vmem:[%s7 + $0x670] sm:$0xf]
    %v2997 = vld [vmem:[%s7 + $0x674] sm:$0xff]
    %v2998 = vld [vmem:[%s7 + $0x67c] sm:$0xff]
    %v2999 = vld [vmem:[%s7 + $0x684] sm:$0xff]
    %v3000 = vld [vmem:[%s7 + $0x68c] sm:$0xf]
    %v3001 = vld [vmem:[%s7 + $0x690] sm:$0xff]
    %v3002 = vld [vmem:[%s7 + $0x698] sm:$0xff]
    %v3003 = vld [vmem:[%s7 + $0x6a0] sm:$0xff]
    %v3004 = vld [vmem:[%s7 + $0x6a8] sm:$0xf]
    %v3005 = vld [vmem:[%s7 + $0x6ac] sm:$0xff]
    %v3006 = vld [vmem:[%s7 + $0x6b4] sm:$0xff]
    %v3007 = vld [vmem:[%s7 + $0x6bc] sm:$0xff]
    %v3008 = vld [vmem:[%s7 + $0x6c4] sm:$0xf]
    %v3009 = vld [vmem:[%s7 + $0x6c8] sm:$0xff]
    %v3010 = vld [vmem:[%s7 + $0x6d0] sm:$0xff]
    %v3011 = vld [vmem:[%s7 + $0x6d8] sm:$0xff]
    %v3012 = vld [vmem:[%s7 + $0x6e0] sm:$0xf]
    %v3013 = vld [vmem:[%s7 + $0x6e4] sm:$0xff]
    %v3014 = vld [vmem:[%s7 + $0x6ec] sm:$0xff]
    %v3015 = vld [vmem:[%s7 + $0x6f4] sm:$0xff]
    %v3016 = vld [vmem:[%s7 + $0x6fc] sm:$0xf]
    %v3017 = vld [vmem:[%s7 + $0x700] sm:$0xff]
    %v3018 = vld [vmem:[%s7 + $0x708] sm:$0xff]
    %v3019 = vld [vmem:[%s7 + $0x710] sm:$0xff]
    %v3020 = vld [vmem:[%s7 + $0x718] sm:$0xf]
    %v3021 = vld [vmem:[%s7 + $0x71c] sm:$0xff]
    %v3022 = vld [vmem:[%s7 + $0x724] sm:$0xff]
    %v3023 = vld [vmem:[%s7 + $0x72c] sm:$0xff]
    %v3024 = vld [vmem:[%s7 + $0x734] sm:$0xf]
    %v3025 = vld [vmem:[%s7 + $0x738] sm:$0xff]
    %v3026 = vld [vmem:[%s7 + $0x740] sm:$0xff]
    %v3027 = vld [vmem:[%s7 + $0x748] sm:$0xff]
    %v3028 = vld [vmem:[%s7 + $0x750] sm:$0xf]
    %v3029 = vld [vmem:[%s7 + $0x754] sm:$0xff]
    %v3030 = vld [vmem:[%s7 + $0x75c] sm:$0xff]
    %v3031 = vld [vmem:[%s7 + $0x764] sm:$0xff]
    %v3032 = vld [vmem:[%s7 + $0x76c] sm:$0xf]
    %v3033 = vld [vmem:[%s7 + $0x770] sm:$0xff]
    %v3034 = vld [vmem:[%s7 + $0x778] sm:$0xff]
    %v3035 = vld [vmem:[%s7 + $0x780] sm:$0xff]
    %v3036 = vld [vmem:[%s7 + $0x788] sm:$0xf]
    %v3037 = vld [vmem:[%s7 + $0x78c] sm:$0xff]
    %v3038 = vld [vmem:[%s7 + $0x794] sm:$0xff]
    %v3039 = vld [vmem:[%s7 + $0x79c] sm:$0xff]
    %v3040 = vld [vmem:[%s7 + $0x7a4] sm:$0xf]
    %v3041 = vld [vmem:[%s7 + $0x7a8] sm:$0xff]
    %v3042 = vld [vmem:[%s7 + $0x7b0] sm:$0xff]
    %v3043 = vld [vmem:[%s7 + $0x7b8] sm:$0xff]
    %v3044 = vld [vmem:[%s7 + $0x7c0] sm:$0xf]
    %v3045 = vld [vmem:[%s7 + $0x7c4] sm:$0xff]
    %v3046 = vld [vmem:[%s7 + $0x7cc] sm:$0xff]
    %v3047 = vld [vmem:[%s7 + $0x7d4] sm:$0xff]
    %v3048 = vld [vmem:[%s7 + $0x7dc] sm:$0xf]
    %v3049 = vld [vmem:[%s7 + $0x7e0] sm:$0xff]
    %v3050 = vld [vmem:[%s7 + $0x7e8] sm:$0xff]
    %v3051 = vld [vmem:[%s7 + $0x7f0] sm:$0xff]
    %v3052 = vld [vmem:[%s7 + $0x7f8] sm:$0xf]
    %v3053 = vld [vmem:[%s7 + $0x7fc] sm:$0xff]
    %v3054 = vld [vmem:[%s7 + $0x804] sm:$0xff]
    %v3055 = vld [vmem:[%s7 + $0x80c] sm:$0xff]
    %v3056 = vld [vmem:[%s7 + $0x814] sm:$0xf]
    %v3057 = vld [vmem:[%s7 + $0x818] sm:$0xff]
    %v3058 = vld [vmem:[%s7 + $0x820] sm:$0xff]
    %v3059 = vld [vmem:[%s7 + $0x828] sm:$0xff]
    %v3060 = vld [vmem:[%s7 + $0x830] sm:$0xf]
    %v3061 = vld [vmem:[%s7 + $0x834] sm:$0xff]
    %v3062 = vld [vmem:[%s7 + $0x83c] sm:$0xff]
    %v3063 = vld [vmem:[%s7 + $0x844] sm:$0xff]
    %v3064 = vld [vmem:[%s7 + $0x84c] sm:$0xf]
    %v3065 = vld [vmem:[%s7 + $0x850] sm:$0xff]
    %v3066 = vld [vmem:[%s7 + $0x858] sm:$0xff]
    %v3067 = vld [vmem:[%s7 + $0x860] sm:$0xff]
    %v3068 = vld [vmem:[%s7 + $0x868] sm:$0xf]
    %v3069 = vld [vmem:[%s7 + $0x86c] sm:$0xff]
    %v3070 = vld [vmem:[%s7 + $0x874] sm:$0xff]
    %v3071 = vld [vmem:[%s7 + $0x87c] sm:$0xff]
    %v3072 = vld [vmem:[%s7 + $0x884] sm:$0xf]
    %v3073 = vld [vmem:[%s7 + $0x888] sm:$0xff]
    %v3074 = vld [vmem:[%s7 + $0x890] sm:$0xff]
    %v3075 = vld [vmem:[%s7 + $0x898] sm:$0xff]
    %v3076 = vld [vmem:[%s7 + $0x8a0] sm:$0xf]
    %v3077 = vld [vmem:[%s7 + $0x8a4] sm:$0xff]
    %v3078 = vld [vmem:[%s7 + $0x8ac] sm:$0xff]
    %v3079 = vld [vmem:[%s7 + $0x8b4] sm:$0xff]
    %v3080 = vld [vmem:[%s7 + $0x8bc] sm:$0xf]
    %v3081 = vld [vmem:[%s7 + $0x8c0] sm:$0xff]
    %v3082 = vld [vmem:[%s7 + $0x8c8] sm:$0xff]
    %v3083 = vld [vmem:[%s7 + $0x8d0] sm:$0xff]
    %v3084 = vld [vmem:[%s7 + $0x8d8] sm:$0xf]
    %v3085 = vld [vmem:[%s7 + $0x8dc] sm:$0xff]
    %v3086 = vld [vmem:[%s7 + $0x8e4] sm:$0xff]
    %v3087 = vld [vmem:[%s7 + $0x8ec] sm:$0xff]
    %v3088 = vld [vmem:[%s7 + $0x8f4] sm:$0xf]
    %v3089 = vld [vmem:[%s7 + $0x8f8] sm:$0xff]
    %v3090 = vld [vmem:[%s7 + $0x900] sm:$0xff]
    %v3091 = vld [vmem:[%s7 + $0x908] sm:$0xff]
    %v3092 = vld [vmem:[%s7 + $0x910] sm:$0xf]
    %v3093 = vld [vmem:[%s7 + $0x914] sm:$0xff]
    %v3094 = vld [vmem:[%s7 + $0x91c] sm:$0xff]
    %v3095 = vld [vmem:[%s7 + $0x924] sm:$0xff]
    %v3096 = vld [vmem:[%s7 + $0x92c] sm:$0xf]
    %v3097 = vld [vmem:[%s7 + $0x930] sm:$0xff]
    %v3098 = vld [vmem:[%s7 + $0x938] sm:$0xff]
    %v3099 = vld [vmem:[%s7 + $0x940] sm:$0xff]
    %v3100 = vld [vmem:[%s7 + $0x948] sm:$0xf]
    %v3101 = vld [vmem:[%s7 + $0x94c] sm:$0xff]
    %v3102 = vld [vmem:[%s7 + $0x954] sm:$0xff]
    %v3103 = vld [vmem:[%s7 + $0x95c] sm:$0xff]
    %v3104 = vld [vmem:[%s7 + $0x964] sm:$0xf]
    %v3105 = vld [vmem:[%s7 + $0x968] sm:$0xff]
    %v3106 = vld [vmem:[%s7 + $0x970] sm:$0xff]
    %v3107 = vld [vmem:[%s7 + $0x978] sm:$0xff]
    %v3108 = vld [vmem:[%s7 + $0x980] sm:$0xf]
    %v3109 = vld [vmem:[%s7 + $0x984] sm:$0xff]
    %v3110 = vld [vmem:[%s7 + $0x98c] sm:$0xff]
    %v3111 = vld [vmem:[%s7 + $0x994] sm:$0xff]
    %v3112 = vld [vmem:[%s7 + $0x99c] sm:$0xf]
    %v3113 = vld [vmem:[%s7 + $0x9a0] sm:$0xff]
    %v3114 = vld [vmem:[%s7 + $0x9a8] sm:$0xff]
    %v3115 = vld [vmem:[%s7 + $0x9b0] sm:$0xff]
    %v3116 = vld [vmem:[%s7 + $0x9b8] sm:$0xf]
    %v3117 = vld [vmem:[%s7 + $0x9bc] sm:$0xff]
    %v3118 = vld [vmem:[%s7 + $0x9c4] sm:$0xff]
    %v3119 = vld [vmem:[%s7 + $0x9cc] sm:$0xff]
    %v3120 = vld [vmem:[%s7 + $0x9d4] sm:$0xf]
    %v3121 = vld [vmem:[%s7 + $0x9d8] sm:$0xff]
    %v3122 = vld [vmem:[%s7 + $0x9e0] sm:$0xff]
    %v3123 = vld [vmem:[%s7 + $0x9e8] sm:$0xff]
    %v3124 = vld [vmem:[%s7 + $0x9f0] sm:$0xf]
    %v3125 = vld [vmem:[%s7 + $0x9f4] sm:$0xff]
    %v3126 = vld [vmem:[%s7 + $0x9fc] sm:$0xff]
    %v3127 = vld [vmem:[%s7 + $0xa04] sm:$0xff]
    %v3128 = vld [vmem:[%s7 + $0xa0c] sm:$0xf]
    %v3129 = vld [vmem:[%s7 + $0xa10] sm:$0xff]
    %v3130 = vld [vmem:[%s7 + $0xa18] sm:$0xff]
    %v3131 = vld [vmem:[%s7 + $0xa20] sm:$0xff]
    %v3132 = vld [vmem:[%s7 + $0xa28] sm:$0xf]
    %v3133 = vld [vmem:[%s7 + $0xa2c] sm:$0xff]
    %v3134 = vld [vmem:[%s7 + $0xa34] sm:$0xff]
    %v3135 = vld [vmem:[%s7 + $0xa3c] sm:$0xff]
    %v3136 = vld [vmem:[%s7 + $0xa44] sm:$0xf]
    %v3137 = vld [vmem:[%s7 + $0xa48] sm:$0xff]
    %v3138 = vld [vmem:[%s7 + $0xa50] sm:$0xff]
    %v3139 = vld [vmem:[%s7 + $0xa58] sm:$0xff]
    %v3140 = vld [vmem:[%s7 + $0xa60] sm:$0xf]
    %v3141 = vld [vmem:[%s7 + $0xa64] sm:$0xff]
    %v3142 = vld [vmem:[%s7 + $0xa6c] sm:$0xff]
    %v3143 = vld [vmem:[%s7 + $0xa74] sm:$0xff]
    %v3144 = vld [vmem:[%s7 + $0xa7c] sm:$0xf]
    %v3145 = vld [vmem:[%s7 + $0xa80] sm:$0xff]
    %v3146 = vld [vmem:[%s7 + $0xa88] sm:$0xff]
    %v3147 = vld [vmem:[%s7 + $0xa90] sm:$0xff]
    %v3148 = vld [vmem:[%s7 + $0xa98] sm:$0xf]
    %v3149 = vld [vmem:[%s7 + $0xa9c] sm:$0xff]
    %v3150 = vld [vmem:[%s7 + $0xaa4] sm:$0xff]
    %v3151 = vld [vmem:[%s7 + $0xaac] sm:$0xff]
    %v3152 = vld [vmem:[%s7 + $0xab4] sm:$0xf]
    %v3153 = vld [vmem:[%s7 + $0xab8] sm:$0xff]
    %v3154 = vld [vmem:[%s7 + $0xac0] sm:$0xff]
    %v3155 = vld [vmem:[%s7 + $0xac8] sm:$0xff]
    %v3156 = vld [vmem:[%s7 + $0xad0] sm:$0xf]
    %v3157 = vld [vmem:[%s7 + $0xad4] sm:$0xff]
    %v3158 = vld [vmem:[%s7 + $0xadc] sm:$0xff]
    %v3159 = vld [vmem:[%s7 + $0xae4] sm:$0xff]
    %v3160 = vld [vmem:[%s7 + $0xaec] sm:$0xf]
    %v3161 = vld [vmem:[%s7 + $0xaf0] sm:$0xff]
    %v3162 = vld [vmem:[%s7 + $0xaf8] sm:$0xff]
    %v3163 = vld [vmem:[%s7 + $0xb00] sm:$0xff]
    %v3164 = vld [vmem:[%s7 + $0xb08] sm:$0xf]
    %v3165 = vld [vmem:[%s7 + $0xb0c] sm:$0xff]
    %v3166 = vld [vmem:[%s7 + $0xb14] sm:$0xff]
    %v3167 = vld [vmem:[%s7 + $0xb1c] sm:$0xff]
    %v3168 = vld [vmem:[%s7 + $0xb24] sm:$0xf]
    %v3169 = vld [vmem:[%s7 + $0xb28] sm:$0xff]
    %v3170 = vld [vmem:[%s7 + $0xb30] sm:$0xff]
    %v3171 = vld [vmem:[%s7 + $0xb38] sm:$0xff]
    %v3172 = vld [vmem:[%s7 + $0xb40] sm:$0xf]
    %v3173 = vld [vmem:[%s7 + $0xb44] sm:$0xff]
    %v3174 = vld [vmem:[%s7 + $0xb4c] sm:$0xff]
    %v3175 = vld [vmem:[%s7 + $0xb54] sm:$0xff]
    %v3176 = vld [vmem:[%s7 + $0xb5c] sm:$0xf]
    %v3177 = vld [vmem:[%s7 + $0xb60] sm:$0xff]
    %v3178 = vld [vmem:[%s7 + $0xb68] sm:$0xff]
    %v3179 = vld [vmem:[%s7 + $0xb70] sm:$0xff]
    %v3180 = vld [vmem:[%s7 + $0xb78] sm:$0xf]
    %v3181 = vld [vmem:[%s7 + $0xb7c] sm:$0xff]
    %v3182 = vld [vmem:[%s7 + $0xb84] sm:$0xff]
    %v3183 = vld [vmem:[%s7 + $0xb8c] sm:$0xff]
    %v3184 = vld [vmem:[%s7 + $0xb94] sm:$0xf]
    %v3185 = vld [vmem:[%s7 + $0xb98] sm:$0xff]
    %v3186 = vld [vmem:[%s7 + $0xba0] sm:$0xff]
    %v3187 = vld [vmem:[%s7 + $0xba8] sm:$0xff]
    %v3188 = vld [vmem:[%s7 + $0xbb0] sm:$0xf]
    %v3189 = vld [vmem:[%s7 + $0xbb4] sm:$0xff]
    %v3190 = vld [vmem:[%s7 + $0xbbc] sm:$0xff]
    %v3191 = vld [vmem:[%s7 + $0xbc4] sm:$0xff]
    %v3192 = vld [vmem:[%s7 + $0xbcc] sm:$0xf]
    %v3193 = vld [vmem:[%s7 + $0xbd0] sm:$0xff]
    %v3194 = vld [vmem:[%s7 + $0xbd8] sm:$0xff]
    %v3195 = vld [vmem:[%s7 + $0xbe0] sm:$0xff]
    %v3196 = vld [vmem:[%s7 + $0xbe8] sm:$0xf]
    %v3197 = vld [vmem:[%s7 + $0xbec] sm:$0xff]
    %v3198 = vld [vmem:[%s7 + $0xbf4] sm:$0xff]
    %v3199 = vld [vmem:[%s7 + $0xbfc] sm:$0xff]
    %v3200 = vld [vmem:[%s7 + $0xc04] sm:$0xf]
    %v3201 = vld [vmem:[%s7 + $0xc08] sm:$0xff]
    %v3202 = vld [vmem:[%s7 + $0xc10] sm:$0xff]
    %v3203 = vld [vmem:[%s7 + $0xc18] sm:$0xff]
    %v3204 = vld [vmem:[%s7 + $0xc20] sm:$0xf]
    %v3205 = vld [vmem:[%s7 + $0xc24] sm:$0xff]
    %v3206 = vld [vmem:[%s7 + $0xc2c] sm:$0xff]
    %v3207 = vld [vmem:[%s7 + $0xc34] sm:$0xff]
    %v3208 = vld [vmem:[%s7 + $0xc3c] sm:$0xf]
    %v3209 = vld [vmem:[%s7 + $0xc40] sm:$0xff]
    %v3210 = vld [vmem:[%s7 + $0xc48] sm:$0xff]
    %v3211 = vld [vmem:[%s7 + $0xc50] sm:$0xff]
    %v3212 = vld [vmem:[%s7 + $0xc58] sm:$0xf]
    %v3213 = vld [vmem:[%s7 + $0xc5c] sm:$0xff]
    %v3214 = vld [vmem:[%s7 + $0xc64] sm:$0xff]
    %v3215 = vld [vmem:[%s7 + $0xc6c] sm:$0xff]
    %v3216 = vld [vmem:[%s7 + $0xc74] sm:$0xf]
    %v3217 = vld [vmem:[%s7 + $0xc78] sm:$0xff]
    %v3218 = vld [vmem:[%s7 + $0xc80] sm:$0xff]
    %v3219 = vld [vmem:[%s7 + $0xc88] sm:$0xff]
    %v3220 = vld [vmem:[%s7 + $0xc90] sm:$0xf]
    %v3221 = vld [vmem:[%s7 + $0xc94] sm:$0xff]
    %v3222 = vld [vmem:[%s7 + $0xc9c] sm:$0xff]
    %v3223 = vld [vmem:[%s7 + $0xca4] sm:$0xff]
    %v3224 = vld [vmem:[%s7 + $0xcac] sm:$0xf]
    %v3225 = vld [vmem:[%s7 + $0xcb0] sm:$0xff]
    %v3226 = vld [vmem:[%s7 + $0xcb8] sm:$0xff]
    %v3227 = vld [vmem:[%s7 + $0xcc0] sm:$0xff]
    %v3228 = vld [vmem:[%s7 + $0xcc8] sm:$0xf]
    %v3229 = vld [vmem:[%s7 + $0xccc] sm:$0xff]
    %v3230 = vld [vmem:[%s7 + $0xcd4] sm:$0xff]
    %v3231 = vld [vmem:[%s7 + $0xcdc] sm:$0xff]
    %v3232 = vld [vmem:[%s7 + $0xce4] sm:$0xf]
    %v3233 = vld [vmem:[%s7 + $0xce8] sm:$0xff]
    %v3234 = vld [vmem:[%s7 + $0xcf0] sm:$0xff]
    %v3235 = vld [vmem:[%s7 + $0xcf8] sm:$0xff]
    %v3236 = vld [vmem:[%s7 + $0xd00] sm:$0xf]
    %v3237 = vld [vmem:[%s7 + $0xd04] sm:$0xff]
    %v3238 = vld [vmem:[%s7 + $0xd0c] sm:$0xff]
    %v3239 = vld [vmem:[%s7 + $0xd14] sm:$0xff]
    %v3240 = vld [vmem:[%s7 + $0xd1c] sm:$0xf]
    %v3241 = vld [vmem:[%s7 + $0xd20] sm:$0xff]
    %v3242 = vld [vmem:[%s7 + $0xd28] sm:$0xff]
    %v3243 = vld [vmem:[%s7 + $0xd30] sm:$0xff]
    %v3244 = vld [vmem:[%s7 + $0xd38] sm:$0xf]
    %v3245 = vld [vmem:[%s7 + $0xd3c] sm:$0xff]
    %v3246 = vld [vmem:[%s7 + $0xd44] sm:$0xff]
    %v3247 = vld [vmem:[%s7 + $0xd4c] sm:$0xff]
    %v3248 = vld [vmem:[%s7 + $0xd54] sm:$0xf]
    %v3249 = vld [vmem:[%s7 + $0xd58] sm:$0xff]
    %v3250 = vld [vmem:[%s7 + $0xd60] sm:$0xff]
    %v3251 = vld [vmem:[%s7 + $0xd68] sm:$0xff]
    %v3252 = vld [vmem:[%s7 + $0xd70] sm:$0xf]
    %v3253 = vld [vmem:[%s7 + $0xd74] sm:$0xff]
    %v3254 = vld [vmem:[%s7 + $0xd7c] sm:$0xff]
    %v3255 = vld [vmem:[%s7 + $0xd84] sm:$0xff]
    %v3256 = vld [vmem:[%s7 + $0xd8c] sm:$0xf]
    %v3257 = vld [vmem:[%s7 + $0xd90] sm:$0xff]
    %v3258 = vld [vmem:[%s7 + $0xd98] sm:$0xff]
    %v3259 = vld [vmem:[%s7 + $0xda0] sm:$0xff]
    %v3260 = vld [vmem:[%s7 + $0xda8] sm:$0xf]
    %v3261 = vld [vmem:[%s7 + $0xdac] sm:$0xff]
    %v3262 = vld [vmem:[%s7 + $0xdb4] sm:$0xff]
    %v3263 = vld [vmem:[%s7 + $0xdbc] sm:$0xff]
    %v3264 = vld [vmem:[%s7 + $0xdc4] sm:$0xf]
    %v3265 = vld [vmem:[%s7 + $0xdc8] sm:$0xff]
    %v3266 = vld [vmem:[%s7 + $0xdd0] sm:$0xff]
    %v3267 = vld [vmem:[%s7 + $0xdd8] sm:$0xff]
    %v3268 = vld [vmem:[%s7 + $0xde0] sm:$0xf]
    %v3269 = vld [vmem:[%s7 + $0xde4] sm:$0xff]
    %v3270 = vld [vmem:[%s7 + $0xdec] sm:$0xff]
    %v3271 = vld [vmem:[%s7 + $0xdf4] sm:$0xff]
    %v3272 = vld [vmem:[%s7 + $0xdfc] sm:$0xf]
    %v3273 = vld [vmem:[%s8] sm:$0x7f]
    %v3275 = vlaneseq
    %v3276 = vshrl.u32 %v3275, 7
    %v3277 = vsub.s32 0, %v3276
    %v3278 = vrot.slane %v3273, %v3277
    %v3279 = vlaneseq
    %v3280 = vshrl.u32 %v3279, 7
    %v3281 = vsub.s32 1, %v3280
    %v3282 = vrot.slane %v3273, %v3281
    %v3283 = vlaneseq
    %v3284 = vshrl.u32 %v3283, 7
    %v3285 = vsub.s32 2, %v3284
    %v3286 = vrot.slane %v3273, %v3285
    %v3287 = vlaneseq
    %v3288 = vshrl.u32 %v3287, 7
    %v3289 = vsub.s32 3, %v3288
    %v3290 = vrot.slane %v3273, %v3289
    %v3291 = vlaneseq
    %v3292 = vshrl.u32 %v3291, 7
    %v3293 = vsub.s32 4, %v3292
    %v3294 = vrot.slane %v3273, %v3293
    %v3295 = vlaneseq
    %v3296 = vshrl.u32 %v3295, 7
    %v3297 = vsub.s32 5, %v3296
    %v3298 = vrot.slane %v3273, %v3297
    %v3299 = vlaneseq
    %v3300 = vshrl.u32 %v3299, 7
    %v3301 = vsub.s32 6, %v3300
    %v3302 = vrot.slane %v3273, %v3301
    %v3822 = vunpack.c.l.b16 %v2761
    %v3823 = vunpack.c.h.b16 %v2761
    %v3824 = vunpack.c.l.b16 %v2762
    %v3825 = vunpack.c.h.b16 %v2762
    %v3826 = vunpack.c.l.b16 %v2763
    %v3827 = vunpack.c.h.b16 %v2763
    %v3828 = vunpack.c.l.b16 %v2764
    %v3829 = vunpack.c.l.b16 %v2765
    %v3830 = vunpack.c.h.b16 %v2765
    %v3831 = vunpack.c.l.b16 %v2766
    %v3832 = vunpack.c.h.b16 %v2766
    %v3833 = vunpack.c.l.b16 %v2767
    %v3834 = vunpack.c.h.b16 %v2767
    %v3835 = vunpack.c.l.b16 %v2768
    %v3836 = vunpack.c.l.b16 %v2769
    %v3837 = vunpack.c.h.b16 %v2769
    %v3838 = vunpack.c.l.b16 %v2770
    %v3839 = vunpack.c.h.b16 %v2770
    %v3840 = vunpack.c.l.b16 %v2771
    %v3841 = vunpack.c.h.b16 %v2771
    %v3842 = vunpack.c.l.b16 %v2772
    %v3843 = vunpack.c.l.b16 %v2773
    %v3844 = vunpack.c.h.b16 %v2773
    %v3845 = vunpack.c.l.b16 %v2774
    %v3846 = vunpack.c.h.b16 %v2774
    %v3847 = vunpack.c.l.b16 %v2775
    %v3848 = vunpack.c.h.b16 %v2775
    %v3849 = vunpack.c.l.b16 %v2776
    %v3850 = vunpack.c.l.b16 %v2777
    %v3851 = vunpack.c.h.b16 %v2777
    %v3852 = vunpack.c.l.b16 %v2778
    %v3853 = vunpack.c.h.b16 %v2778
    %v3854 = vunpack.c.l.b16 %v2779
    %v3855 = vunpack.c.h.b16 %v2779
    %v3856 = vunpack.c.l.b16 %v2780
    %v3857 = vunpack.c.l.b16 %v2781
    %v3858 = vunpack.c.h.b16 %v2781
    %v3859 = vunpack.c.l.b16 %v2782
    %v3860 = vunpack.c.h.b16 %v2782
    %v3861 = vunpack.c.l.b16 %v2783
    %v3862 = vunpack.c.h.b16 %v2783
    %v3863 = vunpack.c.l.b16 %v2784
    %v3864 = vunpack.c.l.b16 %v2785
    %v3865 = vunpack.c.h.b16 %v2785
    %v3866 = vunpack.c.l.b16 %v2786
    %v3867 = vunpack.c.h.b16 %v2786
    %v3868 = vunpack.c.l.b16 %v2787
    %v3869 = vunpack.c.h.b16 %v2787
    %v3870 = vunpack.c.l.b16 %v2788
    %v3871 = vunpack.c.l.b16 %v2789
    %v3872 = vunpack.c.h.b16 %v2789
    %v3873 = vunpack.c.l.b16 %v2790
    %v3874 = vunpack.c.h.b16 %v2790
    %v3875 = vunpack.c.l.b16 %v2791
    %v3876 = vunpack.c.h.b16 %v2791
    %v3877 = vunpack.c.l.b16 %v2792
    %v3878 = vunpack.c.l.b16 %v2793
    %v3879 = vunpack.c.h.b16 %v2793
    %v3880 = vunpack.c.l.b16 %v2794
    %v3881 = vunpack.c.h.b16 %v2794
    %v3882 = vunpack.c.l.b16 %v2795
    %v3883 = vunpack.c.h.b16 %v2795
    %v3884 = vunpack.c.l.b16 %v2796
    %v3885 = vunpack.c.l.b16 %v2797
    %v3886 = vunpack.c.h.b16 %v2797
    %v3887 = vunpack.c.l.b16 %v2798
    %v3888 = vunpack.c.h.b16 %v2798
    %v3889 = vunpack.c.l.b16 %v2799
    %v3890 = vunpack.c.h.b16 %v2799
    %v3891 = vunpack.c.l.b16 %v2800
    %v3892 = vunpack.c.l.b16 %v2801
    %v3893 = vunpack.c.h.b16 %v2801
    %v3894 = vunpack.c.l.b16 %v2802
    %v3895 = vunpack.c.h.b16 %v2802
    %v3896 = vunpack.c.l.b16 %v2803
    %v3897 = vunpack.c.h.b16 %v2803
    %v3898 = vunpack.c.l.b16 %v2804
    %v3899 = vunpack.c.l.b16 %v2805
    %v3900 = vunpack.c.h.b16 %v2805
    %v3901 = vunpack.c.l.b16 %v2806
    %v3902 = vunpack.c.h.b16 %v2806
    %v3903 = vunpack.c.l.b16 %v2807
    %v3904 = vunpack.c.h.b16 %v2807
    %v3905 = vunpack.c.l.b16 %v2808
    %v3906 = vunpack.c.l.b16 %v2809
    %v3907 = vunpack.c.h.b16 %v2809
    %v3908 = vunpack.c.l.b16 %v2810
    %v3909 = vunpack.c.h.b16 %v2810
    %v3910 = vunpack.c.l.b16 %v2811
    %v3911 = vunpack.c.h.b16 %v2811
    %v3912 = vunpack.c.l.b16 %v2812
    %v3913 = vunpack.c.l.b16 %v2813
    %v3914 = vunpack.c.h.b16 %v2813
    %v3915 = vunpack.c.l.b16 %v2814
    %v3916 = vunpack.c.h.b16 %v2814
    %v3917 = vunpack.c.l.b16 %v2815
    %v3918 = vunpack.c.h.b16 %v2815
    %v3919 = vunpack.c.l.b16 %v2816
    %v3920 = vunpack.c.l.b16 %v2817
    %v3921 = vunpack.c.h.b16 %v2817
    %v3922 = vunpack.c.l.b16 %v2818
    %v3923 = vunpack.c.h.b16 %v2818
    %v3924 = vunpack.c.l.b16 %v2819
    %v3925 = vunpack.c.h.b16 %v2819
    %v3926 = vunpack.c.l.b16 %v2820
    %v3927 = vunpack.c.l.b16 %v2821
    %v3928 = vunpack.c.h.b16 %v2821
    %v3929 = vunpack.c.l.b16 %v2822
    %v3930 = vunpack.c.h.b16 %v2822
    %v3931 = vunpack.c.l.b16 %v2823
    %v3932 = vunpack.c.h.b16 %v2823
    %v3933 = vunpack.c.l.b16 %v2824
    %v3934 = vunpack.c.l.b16 %v2825
    %v3935 = vunpack.c.h.b16 %v2825
    %v3936 = vunpack.c.l.b16 %v2826
    %v3937 = vunpack.c.h.b16 %v2826
    %v3938 = vunpack.c.l.b16 %v2827
    %v3939 = vunpack.c.h.b16 %v2827
    %v3940 = vunpack.c.l.b16 %v2828
    %v3941 = vunpack.c.l.b16 %v2829
    %v3942 = vunpack.c.h.b16 %v2829
    %v3943 = vunpack.c.l.b16 %v2830
    %v3944 = vunpack.c.h.b16 %v2830
    %v3945 = vunpack.c.l.b16 %v2831
    %v3946 = vunpack.c.h.b16 %v2831
    %v3947 = vunpack.c.l.b16 %v2832
    %v3948 = vunpack.c.l.b16 %v2833
    %v3949 = vunpack.c.h.b16 %v2833
    %v3950 = vunpack.c.l.b16 %v2834
    %v3951 = vunpack.c.h.b16 %v2834
    %v3952 = vunpack.c.l.b16 %v2835
    %v3953 = vunpack.c.h.b16 %v2835
    %v3954 = vunpack.c.l.b16 %v2836
    %v3955 = vunpack.c.l.b16 %v2837
    %v3956 = vunpack.c.h.b16 %v2837
    %v3957 = vunpack.c.l.b16 %v2838
    %v3958 = vunpack.c.h.b16 %v2838
    %v3959 = vunpack.c.l.b16 %v2839
    %v3960 = vunpack.c.h.b16 %v2839
    %v3961 = vunpack.c.l.b16 %v2840
    %v3962 = vunpack.c.l.b16 %v2841
    %v3963 = vunpack.c.h.b16 %v2841
    %v3964 = vunpack.c.l.b16 %v2842
    %v3965 = vunpack.c.h.b16 %v2842
    %v3966 = vunpack.c.l.b16 %v2843
    %v3967 = vunpack.c.h.b16 %v2843
    %v3968 = vunpack.c.l.b16 %v2844
    %v3969 = vunpack.c.l.b16 %v2845
    %v3970 = vunpack.c.h.b16 %v2845
    %v3971 = vunpack.c.l.b16 %v2846
    %v3972 = vunpack.c.h.b16 %v2846
    %v3973 = vunpack.c.l.b16 %v2847
    %v3974 = vunpack.c.h.b16 %v2847
    %v3975 = vunpack.c.l.b16 %v2848
    %v3976 = vunpack.c.l.b16 %v2849
    %v3977 = vunpack.c.h.b16 %v2849
    %v3978 = vunpack.c.l.b16 %v2850
    %v3979 = vunpack.c.h.b16 %v2850
    %v3980 = vunpack.c.l.b16 %v2851
    %v3981 = vunpack.c.h.b16 %v2851
    %v3982 = vunpack.c.l.b16 %v2852
    %v3983 = vunpack.c.l.b16 %v2853
    %v3984 = vunpack.c.h.b16 %v2853
    %v3985 = vunpack.c.l.b16 %v2854
    %v3986 = vunpack.c.h.b16 %v2854
    %v3987 = vunpack.c.l.b16 %v2855
    %v3988 = vunpack.c.h.b16 %v2855
    %v3989 = vunpack.c.l.b16 %v2856
    %v3990 = vunpack.c.l.b16 %v2857
    %v3991 = vunpack.c.h.b16 %v2857
    %v3992 = vunpack.c.l.b16 %v2858
    %v3993 = vunpack.c.h.b16 %v2858
    %v3994 = vunpack.c.l.b16 %v2859
    %v3995 = vunpack.c.h.b16 %v2859
    %v3996 = vunpack.c.l.b16 %v2860
    %v3997 = vunpack.c.l.b16 %v2861
    %v3998 = vunpack.c.h.b16 %v2861
    %v3999 = vunpack.c.l.b16 %v2862
    %v4000 = vunpack.c.h.b16 %v2862
    %v4001 = vunpack.c.l.b16 %v2863
    %v4002 = vunpack.c.h.b16 %v2863
    %v4003 = vunpack.c.l.b16 %v2864
    %v4004 = vunpack.c.l.b16 %v2865
    %v4005 = vunpack.c.h.b16 %v2865
    %v4006 = vunpack.c.l.b16 %v2866
    %v4007 = vunpack.c.h.b16 %v2866
    %v4008 = vunpack.c.l.b16 %v2867
    %v4009 = vunpack.c.h.b16 %v2867
    %v4010 = vunpack.c.l.b16 %v2868
    %v4011 = vunpack.c.l.b16 %v2869
    %v4012 = vunpack.c.h.b16 %v2869
    %v4013 = vunpack.c.l.b16 %v2870
    %v4014 = vunpack.c.h.b16 %v2870
    %v4015 = vunpack.c.l.b16 %v2871
    %v4016 = vunpack.c.h.b16 %v2871
    %v4017 = vunpack.c.l.b16 %v2872
    %v4018 = vunpack.c.l.b16 %v2873
    %v4019 = vunpack.c.h.b16 %v2873
    %v4020 = vunpack.c.l.b16 %v2874
    %v4021 = vunpack.c.h.b16 %v2874
    %v4022 = vunpack.c.l.b16 %v2875
    %v4023 = vunpack.c.h.b16 %v2875
    %v4024 = vunpack.c.l.b16 %v2876
    %v4025 = vunpack.c.l.b16 %v2877
    %v4026 = vunpack.c.h.b16 %v2877
    %v4027 = vunpack.c.l.b16 %v2878
    %v4028 = vunpack.c.h.b16 %v2878
    %v4029 = vunpack.c.l.b16 %v2879
    %v4030 = vunpack.c.h.b16 %v2879
    %v4031 = vunpack.c.l.b16 %v2880
    %v4032 = vunpack.c.l.b16 %v2881
    %v4033 = vunpack.c.h.b16 %v2881
    %v4034 = vunpack.c.l.b16 %v2882
    %v4035 = vunpack.c.h.b16 %v2882
    %v4036 = vunpack.c.l.b16 %v2883
    %v4037 = vunpack.c.h.b16 %v2883
    %v4038 = vunpack.c.l.b16 %v2884
    %v4039 = vunpack.c.l.b16 %v2885
    %v4040 = vunpack.c.h.b16 %v2885
    %v4041 = vunpack.c.l.b16 %v2886
    %v4042 = vunpack.c.h.b16 %v2886
    %v4043 = vunpack.c.l.b16 %v2887
    %v4044 = vunpack.c.h.b16 %v2887
    %v4045 = vunpack.c.l.b16 %v2888
    %v4046 = vunpack.c.l.b16 %v2889
    %v4047 = vunpack.c.h.b16 %v2889
    %v4048 = vunpack.c.l.b16 %v2890
    %v4049 = vunpack.c.h.b16 %v2890
    %v4050 = vunpack.c.l.b16 %v2891
    %v4051 = vunpack.c.h.b16 %v2891
    %v4052 = vunpack.c.l.b16 %v2892
    %v4053 = vunpack.c.l.b16 %v2893
    %v4054 = vunpack.c.h.b16 %v2893
    %v4055 = vunpack.c.l.b16 %v2894
    %v4056 = vunpack.c.h.b16 %v2894
    %v4057 = vunpack.c.l.b16 %v2895
    %v4058 = vunpack.c.h.b16 %v2895
    %v4059 = vunpack.c.l.b16 %v2896
    %v4060 = vunpack.c.l.b16 %v2897
    %v4061 = vunpack.c.h.b16 %v2897
    %v4062 = vunpack.c.l.b16 %v2898
    %v4063 = vunpack.c.h.b16 %v2898
    %v4064 = vunpack.c.l.b16 %v2899
    %v4065 = vunpack.c.h.b16 %v2899
    %v4066 = vunpack.c.l.b16 %v2900
    %v4067 = vunpack.c.l.b16 %v2901
    %v4068 = vunpack.c.h.b16 %v2901
    %v4069 = vunpack.c.l.b16 %v2902
    %v4070 = vunpack.c.h.b16 %v2902
    %v4071 = vunpack.c.l.b16 %v2903
    %v4072 = vunpack.c.h.b16 %v2903
    %v4073 = vunpack.c.l.b16 %v2904
    %v4074 = vunpack.c.l.b16 %v2905
    %v4075 = vunpack.c.h.b16 %v2905
    %v4076 = vunpack.c.l.b16 %v2906
    %v4077 = vunpack.c.h.b16 %v2906
    %v4078 = vunpack.c.l.b16 %v2907
    %v4079 = vunpack.c.h.b16 %v2907
    %v4080 = vunpack.c.l.b16 %v2908
    %v4081 = vunpack.c.l.b16 %v2909
    %v4082 = vunpack.c.h.b16 %v2909
    %v4083 = vunpack.c.l.b16 %v2910
    %v4084 = vunpack.c.h.b16 %v2910
    %v4085 = vunpack.c.l.b16 %v2911
    %v4086 = vunpack.c.h.b16 %v2911
    %v4087 = vunpack.c.l.b16 %v2912
    %v4088 = vunpack.c.l.b16 %v2913
    %v4089 = vunpack.c.h.b16 %v2913
    %v4090 = vunpack.c.l.b16 %v2914
    %v4091 = vunpack.c.h.b16 %v2914
    %v4092 = vunpack.c.l.b16 %v2915
    %v4093 = vunpack.c.h.b16 %v2915
    %v4094 = vunpack.c.l.b16 %v2916
    %v4095 = vunpack.c.l.b16 %v2917
    %v4096 = vunpack.c.h.b16 %v2917
    %v4097 = vunpack.c.l.b16 %v2918
    %v4098 = vunpack.c.h.b16 %v2918
    %v4099 = vunpack.c.l.b16 %v2919
    %v4100 = vunpack.c.h.b16 %v2919
    %v4101 = vunpack.c.l.b16 %v2920
    %v4102 = vunpack.c.l.b16 %v2921
    %v4103 = vunpack.c.h.b16 %v2921
    %v4104 = vunpack.c.l.b16 %v2922
    %v4105 = vunpack.c.h.b16 %v2922
    %v4106 = vunpack.c.l.b16 %v2923
    %v4107 = vunpack.c.h.b16 %v2923
    %v4108 = vunpack.c.l.b16 %v2924
    %v4109 = vunpack.c.l.b16 %v2925
    %v4110 = vunpack.c.h.b16 %v2925
    %v4111 = vunpack.c.l.b16 %v2926
    %v4112 = vunpack.c.h.b16 %v2926
    %v4113 = vunpack.c.l.b16 %v2927
    %v4114 = vunpack.c.h.b16 %v2927
    %v4115 = vunpack.c.l.b16 %v2928
    %v4116 = vunpack.c.l.b16 %v2929
    %v4117 = vunpack.c.h.b16 %v2929
    %v4118 = vunpack.c.l.b16 %v2930
    %v4119 = vunpack.c.h.b16 %v2930
    %v4120 = vunpack.c.l.b16 %v2931
    %v4121 = vunpack.c.h.b16 %v2931
    %v4122 = vunpack.c.l.b16 %v2932
    %v4123 = vunpack.c.l.b16 %v2933
    %v4124 = vunpack.c.h.b16 %v2933
    %v4125 = vunpack.c.l.b16 %v2934
    %v4126 = vunpack.c.h.b16 %v2934
    %v4127 = vunpack.c.l.b16 %v2935
    %v4128 = vunpack.c.h.b16 %v2935
    %v4129 = vunpack.c.l.b16 %v2936
    %v4130 = vunpack.c.l.b16 %v2937
    %v4131 = vunpack.c.h.b16 %v2937
    %v4132 = vunpack.c.l.b16 %v2938
    %v4133 = vunpack.c.h.b16 %v2938
    %v4134 = vunpack.c.l.b16 %v2939
    %v4135 = vunpack.c.h.b16 %v2939
    %v4136 = vunpack.c.l.b16 %v2940
    %v4137 = vunpack.c.l.b16 %v2941
    %v4138 = vunpack.c.h.b16 %v2941
    %v4139 = vunpack.c.l.b16 %v2942
    %v4140 = vunpack.c.h.b16 %v2942
    %v4141 = vunpack.c.l.b16 %v2943
    %v4142 = vunpack.c.h.b16 %v2943
    %v4143 = vunpack.c.l.b16 %v2944
    %v4144 = vunpack.c.l.b16 %v2945
    %v4145 = vunpack.c.h.b16 %v2945
    %v4146 = vunpack.c.l.b16 %v2946
    %v4147 = vunpack.c.h.b16 %v2946
    %v4148 = vunpack.c.l.b16 %v2947
    %v4149 = vunpack.c.h.b16 %v2947
    %v4150 = vunpack.c.l.b16 %v2948
    %v4151 = vunpack.c.l.b16 %v2949
    %v4152 = vunpack.c.h.b16 %v2949
    %v4153 = vunpack.c.l.b16 %v2950
    %v4154 = vunpack.c.h.b16 %v2950
    %v4155 = vunpack.c.l.b16 %v2951
    %v4156 = vunpack.c.h.b16 %v2951
    %v4157 = vunpack.c.l.b16 %v2952
    %v4158 = vunpack.c.l.b16 %v2953
    %v4159 = vunpack.c.h.b16 %v2953
    %v4160 = vunpack.c.l.b16 %v2954
    %v4161 = vunpack.c.h.b16 %v2954
    %v4162 = vunpack.c.l.b16 %v2955
    %v4163 = vunpack.c.h.b16 %v2955
    %v4164 = vunpack.c.l.b16 %v2956
    %v4165 = vunpack.c.l.b16 %v2957
    %v4166 = vunpack.c.h.b16 %v2957
    %v4167 = vunpack.c.l.b16 %v2958
    %v4168 = vunpack.c.h.b16 %v2958
    %v4169 = vunpack.c.l.b16 %v2959
    %v4170 = vunpack.c.h.b16 %v2959
    %v4171 = vunpack.c.l.b16 %v2960
    %v4172 = vunpack.c.l.b16 %v2961
    %v4173 = vunpack.c.h.b16 %v2961
    %v4174 = vunpack.c.l.b16 %v2962
    %v4175 = vunpack.c.h.b16 %v2962
    %v4176 = vunpack.c.l.b16 %v2963
    %v4177 = vunpack.c.h.b16 %v2963
    %v4178 = vunpack.c.l.b16 %v2964
    %v4179 = vunpack.c.l.b16 %v2965
    %v4180 = vunpack.c.h.b16 %v2965
    %v4181 = vunpack.c.l.b16 %v2966
    %v4182 = vunpack.c.h.b16 %v2966
    %v4183 = vunpack.c.l.b16 %v2967
    %v4184 = vunpack.c.h.b16 %v2967
    %v4185 = vunpack.c.l.b16 %v2968
    %v4186 = vunpack.c.l.b16 %v2969
    %v4187 = vunpack.c.h.b16 %v2969
    %v4188 = vunpack.c.l.b16 %v2970
    %v4189 = vunpack.c.h.b16 %v2970
    %v4190 = vunpack.c.l.b16 %v2971
    %v4191 = vunpack.c.h.b16 %v2971
    %v4192 = vunpack.c.l.b16 %v2972
    %v4193 = vunpack.c.l.b16 %v2973
    %v4194 = vunpack.c.h.b16 %v2973
    %v4195 = vunpack.c.l.b16 %v2974
    %v4196 = vunpack.c.h.b16 %v2974
    %v4197 = vunpack.c.l.b16 %v2975
    %v4198 = vunpack.c.h.b16 %v2975
    %v4199 = vunpack.c.l.b16 %v2976
    %v4200 = vunpack.c.l.b16 %v2977
    %v4201 = vunpack.c.h.b16 %v2977
    %v4202 = vunpack.c.l.b16 %v2978
    %v4203 = vunpack.c.h.b16 %v2978
    %v4204 = vunpack.c.l.b16 %v2979
    %v4205 = vunpack.c.h.b16 %v2979
    %v4206 = vunpack.c.l.b16 %v2980
    %v4207 = vunpack.c.l.b16 %v2981
    %v4208 = vunpack.c.h.b16 %v2981
    %v4209 = vunpack.c.l.b16 %v2982
    %v4210 = vunpack.c.h.b16 %v2982
    %v4211 = vunpack.c.l.b16 %v2983
    %v4212 = vunpack.c.h.b16 %v2983
    %v4213 = vunpack.c.l.b16 %v2984
    %v4214 = vunpack.c.l.b16 %v2985
    %v4215 = vunpack.c.h.b16 %v2985
    %v4216 = vunpack.c.l.b16 %v2986
    %v4217 = vunpack.c.h.b16 %v2986
    %v4218 = vunpack.c.l.b16 %v2987
    %v4219 = vunpack.c.h.b16 %v2987
    %v4220 = vunpack.c.l.b16 %v2988
    %v4221 = vunpack.c.l.b16 %v2989
    %v4222 = vunpack.c.h.b16 %v2989
    %v4223 = vunpack.c.l.b16 %v2990
    %v4224 = vunpack.c.h.b16 %v2990
    %v4225 = vunpack.c.l.b16 %v2991
    %v4226 = vunpack.c.h.b16 %v2991
    %v4227 = vunpack.c.l.b16 %v2992
    %v4228 = vunpack.c.l.b16 %v2993
    %v4229 = vunpack.c.h.b16 %v2993
    %v4230 = vunpack.c.l.b16 %v2994
    %v4231 = vunpack.c.h.b16 %v2994
    %v4232 = vunpack.c.l.b16 %v2995
    %v4233 = vunpack.c.h.b16 %v2995
    %v4234 = vunpack.c.l.b16 %v2996
    %v4235 = vunpack.c.l.b16 %v2997
    %v4236 = vunpack.c.h.b16 %v2997
    %v4237 = vunpack.c.l.b16 %v2998
    %v4238 = vunpack.c.h.b16 %v2998
    %v4239 = vunpack.c.l.b16 %v2999
    %v4240 = vunpack.c.h.b16 %v2999
    %v4241 = vunpack.c.l.b16 %v3000
    %v4242 = vunpack.c.l.b16 %v3001
    %v4243 = vunpack.c.h.b16 %v3001
    %v4244 = vunpack.c.l.b16 %v3002
    %v4245 = vunpack.c.h.b16 %v3002
    %v4246 = vunpack.c.l.b16 %v3003
    %v4247 = vunpack.c.h.b16 %v3003
    %v4248 = vunpack.c.l.b16 %v3004
    %v4249 = vunpack.c.l.b16 %v3005
    %v4250 = vunpack.c.h.b16 %v3005
    %v4251 = vunpack.c.l.b16 %v3006
    %v4252 = vunpack.c.h.b16 %v3006
    %v4253 = vunpack.c.l.b16 %v3007
    %v4254 = vunpack.c.h.b16 %v3007
    %v4255 = vunpack.c.l.b16 %v3008
    %v4256 = vunpack.c.l.b16 %v3009
    %v4257 = vunpack.c.h.b16 %v3009
    %v4258 = vunpack.c.l.b16 %v3010
    %v4259 = vunpack.c.h.b16 %v3010
    %v4260 = vunpack.c.l.b16 %v3011
    %v4261 = vunpack.c.h.b16 %v3011
    %v4262 = vunpack.c.l.b16 %v3012
    %v4263 = vunpack.c.l.b16 %v3013
    %v4264 = vunpack.c.h.b16 %v3013
    %v4265 = vunpack.c.l.b16 %v3014
    %v4266 = vunpack.c.h.b16 %v3014
    %v4267 = vunpack.c.l.b16 %v3015
    %v4268 = vunpack.c.h.b16 %v3015
    %v4269 = vunpack.c.l.b16 %v3016
    %v4270 = vunpack.c.l.b16 %v3017
    %v4271 = vunpack.c.h.b16 %v3017
    %v4272 = vunpack.c.l.b16 %v3018
    %v4273 = vunpack.c.h.b16 %v3018
    %v4274 = vunpack.c.l.b16 %v3019
    %v4275 = vunpack.c.h.b16 %v3019
    %v4276 = vunpack.c.l.b16 %v3020
    %v4277 = vunpack.c.l.b16 %v3021
    %v4278 = vunpack.c.h.b16 %v3021
    %v4279 = vunpack.c.l.b16 %v3022
    %v4280 = vunpack.c.h.b16 %v3022
    %v4281 = vunpack.c.l.b16 %v3023
    %v4282 = vunpack.c.h.b16 %v3023
    %v4283 = vunpack.c.l.b16 %v3024
    %v4284 = vunpack.c.l.b16 %v3025
    %v4285 = vunpack.c.h.b16 %v3025
    %v4286 = vunpack.c.l.b16 %v3026
    %v4287 = vunpack.c.h.b16 %v3026
    %v4288 = vunpack.c.l.b16 %v3027
    %v4289 = vunpack.c.h.b16 %v3027
    %v4290 = vunpack.c.l.b16 %v3028
    %v4291 = vunpack.c.l.b16 %v3029
    %v4292 = vunpack.c.h.b16 %v3029
    %v4293 = vunpack.c.l.b16 %v3030
    %v4294 = vunpack.c.h.b16 %v3030
    %v4295 = vunpack.c.l.b16 %v3031
    %v4296 = vunpack.c.h.b16 %v3031
    %v4297 = vunpack.c.l.b16 %v3032
    %v4298 = vunpack.c.l.b16 %v3033
    %v4299 = vunpack.c.h.b16 %v3033
    %v4300 = vunpack.c.l.b16 %v3034
    %v4301 = vunpack.c.h.b16 %v3034
    %v4302 = vunpack.c.l.b16 %v3035
    %v4303 = vunpack.c.h.b16 %v3035
    %v4304 = vunpack.c.l.b16 %v3036
    %v4305 = vunpack.c.l.b16 %v3037
    %v4306 = vunpack.c.h.b16 %v3037
    %v4307 = vunpack.c.l.b16 %v3038
    %v4308 = vunpack.c.h.b16 %v3038
    %v4309 = vunpack.c.l.b16 %v3039
    %v4310 = vunpack.c.h.b16 %v3039
    %v4311 = vunpack.c.l.b16 %v3040
    %v4312 = vunpack.c.l.b16 %v3041
    %v4313 = vunpack.c.h.b16 %v3041
    %v4314 = vunpack.c.l.b16 %v3042
    %v4315 = vunpack.c.h.b16 %v3042
    %v4316 = vunpack.c.l.b16 %v3043
    %v4317 = vunpack.c.h.b16 %v3043
    %v4318 = vunpack.c.l.b16 %v3044
    %v4319 = vunpack.c.l.b16 %v3045
    %v4320 = vunpack.c.h.b16 %v3045
    %v4321 = vunpack.c.l.b16 %v3046
    %v4322 = vunpack.c.h.b16 %v3046
    %v4323 = vunpack.c.l.b16 %v3047
    %v4324 = vunpack.c.h.b16 %v3047
    %v4325 = vunpack.c.l.b16 %v3048
    %v4326 = vunpack.c.l.b16 %v3049
    %v4327 = vunpack.c.h.b16 %v3049
    %v4328 = vunpack.c.l.b16 %v3050
    %v4329 = vunpack.c.h.b16 %v3050
    %v4330 = vunpack.c.l.b16 %v3051
    %v4331 = vunpack.c.h.b16 %v3051
    %v4332 = vunpack.c.l.b16 %v3052
    %v4333 = vunpack.c.l.b16 %v3053
    %v4334 = vunpack.c.h.b16 %v3053
    %v4335 = vunpack.c.l.b16 %v3054
    %v4336 = vunpack.c.h.b16 %v3054
    %v4337 = vunpack.c.l.b16 %v3055
    %v4338 = vunpack.c.h.b16 %v3055
    %v4339 = vunpack.c.l.b16 %v3056
    %v4340 = vunpack.c.l.b16 %v3057
    %v4341 = vunpack.c.h.b16 %v3057
    %v4342 = vunpack.c.l.b16 %v3058
    %v4343 = vunpack.c.h.b16 %v3058
    %v4344 = vunpack.c.l.b16 %v3059
    %v4345 = vunpack.c.h.b16 %v3059
    %v4346 = vunpack.c.l.b16 %v3060
    %v4347 = vunpack.c.l.b16 %v3061
    %v4348 = vunpack.c.h.b16 %v3061
    %v4349 = vunpack.c.l.b16 %v3062
    %v4350 = vunpack.c.h.b16 %v3062
    %v4351 = vunpack.c.l.b16 %v3063
    %v4352 = vunpack.c.h.b16 %v3063
    %v4353 = vunpack.c.l.b16 %v3064
    %v4354 = vunpack.c.l.b16 %v3065
    %v4355 = vunpack.c.h.b16 %v3065
    %v4356 = vunpack.c.l.b16 %v3066
    %v4357 = vunpack.c.h.b16 %v3066
    %v4358 = vunpack.c.l.b16 %v3067
    %v4359 = vunpack.c.h.b16 %v3067
    %v4360 = vunpack.c.l.b16 %v3068
    %v4361 = vunpack.c.l.b16 %v3069
    %v4362 = vunpack.c.h.b16 %v3069
    %v4363 = vunpack.c.l.b16 %v3070
    %v4364 = vunpack.c.h.b16 %v3070
    %v4365 = vunpack.c.l.b16 %v3071
    %v4366 = vunpack.c.h.b16 %v3071
    %v4367 = vunpack.c.l.b16 %v3072
    %v4368 = vunpack.c.l.b16 %v3073
    %v4369 = vunpack.c.h.b16 %v3073
    %v4370 = vunpack.c.l.b16 %v3074
    %v4371 = vunpack.c.h.b16 %v3074
    %v4372 = vunpack.c.l.b16 %v3075
    %v4373 = vunpack.c.h.b16 %v3075
    %v4374 = vunpack.c.l.b16 %v3076
    %v4375 = vunpack.c.l.b16 %v3077
    %v4376 = vunpack.c.h.b16 %v3077
    %v4377 = vunpack.c.l.b16 %v3078
    %v4378 = vunpack.c.h.b16 %v3078
    %v4379 = vunpack.c.l.b16 %v3079
    %v4380 = vunpack.c.h.b16 %v3079
    %v4381 = vunpack.c.l.b16 %v3080
    %v4382 = vunpack.c.l.b16 %v3081
    %v4383 = vunpack.c.h.b16 %v3081
    %v4384 = vunpack.c.l.b16 %v3082
    %v4385 = vunpack.c.h.b16 %v3082
    %v4386 = vunpack.c.l.b16 %v3083
    %v4387 = vunpack.c.h.b16 %v3083
    %v4388 = vunpack.c.l.b16 %v3084
    %v4389 = vunpack.c.l.b16 %v3085
    %v4390 = vunpack.c.h.b16 %v3085
    %v4391 = vunpack.c.l.b16 %v3086
    %v4392 = vunpack.c.h.b16 %v3086
    %v4393 = vunpack.c.l.b16 %v3087
    %v4394 = vunpack.c.h.b16 %v3087
    %v4395 = vunpack.c.l.b16 %v3088
    %v4396 = vunpack.c.l.b16 %v3089
    %v4397 = vunpack.c.h.b16 %v3089
    %v4398 = vunpack.c.l.b16 %v3090
    %v4399 = vunpack.c.h.b16 %v3090
    %v4400 = vunpack.c.l.b16 %v3091
    %v4401 = vunpack.c.h.b16 %v3091
    %v4402 = vunpack.c.l.b16 %v3092
    %v4403 = vunpack.c.l.b16 %v3093
    %v4404 = vunpack.c.h.b16 %v3093
    %v4405 = vunpack.c.l.b16 %v3094
    %v4406 = vunpack.c.h.b16 %v3094
    %v4407 = vunpack.c.l.b16 %v3095
    %v4408 = vunpack.c.h.b16 %v3095
    %v4409 = vunpack.c.l.b16 %v3096
    %v4410 = vunpack.c.l.b16 %v3097
    %v4411 = vunpack.c.h.b16 %v3097
    %v4412 = vunpack.c.l.b16 %v3098
    %v4413 = vunpack.c.h.b16 %v3098
    %v4414 = vunpack.c.l.b16 %v3099
    %v4415 = vunpack.c.h.b16 %v3099
    %v4416 = vunpack.c.l.b16 %v3100
    %v4417 = vunpack.c.l.b16 %v3101
    %v4418 = vunpack.c.h.b16 %v3101
    %v4419 = vunpack.c.l.b16 %v3102
    %v4420 = vunpack.c.h.b16 %v3102
    %v4421 = vunpack.c.l.b16 %v3103
    %v4422 = vunpack.c.h.b16 %v3103
    %v4423 = vunpack.c.l.b16 %v3104
    %v4424 = vunpack.c.l.b16 %v3105
    %v4425 = vunpack.c.h.b16 %v3105
    %v4426 = vunpack.c.l.b16 %v3106
    %v4427 = vunpack.c.h.b16 %v3106
    %v4428 = vunpack.c.l.b16 %v3107
    %v4429 = vunpack.c.h.b16 %v3107
    %v4430 = vunpack.c.l.b16 %v3108
    %v4431 = vunpack.c.l.b16 %v3109
    %v4432 = vunpack.c.h.b16 %v3109
    %v4433 = vunpack.c.l.b16 %v3110
    %v4434 = vunpack.c.h.b16 %v3110
    %v4435 = vunpack.c.l.b16 %v3111
    %v4436 = vunpack.c.h.b16 %v3111
    %v4437 = vunpack.c.l.b16 %v3112
    %v4438 = vunpack.c.l.b16 %v3113
    %v4439 = vunpack.c.h.b16 %v3113
    %v4440 = vunpack.c.l.b16 %v3114
    %v4441 = vunpack.c.h.b16 %v3114
    %v4442 = vunpack.c.l.b16 %v3115
    %v4443 = vunpack.c.h.b16 %v3115
    %v4444 = vunpack.c.l.b16 %v3116
    %v4445 = vunpack.c.l.b16 %v3117
    %v4446 = vunpack.c.h.b16 %v3117
    %v4447 = vunpack.c.l.b16 %v3118
    %v4448 = vunpack.c.h.b16 %v3118
    %v4449 = vunpack.c.l.b16 %v3119
    %v4450 = vunpack.c.h.b16 %v3119
    %v4451 = vunpack.c.l.b16 %v3120
    %v4452 = vunpack.c.l.b16 %v3121
    %v4453 = vunpack.c.h.b16 %v3121
    %v4454 = vunpack.c.l.b16 %v3122
    %v4455 = vunpack.c.h.b16 %v3122
    %v4456 = vunpack.c.l.b16 %v3123
    %v4457 = vunpack.c.h.b16 %v3123
    %v4458 = vunpack.c.l.b16 %v3124
    %v4459 = vunpack.c.l.b16 %v3125
    %v4460 = vunpack.c.h.b16 %v3125
    %v4461 = vunpack.c.l.b16 %v3126
    %v4462 = vunpack.c.h.b16 %v3126
    %v4463 = vunpack.c.l.b16 %v3127
    %v4464 = vunpack.c.h.b16 %v3127
    %v4465 = vunpack.c.l.b16 %v3128
    %v4466 = vunpack.c.l.b16 %v3129
    %v4467 = vunpack.c.h.b16 %v3129
    %v4468 = vunpack.c.l.b16 %v3130
    %v4469 = vunpack.c.h.b16 %v3130
    %v4470 = vunpack.c.l.b16 %v3131
    %v4471 = vunpack.c.h.b16 %v3131
    %v4472 = vunpack.c.l.b16 %v3132
    %v4473 = vunpack.c.l.b16 %v3133
    %v4474 = vunpack.c.h.b16 %v3133
    %v4475 = vunpack.c.l.b16 %v3134
    %v4476 = vunpack.c.h.b16 %v3134
    %v4477 = vunpack.c.l.b16 %v3135
    %v4478 = vunpack.c.h.b16 %v3135
    %v4479 = vunpack.c.l.b16 %v3136
    %v4480 = vunpack.c.l.b16 %v3137
    %v4481 = vunpack.c.h.b16 %v3137
    %v4482 = vunpack.c.l.b16 %v3138
    %v4483 = vunpack.c.h.b16 %v3138
    %v4484 = vunpack.c.l.b16 %v3139
    %v4485 = vunpack.c.h.b16 %v3139
    %v4486 = vunpack.c.l.b16 %v3140
    %v4487 = vunpack.c.l.b16 %v3141
    %v4488 = vunpack.c.h.b16 %v3141
    %v4489 = vunpack.c.l.b16 %v3142
    %v4490 = vunpack.c.h.b16 %v3142
    %v4491 = vunpack.c.l.b16 %v3143
    %v4492 = vunpack.c.h.b16 %v3143
    %v4493 = vunpack.c.l.b16 %v3144
    %v4494 = vunpack.c.l.b16 %v3145
    %v4495 = vunpack.c.h.b16 %v3145
    %v4496 = vunpack.c.l.b16 %v3146
    %v4497 = vunpack.c.h.b16 %v3146
    %v4498 = vunpack.c.l.b16 %v3147
    %v4499 = vunpack.c.h.b16 %v3147
    %v4500 = vunpack.c.l.b16 %v3148
    %v4501 = vunpack.c.l.b16 %v3149
    %v4502 = vunpack.c.h.b16 %v3149
    %v4503 = vunpack.c.l.b16 %v3150
    %v4504 = vunpack.c.h.b16 %v3150
    %v4505 = vunpack.c.l.b16 %v3151
    %v4506 = vunpack.c.h.b16 %v3151
    %v4507 = vunpack.c.l.b16 %v3152
    %v4508 = vunpack.c.l.b16 %v3153
    %v4509 = vunpack.c.h.b16 %v3153
    %v4510 = vunpack.c.l.b16 %v3154
    %v4511 = vunpack.c.h.b16 %v3154
    %v4512 = vunpack.c.l.b16 %v3155
    %v4513 = vunpack.c.h.b16 %v3155
    %v4514 = vunpack.c.l.b16 %v3156
    %v4515 = vunpack.c.l.b16 %v3157
    %v4516 = vunpack.c.h.b16 %v3157
    %v4517 = vunpack.c.l.b16 %v3158
    %v4518 = vunpack.c.h.b16 %v3158
    %v4519 = vunpack.c.l.b16 %v3159
    %v4520 = vunpack.c.h.b16 %v3159
    %v4521 = vunpack.c.l.b16 %v3160
    %v4522 = vunpack.c.l.b16 %v3161
    %v4523 = vunpack.c.h.b16 %v3161
    %v4524 = vunpack.c.l.b16 %v3162
    %v4525 = vunpack.c.h.b16 %v3162
    %v4526 = vunpack.c.l.b16 %v3163
    %v4527 = vunpack.c.h.b16 %v3163
    %v4528 = vunpack.c.l.b16 %v3164
    %v4529 = vunpack.c.l.b16 %v3165
    %v4530 = vunpack.c.h.b16 %v3165
    %v4531 = vunpack.c.l.b16 %v3166
    %v4532 = vunpack.c.h.b16 %v3166
    %v4533 = vunpack.c.l.b16 %v3167
    %v4534 = vunpack.c.h.b16 %v3167
    %v4535 = vunpack.c.l.b16 %v3168
    %v4536 = vunpack.c.l.b16 %v3169
    %v4537 = vunpack.c.h.b16 %v3169
    %v4538 = vunpack.c.l.b16 %v3170
    %v4539 = vunpack.c.h.b16 %v3170
    %v4540 = vunpack.c.l.b16 %v3171
    %v4541 = vunpack.c.h.b16 %v3171
    %v4542 = vunpack.c.l.b16 %v3172
    %v4543 = vunpack.c.l.b16 %v3173
    %v4544 = vunpack.c.h.b16 %v3173
    %v4545 = vunpack.c.l.b16 %v3174
    %v4546 = vunpack.c.h.b16 %v3174
    %v4547 = vunpack.c.l.b16 %v3175
    %v4548 = vunpack.c.h.b16 %v3175
    %v4549 = vunpack.c.l.b16 %v3176
    %v4550 = vunpack.c.l.b16 %v3177
    %v4551 = vunpack.c.h.b16 %v3177
    %v4552 = vunpack.c.l.b16 %v3178
    %v4553 = vunpack.c.h.b16 %v3178
    %v4554 = vunpack.c.l.b16 %v3179
    %v4555 = vunpack.c.h.b16 %v3179
    %v4556 = vunpack.c.l.b16 %v3180
    %v4557 = vunpack.c.l.b16 %v3181
    %v4558 = vunpack.c.h.b16 %v3181
    %v4559 = vunpack.c.l.b16 %v3182
    %v4560 = vunpack.c.h.b16 %v3182
    %v4561 = vunpack.c.l.b16 %v3183
    %v4562 = vunpack.c.h.b16 %v3183
    %v4563 = vunpack.c.l.b16 %v3184
    %v4564 = vunpack.c.l.b16 %v3185
    %v4565 = vunpack.c.h.b16 %v3185
    %v4566 = vunpack.c.l.b16 %v3186
    %v4567 = vunpack.c.h.b16 %v3186
    %v4568 = vunpack.c.l.b16 %v3187
    %v4569 = vunpack.c.h.b16 %v3187
    %v4570 = vunpack.c.l.b16 %v3188
    %v4571 = vunpack.c.l.b16 %v3189
    %v4572 = vunpack.c.h.b16 %v3189
    %v4573 = vunpack.c.l.b16 %v3190
    %v4574 = vunpack.c.h.b16 %v3190
    %v4575 = vunpack.c.l.b16 %v3191
    %v4576 = vunpack.c.h.b16 %v3191
    %v4577 = vunpack.c.l.b16 %v3192
    %v4578 = vunpack.c.l.b16 %v3193
    %v4579 = vunpack.c.h.b16 %v3193
    %v4580 = vunpack.c.l.b16 %v3194
    %v4581 = vunpack.c.h.b16 %v3194
    %v4582 = vunpack.c.l.b16 %v3195
    %v4583 = vunpack.c.h.b16 %v3195
    %v4584 = vunpack.c.l.b16 %v3196
    %v4585 = vunpack.c.l.b16 %v3197
    %v4586 = vunpack.c.h.b16 %v3197
    %v4587 = vunpack.c.l.b16 %v3198
    %v4588 = vunpack.c.h.b16 %v3198
    %v4589 = vunpack.c.l.b16 %v3199
    %v4590 = vunpack.c.h.b16 %v3199
    %v4591 = vunpack.c.l.b16 %v3200
    %v4592 = vunpack.c.l.b16 %v3201
    %v4593 = vunpack.c.h.b16 %v3201
    %v4594 = vunpack.c.l.b16 %v3202
    %v4595 = vunpack.c.h.b16 %v3202
    %v4596 = vunpack.c.l.b16 %v3203
    %v4597 = vunpack.c.h.b16 %v3203
    %v4598 = vunpack.c.l.b16 %v3204
    %v4599 = vunpack.c.l.b16 %v3205
    %v4600 = vunpack.c.h.b16 %v3205
    %v4601 = vunpack.c.l.b16 %v3206
    %v4602 = vunpack.c.h.b16 %v3206
    %v4603 = vunpack.c.l.b16 %v3207
    %v4604 = vunpack.c.h.b16 %v3207
    %v4605 = vunpack.c.l.b16 %v3208
    %v4606 = vunpack.c.l.b16 %v3209
    %v4607 = vunpack.c.h.b16 %v3209
    %v4608 = vunpack.c.l.b16 %v3210
    %v4609 = vunpack.c.h.b16 %v3210
    %v4610 = vunpack.c.l.b16 %v3211
    %v4611 = vunpack.c.h.b16 %v3211
    %v4612 = vunpack.c.l.b16 %v3212
    %v4613 = vunpack.c.l.b16 %v3213
    %v4614 = vunpack.c.h.b16 %v3213
    %v4615 = vunpack.c.l.b16 %v3214
    %v4616 = vunpack.c.h.b16 %v3214
    %v4617 = vunpack.c.l.b16 %v3215
    %v4618 = vunpack.c.h.b16 %v3215
    %v4619 = vunpack.c.l.b16 %v3216
    %v4620 = vunpack.c.l.b16 %v3217
    %v4621 = vunpack.c.h.b16 %v3217
    %v4622 = vunpack.c.l.b16 %v3218
    %v4623 = vunpack.c.h.b16 %v3218
    %v4624 = vunpack.c.l.b16 %v3219
    %v4625 = vunpack.c.h.b16 %v3219
    %v4626 = vunpack.c.l.b16 %v3220
    %v4627 = vunpack.c.l.b16 %v3221
    %v4628 = vunpack.c.h.b16 %v3221
    %v4629 = vunpack.c.l.b16 %v3222
    %v4630 = vunpack.c.h.b16 %v3222
    %v4631 = vunpack.c.l.b16 %v3223
    %v4632 = vunpack.c.h.b16 %v3223
    %v4633 = vunpack.c.l.b16 %v3224
    %v4634 = vunpack.c.l.b16 %v3225
    %v4635 = vunpack.c.h.b16 %v3225
    %v4636 = vunpack.c.l.b16 %v3226
    %v4637 = vunpack.c.h.b16 %v3226
    %v4638 = vunpack.c.l.b16 %v3227
    %v4639 = vunpack.c.h.b16 %v3227
    %v4640 = vunpack.c.l.b16 %v3228
    %v4641 = vunpack.c.l.b16 %v3229
    %v4642 = vunpack.c.h.b16 %v3229
    %v4643 = vunpack.c.l.b16 %v3230
    %v4644 = vunpack.c.h.b16 %v3230
    %v4645 = vunpack.c.l.b16 %v3231
    %v4646 = vunpack.c.h.b16 %v3231
    %v4647 = vunpack.c.l.b16 %v3232
    %v4648 = vunpack.c.l.b16 %v3233
    %v4649 = vunpack.c.h.b16 %v3233
    %v4650 = vunpack.c.l.b16 %v3234
    %v4651 = vunpack.c.h.b16 %v3234
    %v4652 = vunpack.c.l.b16 %v3235
    %v4653 = vunpack.c.h.b16 %v3235
    %v4654 = vunpack.c.l.b16 %v3236
    %v4655 = vunpack.c.l.b16 %v3237
    %v4656 = vunpack.c.h.b16 %v3237
    %v4657 = vunpack.c.l.b16 %v3238
    %v4658 = vunpack.c.h.b16 %v3238
    %v4659 = vunpack.c.l.b16 %v3239
    %v4660 = vunpack.c.h.b16 %v3239
    %v4661 = vunpack.c.l.b16 %v3240
    %v4662 = vunpack.c.l.b16 %v3241
    %v4663 = vunpack.c.h.b16 %v3241
    %v4664 = vunpack.c.l.b16 %v3242
    %v4665 = vunpack.c.h.b16 %v3242
    %v4666 = vunpack.c.l.b16 %v3243
    %v4667 = vunpack.c.h.b16 %v3243
    %v4668 = vunpack.c.l.b16 %v3244
    %v4669 = vunpack.c.l.b16 %v3245
    %v4670 = vunpack.c.h.b16 %v3245
    %v4671 = vunpack.c.l.b16 %v3246
    %v4672 = vunpack.c.h.b16 %v3246
    %v4673 = vunpack.c.l.b16 %v3247
    %v4674 = vunpack.c.h.b16 %v3247
    %v4675 = vunpack.c.l.b16 %v3248
    %v4676 = vunpack.c.l.b16 %v3249
    %v4677 = vunpack.c.h.b16 %v3249
    %v4678 = vunpack.c.l.b16 %v3250
    %v4679 = vunpack.c.h.b16 %v3250
    %v4680 = vunpack.c.l.b16 %v3251
    %v4681 = vunpack.c.h.b16 %v3251
    %v4682 = vunpack.c.l.b16 %v3252
    %v4683 = vunpack.c.l.b16 %v3253
    %v4684 = vunpack.c.h.b16 %v3253
    %v4685 = vunpack.c.l.b16 %v3254
    %v4686 = vunpack.c.h.b16 %v3254
    %v4687 = vunpack.c.l.b16 %v3255
    %v4688 = vunpack.c.h.b16 %v3255
    %v4689 = vunpack.c.l.b16 %v3256
    %v4690 = vunpack.c.l.b16 %v3257
    %v4691 = vunpack.c.h.b16 %v3257
    %v4692 = vunpack.c.l.b16 %v3258
    %v4693 = vunpack.c.h.b16 %v3258
    %v4694 = vunpack.c.l.b16 %v3259
    %v4695 = vunpack.c.h.b16 %v3259
    %v4696 = vunpack.c.l.b16 %v3260
    %v4697 = vunpack.c.l.b16 %v3261
    %v4698 = vunpack.c.h.b16 %v3261
    %v4699 = vunpack.c.l.b16 %v3262
    %v4700 = vunpack.c.h.b16 %v3262
    %v4701 = vunpack.c.l.b16 %v3263
    %v4702 = vunpack.c.h.b16 %v3263
    %v4703 = vunpack.c.l.b16 %v3264
    %v4704 = vunpack.c.l.b16 %v3265
    %v4705 = vunpack.c.h.b16 %v3265
    %v4706 = vunpack.c.l.b16 %v3266
    %v4707 = vunpack.c.h.b16 %v3266
    %v4708 = vunpack.c.l.b16 %v3267
    %v4709 = vunpack.c.h.b16 %v3267
    %v4710 = vunpack.c.l.b16 %v3268
    %v4711 = vunpack.c.l.b16 %v3269
    %v4712 = vunpack.c.h.b16 %v3269
    %v4713 = vunpack.c.l.b16 %v3270
    %v4714 = vunpack.c.h.b16 %v3270
    %v4715 = vunpack.c.l.b16 %v3271
    %v4716 = vunpack.c.h.b16 %v3271
    %v4717 = vunpack.c.l.b16 %v3272
    %v4718 = vpack.c.b16 %v3829, %v3822
    %v4719 = vpack.c.b16 %v3830, %v3823
    %v4720 = vpack.c.b16 %v3831, %v3824
    %v4721 = vpack.c.b16 %v3832, %v3825
    %v4722 = vpack.c.b16 %v3833, %v3826
    %v4723 = vpack.c.b16 %v3834, %v3827
    %v4724 = vpack.c.b16 %v3835, %v3828
    %v4725 = vpack.c.b16 %v3843, %v3836
    %v4726 = vpack.c.b16 %v3844, %v3837
    %v4727 = vpack.c.b16 %v3845, %v3838
    %v4728 = vpack.c.b16 %v3846, %v3839
    %v4729 = vpack.c.b16 %v3847, %v3840
    %v4730 = vpack.c.b16 %v3848, %v3841
    %v4731 = vpack.c.b16 %v3849, %v3842
    %v4732 = vpack.c.b16 %v3857, %v3850
    %v4733 = vpack.c.b16 %v3858, %v3851
    %v4734 = vpack.c.b16 %v3859, %v3852
    %v4735 = vpack.c.b16 %v3860, %v3853
    %v4736 = vpack.c.b16 %v3861, %v3854
    %v4737 = vpack.c.b16 %v3862, %v3855
    %v4738 = vpack.c.b16 %v3863, %v3856
    %v4739 = vpack.c.b16 %v3871, %v3864
    %v4740 = vpack.c.b16 %v3872, %v3865
    %v4741 = vpack.c.b16 %v3873, %v3866
    %v4742 = vpack.c.b16 %v3874, %v3867
    %v4743 = vpack.c.b16 %v3875, %v3868
    %v4744 = vpack.c.b16 %v3876, %v3869
    %v4745 = vpack.c.b16 %v3877, %v3870
    %v4746 = vpack.c.b16 %v3885, %v3878
    %v4747 = vpack.c.b16 %v3886, %v3879
    %v4748 = vpack.c.b16 %v3887, %v3880
    %v4749 = vpack.c.b16 %v3888, %v3881
    %v4750 = vpack.c.b16 %v3889, %v3882
    %v4751 = vpack.c.b16 %v3890, %v3883
    %v4752 = vpack.c.b16 %v3891, %v3884
    %v4753 = vpack.c.b16 %v3899, %v3892
    %v4754 = vpack.c.b16 %v3900, %v3893
    %v4755 = vpack.c.b16 %v3901, %v3894
    %v4756 = vpack.c.b16 %v3902, %v3895
    %v4757 = vpack.c.b16 %v3903, %v3896
    %v4758 = vpack.c.b16 %v3904, %v3897
    %v4759 = vpack.c.b16 %v3905, %v3898
    %v4760 = vpack.c.b16 %v3913, %v3906
    %v4761 = vpack.c.b16 %v3914, %v3907
    %v4762 = vpack.c.b16 %v3915, %v3908
    %v4763 = vpack.c.b16 %v3916, %v3909
    %v4764 = vpack.c.b16 %v3917, %v3910
    %v4765 = vpack.c.b16 %v3918, %v3911
    %v4766 = vpack.c.b16 %v3919, %v3912
    %v4767 = vpack.c.b16 %v3927, %v3920
    %v4768 = vpack.c.b16 %v3928, %v3921
    %v4769 = vpack.c.b16 %v3929, %v3922
    %v4770 = vpack.c.b16 %v3930, %v3923
    %v4771 = vpack.c.b16 %v3931, %v3924
    %v4772 = vpack.c.b16 %v3932, %v3925
    %v4773 = vpack.c.b16 %v3933, %v3926
    %v4774 = vpack.c.b16 %v3941, %v3934
    %v4775 = vpack.c.b16 %v3942, %v3935
    %v4776 = vpack.c.b16 %v3943, %v3936
    %v4777 = vpack.c.b16 %v3944, %v3937
    %v4778 = vpack.c.b16 %v3945, %v3938
    %v4779 = vpack.c.b16 %v3946, %v3939
    %v4780 = vpack.c.b16 %v3947, %v3940
    %v4781 = vpack.c.b16 %v3955, %v3948
    %v4782 = vpack.c.b16 %v3956, %v3949
    %v4783 = vpack.c.b16 %v3957, %v3950
    %v4784 = vpack.c.b16 %v3958, %v3951
    %v4785 = vpack.c.b16 %v3959, %v3952
    %v4786 = vpack.c.b16 %v3960, %v3953
    %v4787 = vpack.c.b16 %v3961, %v3954
    %v4788 = vpack.c.b16 %v3969, %v3962
    %v4789 = vpack.c.b16 %v3970, %v3963
    %v4790 = vpack.c.b16 %v3971, %v3964
    %v4791 = vpack.c.b16 %v3972, %v3965
    %v4792 = vpack.c.b16 %v3973, %v3966
    %v4793 = vpack.c.b16 %v3974, %v3967
    %v4794 = vpack.c.b16 %v3975, %v3968
    %v4795 = vpack.c.b16 %v3983, %v3976
    %v4796 = vpack.c.b16 %v3984, %v3977
    %v4797 = vpack.c.b16 %v3985, %v3978
    %v4798 = vpack.c.b16 %v3986, %v3979
    %v4799 = vpack.c.b16 %v3987, %v3980
    %v4800 = vpack.c.b16 %v3988, %v3981
    %v4801 = vpack.c.b16 %v3989, %v3982
    %v4802 = vpack.c.b16 %v3997, %v3990
    %v4803 = vpack.c.b16 %v3998, %v3991
    %v4804 = vpack.c.b16 %v3999, %v3992
    %v4805 = vpack.c.b16 %v4000, %v3993
    %v4806 = vpack.c.b16 %v4001, %v3994
    %v4807 = vpack.c.b16 %v4002, %v3995
    %v4808 = vpack.c.b16 %v4003, %v3996
    %v4809 = vpack.c.b16 %v4011, %v4004
    %v4810 = vpack.c.b16 %v4012, %v4005
    %v4811 = vpack.c.b16 %v4013, %v4006
    %v4812 = vpack.c.b16 %v4014, %v4007
    %v4813 = vpack.c.b16 %v4015, %v4008
    %v4814 = vpack.c.b16 %v4016, %v4009
    %v4815 = vpack.c.b16 %v4017, %v4010
    %v4816 = vpack.c.b16 %v4025, %v4018
    %v4817 = vpack.c.b16 %v4026, %v4019
    %v4818 = vpack.c.b16 %v4027, %v4020
    %v4819 = vpack.c.b16 %v4028, %v4021
    %v4820 = vpack.c.b16 %v4029, %v4022
    %v4821 = vpack.c.b16 %v4030, %v4023
    %v4822 = vpack.c.b16 %v4031, %v4024
    %v4823 = vpack.c.b16 %v4039, %v4032
    %v4824 = vpack.c.b16 %v4040, %v4033
    %v4825 = vpack.c.b16 %v4041, %v4034
    %v4826 = vpack.c.b16 %v4042, %v4035
    %v4827 = vpack.c.b16 %v4043, %v4036
    %v4828 = vpack.c.b16 %v4044, %v4037
    %v4829 = vpack.c.b16 %v4045, %v4038
    %v4830 = vpack.c.b16 %v4053, %v4046
    %v4831 = vpack.c.b16 %v4054, %v4047
    %v4832 = vpack.c.b16 %v4055, %v4048
    %v4833 = vpack.c.b16 %v4056, %v4049
    %v4834 = vpack.c.b16 %v4057, %v4050
    %v4835 = vpack.c.b16 %v4058, %v4051
    %v4836 = vpack.c.b16 %v4059, %v4052
    %v4837 = vpack.c.b16 %v4067, %v4060
    %v4838 = vpack.c.b16 %v4068, %v4061
    %v4839 = vpack.c.b16 %v4069, %v4062
    %v4840 = vpack.c.b16 %v4070, %v4063
    %v4841 = vpack.c.b16 %v4071, %v4064
    %v4842 = vpack.c.b16 %v4072, %v4065
    %v4843 = vpack.c.b16 %v4073, %v4066
    %v4844 = vpack.c.b16 %v4081, %v4074
    %v4845 = vpack.c.b16 %v4082, %v4075
    %v4846 = vpack.c.b16 %v4083, %v4076
    %v4847 = vpack.c.b16 %v4084, %v4077
    %v4848 = vpack.c.b16 %v4085, %v4078
    %v4849 = vpack.c.b16 %v4086, %v4079
    %v4850 = vpack.c.b16 %v4087, %v4080
    %v4851 = vpack.c.b16 %v4095, %v4088
    %v4852 = vpack.c.b16 %v4096, %v4089
    %v4853 = vpack.c.b16 %v4097, %v4090
    %v4854 = vpack.c.b16 %v4098, %v4091
    %v4855 = vpack.c.b16 %v4099, %v4092
    %v4856 = vpack.c.b16 %v4100, %v4093
    %v4857 = vpack.c.b16 %v4101, %v4094
    %v4858 = vpack.c.b16 %v4109, %v4102
    %v4859 = vpack.c.b16 %v4110, %v4103
    %v4860 = vpack.c.b16 %v4111, %v4104
    %v4861 = vpack.c.b16 %v4112, %v4105
    %v4862 = vpack.c.b16 %v4113, %v4106
    %v4863 = vpack.c.b16 %v4114, %v4107
    %v4864 = vpack.c.b16 %v4115, %v4108
    %v4865 = vpack.c.b16 %v4123, %v4116
    %v4866 = vpack.c.b16 %v4124, %v4117
    %v4867 = vpack.c.b16 %v4125, %v4118
    %v4868 = vpack.c.b16 %v4126, %v4119
    %v4869 = vpack.c.b16 %v4127, %v4120
    %v4870 = vpack.c.b16 %v4128, %v4121
    %v4871 = vpack.c.b16 %v4129, %v4122
    %v4872 = vpack.c.b16 %v4137, %v4130
    %v4873 = vpack.c.b16 %v4138, %v4131
    %v4874 = vpack.c.b16 %v4139, %v4132
    %v4875 = vpack.c.b16 %v4140, %v4133
    %v4876 = vpack.c.b16 %v4141, %v4134
    %v4877 = vpack.c.b16 %v4142, %v4135
    %v4878 = vpack.c.b16 %v4143, %v4136
    %v4879 = vpack.c.b16 %v4151, %v4144
    %v4880 = vpack.c.b16 %v4152, %v4145
    %v4881 = vpack.c.b16 %v4153, %v4146
    %v4882 = vpack.c.b16 %v4154, %v4147
    %v4883 = vpack.c.b16 %v4155, %v4148
    %v4884 = vpack.c.b16 %v4156, %v4149
    %v4885 = vpack.c.b16 %v4157, %v4150
    %v4886 = vpack.c.b16 %v4165, %v4158
    %v4887 = vpack.c.b16 %v4166, %v4159
    %v4888 = vpack.c.b16 %v4167, %v4160
    %v4889 = vpack.c.b16 %v4168, %v4161
    %v4890 = vpack.c.b16 %v4169, %v4162
    %v4891 = vpack.c.b16 %v4170, %v4163
    %v4892 = vpack.c.b16 %v4171, %v4164
    %v4893 = vpack.c.b16 %v4179, %v4172
    %v4894 = vpack.c.b16 %v4180, %v4173
    %v4895 = vpack.c.b16 %v4181, %v4174
    %v4896 = vpack.c.b16 %v4182, %v4175
    %v4897 = vpack.c.b16 %v4183, %v4176
    %v4898 = vpack.c.b16 %v4184, %v4177
    %v4899 = vpack.c.b16 %v4185, %v4178
    %v4900 = vpack.c.b16 %v4193, %v4186
    %v4901 = vpack.c.b16 %v4194, %v4187
    %v4902 = vpack.c.b16 %v4195, %v4188
    %v4903 = vpack.c.b16 %v4196, %v4189
    %v4904 = vpack.c.b16 %v4197, %v4190
    %v4905 = vpack.c.b16 %v4198, %v4191
    %v4906 = vpack.c.b16 %v4199, %v4192
    %v4907 = vpack.c.b16 %v4207, %v4200
    %v4908 = vpack.c.b16 %v4208, %v4201
    %v4909 = vpack.c.b16 %v4209, %v4202
    %v4910 = vpack.c.b16 %v4210, %v4203
    %v4911 = vpack.c.b16 %v4211, %v4204
    %v4912 = vpack.c.b16 %v4212, %v4205
    %v4913 = vpack.c.b16 %v4213, %v4206
    %v4914 = vpack.c.b16 %v4221, %v4214
    %v4915 = vpack.c.b16 %v4222, %v4215
    %v4916 = vpack.c.b16 %v4223, %v4216
    %v4917 = vpack.c.b16 %v4224, %v4217
    %v4918 = vpack.c.b16 %v4225, %v4218
    %v4919 = vpack.c.b16 %v4226, %v4219
    %v4920 = vpack.c.b16 %v4227, %v4220
    %v4921 = vpack.c.b16 %v4235, %v4228
    %v4922 = vpack.c.b16 %v4236, %v4229
    %v4923 = vpack.c.b16 %v4237, %v4230
    %v4924 = vpack.c.b16 %v4238, %v4231
    %v4925 = vpack.c.b16 %v4239, %v4232
    %v4926 = vpack.c.b16 %v4240, %v4233
    %v4927 = vpack.c.b16 %v4241, %v4234
    %v4928 = vpack.c.b16 %v4249, %v4242
    %v4929 = vpack.c.b16 %v4250, %v4243
    %v4930 = vpack.c.b16 %v4251, %v4244
    %v4931 = vpack.c.b16 %v4252, %v4245
    %v4932 = vpack.c.b16 %v4253, %v4246
    %v4933 = vpack.c.b16 %v4254, %v4247
    %v4934 = vpack.c.b16 %v4255, %v4248
    %v4935 = vpack.c.b16 %v4263, %v4256
    %v4936 = vpack.c.b16 %v4264, %v4257
    %v4937 = vpack.c.b16 %v4265, %v4258
    %v4938 = vpack.c.b16 %v4266, %v4259
    %v4939 = vpack.c.b16 %v4267, %v4260
    %v4940 = vpack.c.b16 %v4268, %v4261
    %v4941 = vpack.c.b16 %v4269, %v4262
    %v4942 = vpack.c.b16 %v4277, %v4270
    %v4943 = vpack.c.b16 %v4278, %v4271
    %v4944 = vpack.c.b16 %v4279, %v4272
    %v4945 = vpack.c.b16 %v4280, %v4273
    %v4946 = vpack.c.b16 %v4281, %v4274
    %v4947 = vpack.c.b16 %v4282, %v4275
    %v4948 = vpack.c.b16 %v4283, %v4276
    %v4949 = vpack.c.b16 %v4291, %v4284
    %v4950 = vpack.c.b16 %v4292, %v4285
    %v4951 = vpack.c.b16 %v4293, %v4286
    %v4952 = vpack.c.b16 %v4294, %v4287
    %v4953 = vpack.c.b16 %v4295, %v4288
    %v4954 = vpack.c.b16 %v4296, %v4289
    %v4955 = vpack.c.b16 %v4297, %v4290
    %v4956 = vpack.c.b16 %v4305, %v4298
    %v4957 = vpack.c.b16 %v4306, %v4299
    %v4958 = vpack.c.b16 %v4307, %v4300
    %v4959 = vpack.c.b16 %v4308, %v4301
    %v4960 = vpack.c.b16 %v4309, %v4302
    %v4961 = vpack.c.b16 %v4310, %v4303
    %v4962 = vpack.c.b16 %v4311, %v4304
    %v4963 = vpack.c.b16 %v4319, %v4312
    %v4964 = vpack.c.b16 %v4320, %v4313
    %v4965 = vpack.c.b16 %v4321, %v4314
    %v4966 = vpack.c.b16 %v4322, %v4315
    %v4967 = vpack.c.b16 %v4323, %v4316
    %v4968 = vpack.c.b16 %v4324, %v4317
    %v4969 = vpack.c.b16 %v4325, %v4318
    %v4970 = vpack.c.b16 %v4333, %v4326
    %v4971 = vpack.c.b16 %v4334, %v4327
    %v4972 = vpack.c.b16 %v4335, %v4328
    %v4973 = vpack.c.b16 %v4336, %v4329
    %v4974 = vpack.c.b16 %v4337, %v4330
    %v4975 = vpack.c.b16 %v4338, %v4331
    %v4976 = vpack.c.b16 %v4339, %v4332
    %v4977 = vpack.c.b16 %v4347, %v4340
    %v4978 = vpack.c.b16 %v4348, %v4341
    %v4979 = vpack.c.b16 %v4349, %v4342
    %v4980 = vpack.c.b16 %v4350, %v4343
    %v4981 = vpack.c.b16 %v4351, %v4344
    %v4982 = vpack.c.b16 %v4352, %v4345
    %v4983 = vpack.c.b16 %v4353, %v4346
    %v4984 = vpack.c.b16 %v4361, %v4354
    %v4985 = vpack.c.b16 %v4362, %v4355
    %v4986 = vpack.c.b16 %v4363, %v4356
    %v4987 = vpack.c.b16 %v4364, %v4357
    %v4988 = vpack.c.b16 %v4365, %v4358
    %v4989 = vpack.c.b16 %v4366, %v4359
    %v4990 = vpack.c.b16 %v4367, %v4360
    %v4991 = vpack.c.b16 %v4375, %v4368
    %v4992 = vpack.c.b16 %v4376, %v4369
    %v4993 = vpack.c.b16 %v4377, %v4370
    %v4994 = vpack.c.b16 %v4378, %v4371
    %v4995 = vpack.c.b16 %v4379, %v4372
    %v4996 = vpack.c.b16 %v4380, %v4373
    %v4997 = vpack.c.b16 %v4381, %v4374
    %v4998 = vpack.c.b16 %v4389, %v4382
    %v4999 = vpack.c.b16 %v4390, %v4383
    %v5000 = vpack.c.b16 %v4391, %v4384
    %v5001 = vpack.c.b16 %v4392, %v4385
    %v5002 = vpack.c.b16 %v4393, %v4386
    %v5003 = vpack.c.b16 %v4394, %v4387
    %v5004 = vpack.c.b16 %v4395, %v4388
    %v5005 = vpack.c.b16 %v4403, %v4396
    %v5006 = vpack.c.b16 %v4404, %v4397
    %v5007 = vpack.c.b16 %v4405, %v4398
    %v5008 = vpack.c.b16 %v4406, %v4399
    %v5009 = vpack.c.b16 %v4407, %v4400
    %v5010 = vpack.c.b16 %v4408, %v4401
    %v5011 = vpack.c.b16 %v4409, %v4402
    %v5012 = vpack.c.b16 %v4417, %v4410
    %v5013 = vpack.c.b16 %v4418, %v4411
    %v5014 = vpack.c.b16 %v4419, %v4412
    %v5015 = vpack.c.b16 %v4420, %v4413
    %v5016 = vpack.c.b16 %v4421, %v4414
    %v5017 = vpack.c.b16 %v4422, %v4415
    %v5018 = vpack.c.b16 %v4423, %v4416
    %v5019 = vpack.c.b16 %v4431, %v4424
    %v5020 = vpack.c.b16 %v4432, %v4425
    %v5021 = vpack.c.b16 %v4433, %v4426
    %v5022 = vpack.c.b16 %v4434, %v4427
    %v5023 = vpack.c.b16 %v4435, %v4428
    %v5024 = vpack.c.b16 %v4436, %v4429
    %v5025 = vpack.c.b16 %v4437, %v4430
    %v5026 = vpack.c.b16 %v4445, %v4438
    %v5027 = vpack.c.b16 %v4446, %v4439
    %v5028 = vpack.c.b16 %v4447, %v4440
    %v5029 = vpack.c.b16 %v4448, %v4441
    %v5030 = vpack.c.b16 %v4449, %v4442
    %v5031 = vpack.c.b16 %v4450, %v4443
    %v5032 = vpack.c.b16 %v4451, %v4444
    %v5033 = vpack.c.b16 %v4459, %v4452
    %v5034 = vpack.c.b16 %v4460, %v4453
    %v5035 = vpack.c.b16 %v4461, %v4454
    %v5036 = vpack.c.b16 %v4462, %v4455
    %v5037 = vpack.c.b16 %v4463, %v4456
    %v5038 = vpack.c.b16 %v4464, %v4457
    %v5039 = vpack.c.b16 %v4465, %v4458
    %v5040 = vpack.c.b16 %v4473, %v4466
    %v5041 = vpack.c.b16 %v4474, %v4467
    %v5042 = vpack.c.b16 %v4475, %v4468
    %v5043 = vpack.c.b16 %v4476, %v4469
    %v5044 = vpack.c.b16 %v4477, %v4470
    %v5045 = vpack.c.b16 %v4478, %v4471
    %v5046 = vpack.c.b16 %v4479, %v4472
    %v5047 = vpack.c.b16 %v4487, %v4480
    %v5048 = vpack.c.b16 %v4488, %v4481
    %v5049 = vpack.c.b16 %v4489, %v4482
    %v5050 = vpack.c.b16 %v4490, %v4483
    %v5051 = vpack.c.b16 %v4491, %v4484
    %v5052 = vpack.c.b16 %v4492, %v4485
    %v5053 = vpack.c.b16 %v4493, %v4486
    %v5054 = vpack.c.b16 %v4501, %v4494
    %v5055 = vpack.c.b16 %v4502, %v4495
    %v5056 = vpack.c.b16 %v4503, %v4496
    %v5057 = vpack.c.b16 %v4504, %v4497
    %v5058 = vpack.c.b16 %v4505, %v4498
    %v5059 = vpack.c.b16 %v4506, %v4499
    %v5060 = vpack.c.b16 %v4507, %v4500
    %v5061 = vpack.c.b16 %v4515, %v4508
    %v5062 = vpack.c.b16 %v4516, %v4509
    %v5063 = vpack.c.b16 %v4517, %v4510
    %v5064 = vpack.c.b16 %v4518, %v4511
    %v5065 = vpack.c.b16 %v4519, %v4512
    %v5066 = vpack.c.b16 %v4520, %v4513
    %v5067 = vpack.c.b16 %v4521, %v4514
    %v5068 = vpack.c.b16 %v4529, %v4522
    %v5069 = vpack.c.b16 %v4530, %v4523
    %v5070 = vpack.c.b16 %v4531, %v4524
    %v5071 = vpack.c.b16 %v4532, %v4525
    %v5072 = vpack.c.b16 %v4533, %v4526
    %v5073 = vpack.c.b16 %v4534, %v4527
    %v5074 = vpack.c.b16 %v4535, %v4528
    %v5075 = vpack.c.b16 %v4543, %v4536
    %v5076 = vpack.c.b16 %v4544, %v4537
    %v5077 = vpack.c.b16 %v4545, %v4538
    %v5078 = vpack.c.b16 %v4546, %v4539
    %v5079 = vpack.c.b16 %v4547, %v4540
    %v5080 = vpack.c.b16 %v4548, %v4541
    %v5081 = vpack.c.b16 %v4549, %v4542
    %v5082 = vpack.c.b16 %v4557, %v4550
    %v5083 = vpack.c.b16 %v4558, %v4551
    %v5084 = vpack.c.b16 %v4559, %v4552
    %v5085 = vpack.c.b16 %v4560, %v4553
    %v5086 = vpack.c.b16 %v4561, %v4554
    %v5087 = vpack.c.b16 %v4562, %v4555
    %v5088 = vpack.c.b16 %v4563, %v4556
    %v5089 = vpack.c.b16 %v4571, %v4564
    %v5090 = vpack.c.b16 %v4572, %v4565
    %v5091 = vpack.c.b16 %v4573, %v4566
    %v5092 = vpack.c.b16 %v4574, %v4567
    %v5093 = vpack.c.b16 %v4575, %v4568
    %v5094 = vpack.c.b16 %v4576, %v4569
    %v5095 = vpack.c.b16 %v4577, %v4570
    %v5096 = vpack.c.b16 %v4585, %v4578
    %v5097 = vpack.c.b16 %v4586, %v4579
    %v5098 = vpack.c.b16 %v4587, %v4580
    %v5099 = vpack.c.b16 %v4588, %v4581
    %v5100 = vpack.c.b16 %v4589, %v4582
    %v5101 = vpack.c.b16 %v4590, %v4583
    %v5102 = vpack.c.b16 %v4591, %v4584
    %v5103 = vpack.c.b16 %v4599, %v4592
    %v5104 = vpack.c.b16 %v4600, %v4593
    %v5105 = vpack.c.b16 %v4601, %v4594
    %v5106 = vpack.c.b16 %v4602, %v4595
    %v5107 = vpack.c.b16 %v4603, %v4596
    %v5108 = vpack.c.b16 %v4604, %v4597
    %v5109 = vpack.c.b16 %v4605, %v4598
    %v5110 = vpack.c.b16 %v4613, %v4606
    %v5111 = vpack.c.b16 %v4614, %v4607
    %v5112 = vpack.c.b16 %v4615, %v4608
    %v5113 = vpack.c.b16 %v4616, %v4609
    %v5114 = vpack.c.b16 %v4617, %v4610
    %v5115 = vpack.c.b16 %v4618, %v4611
    %v5116 = vpack.c.b16 %v4619, %v4612
    %v5117 = vpack.c.b16 %v4627, %v4620
    %v5118 = vpack.c.b16 %v4628, %v4621
    %v5119 = vpack.c.b16 %v4629, %v4622
    %v5120 = vpack.c.b16 %v4630, %v4623
    %v5121 = vpack.c.b16 %v4631, %v4624
    %v5122 = vpack.c.b16 %v4632, %v4625
    %v5123 = vpack.c.b16 %v4633, %v4626
    %v5124 = vpack.c.b16 %v4641, %v4634
    %v5125 = vpack.c.b16 %v4642, %v4635
    %v5126 = vpack.c.b16 %v4643, %v4636
    %v5127 = vpack.c.b16 %v4644, %v4637
    %v5128 = vpack.c.b16 %v4645, %v4638
    %v5129 = vpack.c.b16 %v4646, %v4639
    %v5130 = vpack.c.b16 %v4647, %v4640
    %v5131 = vpack.c.b16 %v4655, %v4648
    %v5132 = vpack.c.b16 %v4656, %v4649
    %v5133 = vpack.c.b16 %v4657, %v4650
    %v5134 = vpack.c.b16 %v4658, %v4651
    %v5135 = vpack.c.b16 %v4659, %v4652
    %v5136 = vpack.c.b16 %v4660, %v4653
    %v5137 = vpack.c.b16 %v4661, %v4654
    %v5138 = vpack.c.b16 %v4669, %v4662
    %v5139 = vpack.c.b16 %v4670, %v4663
    %v5140 = vpack.c.b16 %v4671, %v4664
    %v5141 = vpack.c.b16 %v4672, %v4665
    %v5142 = vpack.c.b16 %v4673, %v4666
    %v5143 = vpack.c.b16 %v4674, %v4667
    %v5144 = vpack.c.b16 %v4675, %v4668
    %v5145 = vpack.c.b16 %v4683, %v4676
    %v5146 = vpack.c.b16 %v4684, %v4677
    %v5147 = vpack.c.b16 %v4685, %v4678
    %v5148 = vpack.c.b16 %v4686, %v4679
    %v5149 = vpack.c.b16 %v4687, %v4680
    %v5150 = vpack.c.b16 %v4688, %v4681
    %v5151 = vpack.c.b16 %v4689, %v4682
    %v5152 = vpack.c.b16 %v4697, %v4690
    %v5153 = vpack.c.b16 %v4698, %v4691
    %v5154 = vpack.c.b16 %v4699, %v4692
    %v5155 = vpack.c.b16 %v4700, %v4693
    %v5156 = vpack.c.b16 %v4701, %v4694
    %v5157 = vpack.c.b16 %v4702, %v4695
    %v5158 = vpack.c.b16 %v4703, %v4696
    %v5159 = vpack.c.b16 %v4711, %v4704
    %v5160 = vpack.c.b16 %v4712, %v4705
    %v5161 = vpack.c.b16 %v4713, %v4706
    %v5162 = vpack.c.b16 %v4714, %v4707
    %v5163 = vpack.c.b16 %v4715, %v4708
    %v5164 = vpack.c.b16 %v4716, %v4709
    %v5165 = vpack.c.b16 %v4717, %v4710
    %5614 = vmatprep.subr.bf16.mxu0 %v4719
    %5615 = vmatpush1.bf16.msra.mxu0 %v4718
    %5616 = vmatprep.subr.bf16.mxu0 %v4726
    %5617 = vmatpush1.bf16.msra.mxu0 %v4725
    %5618 = vmatprep.subr.bf16.mxu0 %v4733
    %5619 = vmatpush1.bf16.msra.mxu0 %v4732
    %5620 = vmatprep.subr.bf16.mxu0 %v4740
    %5621 = vmatpush1.bf16.msra.mxu0 %v4739
    %5622 = vmatprep.subr.bf16.mxu0 %v4747
    %5623 = vmatpush1.bf16.msra.mxu0 %v4746
    %5624 = vmatprep.subr.bf16.mxu0 %v4754
    %5625 = vmatpush1.bf16.msra.mxu0 %v4753
    %5626 = vmatprep.subr.bf16.mxu0 %v4761
    %5627 = vmatpush1.bf16.msra.mxu0 %v4760
    %5628 = vmatprep.subr.bf16.mxu0 %v4768
    %5629 = vmatpush1.bf16.msra.mxu0 %v4767
    %5630 = vmatprep.subr.bf16.mxu0 %v4775
    %5631 = vmatpush1.bf16.msra.mxu0 %v4774
    %5632 = vmatprep.subr.bf16.mxu0 %v4782
    %5633 = vmatpush1.bf16.msra.mxu0 %v4781
    %5634 = vmatprep.subr.bf16.mxu0 %v4789
    %5635 = vmatpush1.bf16.msra.mxu0 %v4788
    %5636 = vmatprep.subr.bf16.mxu0 %v4796
    %5637 = vmatpush1.bf16.msra.mxu0 %v4795
    %5638 = vmatprep.subr.bf16.mxu0 %v4803
    %5639 = vmatpush1.bf16.msra.mxu0 %v4802
    %5640 = vmatprep.subr.bf16.mxu0 %v4810
    %5641 = vmatpush1.bf16.msra.mxu0 %v4809
    %5642 = vmatprep.subr.bf16.mxu0 %v4817
    %5643 = vmatpush1.bf16.msra.mxu0 %v4816
    %5644 = vmatprep.subr.bf16.mxu0 %v4824
    %5645 = vmatpush1.bf16.msra.mxu0 %v4823
    %5646 = vmatprep.mubr.bf16.mxu0 %v2754
    %5647 = vmatmul.mubr.bf16.gmra.mrb[0].mxu0 %v2753
    %v5648 = vpop.f32.mrb[0].mxu0
    %v5649 = vadd.f32 %v3278, %v5648
    %v5650 = vpop.f32.mrb[0].mxu0
    %v5651 = vadd.f32 %v3282, %v5650
    %v5652 = vpop.f32.mrb[0].mxu0
    %v5653 = vpop.f32.mrb[0].mxu0
    %5654 = vdwg.mxu0
    %5655 = vmatprep.subr.bf16.mxu0 %v4831
    %5656 = vmatpush1.bf16.msra.mxu0 %v4830
    %5657 = vmatprep.subr.bf16.mxu0 %v4838
    %5658 = vmatpush1.bf16.msra.mxu0 %v4837
    %5659 = vmatprep.subr.bf16.mxu0 %v4845
    %5660 = vmatpush1.bf16.msra.mxu0 %v4844
    %5661 = vmatprep.subr.bf16.mxu0 %v4852
    %5662 = vmatpush1.bf16.msra.mxu0 %v4851
    %5663 = vmatprep.subr.bf16.mxu0 %v4859
    %5664 = vmatpush1.bf16.msra.mxu0 %v4858
    %5665 = vmatprep.subr.bf16.mxu0 %v4866
    %5666 = vmatpush1.bf16.msra.mxu0 %v4865
    %5667 = vmatprep.subr.bf16.mxu0 %v4873
    %5668 = vmatpush1.bf16.msra.mxu0 %v4872
    %5669 = vmatprep.subr.bf16.mxu0 %v4880
    %5670 = vmatpush1.bf16.msra.mxu0 %v4879
    %5671 = vmatprep.subr.bf16.mxu0 %v4887
    %5672 = vmatpush1.bf16.msra.mxu0 %v4886
    %5673 = vmatprep.subr.bf16.mxu0 %v4894
    %5674 = vmatpush1.bf16.msra.mxu0 %v4893
    %5675 = vmatprep.subr.bf16.mxu0 %v4901
    %5676 = vmatpush1.bf16.msra.mxu0 %v4900
    %5677 = vmatprep.subr.bf16.mxu0 %v4908
    %5678 = vmatpush1.bf16.msra.mxu0 %v4907
    %5679 = vmatprep.subr.bf16.mxu0 %v4915
    %5680 = vmatpush1.bf16.msra.mxu0 %v4914
    %5681 = vmatprep.subr.bf16.mxu0 %v4922
    %5682 = vmatpush1.bf16.msra.mxu0 %v4921
    %5683 = vmatprep.subr.bf16.mxu0 %v4929
    %5684 = vmatpush1.bf16.msra.mxu0 %v4928
    %5685 = vmatprep.subr.bf16.mxu0 %v4936
    %5686 = vmatpush1.bf16.msra.mxu0 %v4935
    %5687 = vmatprep.mubr.bf16.mxu0 %v2756
    %5688 = vmatmul.mubr.bf16.gmra.mrb[0].mxu0 %v2755
    %v5689 = vpop.f32.mrb[0].mxu0
    %v5690 = vadd.f32 %v5649, %v5689
    %v5691 = vpop.f32.mrb[0].mxu0
    %v5692 = vadd.f32 %v5651, %v5691
    %v5693 = vpop.f32.mrb[0].mxu0
    %v5694 = vpop.f32.mrb[0].mxu0
    %5695 = vdwg.mxu0
    %5696 = vmatprep.subr.bf16.mxu0 %v4943
    %5697 = vmatpush1.bf16.msra.mxu0 %v4942
    %5698 = vmatprep.subr.bf16.mxu0 %v4950
    %5699 = vmatpush1.bf16.msra.mxu0 %v4949
    %5700 = vmatprep.subr.bf16.mxu0 %v4957
    %5701 = vmatpush1.bf16.msra.mxu0 %v4956
    %5702 = vmatprep.subr.bf16.mxu0 %v4964
    %5703 = vmatpush1.bf16.msra.mxu0 %v4963
    %5704 = vmatprep.subr.bf16.mxu0 %v4971
    %5705 = vmatpush1.bf16.msra.mxu0 %v4970
    %5706 = vmatprep.subr.bf16.mxu0 %v4978
    %5707 = vmatpush1.bf16.msra.mxu0 %v4977
    %5708 = vmatprep.subr.bf16.mxu0 %v4985
    %5709 = vmatpush1.bf16.msra.mxu0 %v4984
    %5710 = vmatprep.subr.bf16.mxu0 %v4992
    %5711 = vmatpush1.bf16.msra.mxu0 %v4991
    %5712 = vmatprep.subr.bf16.mxu0 %v4999
    %5713 = vmatpush1.bf16.msra.mxu0 %v4998
    %5714 = vmatprep.subr.bf16.mxu0 %v5006
    %5715 = vmatpush1.bf16.msra.mxu0 %v5005
    %5716 = vmatprep.subr.bf16.mxu0 %v5013
    %5717 = vmatpush1.bf16.msra.mxu0 %v5012
    %5718 = vmatprep.subr.bf16.mxu0 %v5020
    %5719 = vmatpush1.bf16.msra.mxu0 %v5019
    %5720 = vmatprep.subr.bf16.mxu0 %v5027
    %5721 = vmatpush1.bf16.msra.mxu0 %v5026
    %5722 = vmatprep.subr.bf16.mxu0 %v5034
    %5723 = vmatpush1.bf16.msra.mxu0 %v5033
    %5724 = vmatprep.subr.bf16.mxu0 %v5041
    %5725 = vmatpush1.bf16.msra.mxu0 %v5040
    %5726 = vmatprep.subr.bf16.mxu0 %v5048
    %5727 = vmatpush1.bf16.msra.mxu0 %v5047
    %5728 = vmatprep.mubr.bf16.mxu0 %v2758
    %5729 = vmatmul.mubr.bf16.gmra.mrb[0].mxu0 %v2757
    %v5730 = vpop.f32.mrb[0].mxu0
    %v5731 = vadd.f32 %v5690, %v5730
    %v5732 = vpop.f32.mrb[0].mxu0
    %v5733 = vadd.f32 %v5692, %v5732
    %v5734 = vpop.f32.mrb[0].mxu0
    %v5735 = vpop.f32.mrb[0].mxu0
    %5736 = vdwg.mxu0
    %5737 = vmatprep.subr.bf16.mxu0 %v5055
    %5738 = vmatpush1.bf16.msra.mxu0 %v5054
    %5739 = vmatprep.subr.bf16.mxu0 %v5062
    %5740 = vmatpush1.bf16.msra.mxu0 %v5061
    %5741 = vmatprep.subr.bf16.mxu0 %v5069
    %5742 = vmatpush1.bf16.msra.mxu0 %v5068
    %5743 = vmatprep.subr.bf16.mxu0 %v5076
    %5744 = vmatpush1.bf16.msra.mxu0 %v5075
    %5745 = vmatprep.subr.bf16.mxu0 %v5083
    %5746 = vmatpush1.bf16.msra.mxu0 %v5082
    %5747 = vmatprep.subr.bf16.mxu0 %v5090
    %5748 = vmatpush1.bf16.msra.mxu0 %v5089
    %5749 = vmatprep.subr.bf16.mxu0 %v5097
    %5750 = vmatpush1.bf16.msra.mxu0 %v5096
    %5751 = vmatprep.subr.bf16.mxu0 %v5104
    %5752 = vmatpush1.bf16.msra.mxu0 %v5103
    %5753 = vmatprep.subr.bf16.mxu0 %v5111
    %5754 = vmatpush1.bf16.msra.mxu0 %v5110
    %5755 = vmatprep.subr.bf16.mxu0 %v5118
    %5756 = vmatpush1.bf16.msra.mxu0 %v5117
    %5757 = vmatprep.subr.bf16.mxu0 %v5125
    %5758 = vmatpush1.bf16.msra.mxu0 %v5124
    %5759 = vmatprep.subr.bf16.mxu0 %v5132
    %5760 = vmatpush1.bf16.msra.mxu0 %v5131
    %5761 = vmatprep.subr.bf16.mxu0 %v5139
    %5762 = vmatpush1.bf16.msra.mxu0 %v5138
    %5763 = vmatprep.subr.bf16.mxu0 %v5146
    %5764 = vmatpush1.bf16.msra.mxu0 %v5145
    %5765 = vmatprep.subr.bf16.mxu0 %v5153
    %5766 = vmatpush1.bf16.msra.mxu0 %v5152
    %5767 = vmatprep.subr.bf16.mxu0 %v5160
    %5768 = vmatpush1.bf16.msra.mxu0 %v5159
    %5769 = vmatprep.mubr.bf16.mxu0 %v2760
    %5770 = vmatmul.mubr.bf16.gmra.mrb[0].mxu0 %v2759
    %v5771 = vpop.f32.mrb[0].mxu0
    %v5772 = vadd.f32 %v5731, %v5771
    %v5773 = vpop.f32.mrb[0].mxu0
    %v5774 = vadd.f32 %v5733, %v5773
    %v5775 = vpop.f32.mrb[0].mxu0
    %v5776 = vpop.f32.mrb[0].mxu0
    %5777 = vdwg.mxu0
    %5778 = vmatprep.subr.bf16.mxu0 %v4721
    %5779 = vmatpush1.bf16.msra.mxu0 %v4720
    %5780 = vmatprep.subr.bf16.mxu0 %v4728
    %5781 = vmatpush1.bf16.msra.mxu0 %v4727
    %5782 = vmatprep.subr.bf16.mxu0 %v4735
    %5783 = vmatpush1.bf16.msra.mxu0 %v4734
    %5784 = vmatprep.subr.bf16.mxu0 %v4742
    %5785 = vmatpush1.bf16.msra.mxu0 %v4741
    %5786 = vmatprep.subr.bf16.mxu0 %v4749
    %5787 = vmatpush1.bf16.msra.mxu0 %v4748
    %5788 = vmatprep.subr.bf16.mxu0 %v4756
    %5789 = vmatpush1.bf16.msra.mxu0 %v4755
    %5790 = vmatprep.subr.bf16.mxu0 %v4763
    %5791 = vmatpush1.bf16.msra.mxu0 %v4762
    %5792 = vmatprep.subr.bf16.mxu0 %v4770
    %5793 = vmatpush1.bf16.msra.mxu0 %v4769
    %5794 = vmatprep.subr.bf16.mxu0 %v4777
    %5795 = vmatpush1.bf16.msra.mxu0 %v4776
    %5796 = vmatprep.subr.bf16.mxu0 %v4784
    %5797 = vmatpush1.bf16.msra.mxu0 %v4783
    %5798 = vmatprep.subr.bf16.mxu0 %v4791
    %5799 = vmatpush1.bf16.msra.mxu0 %v4790
    %5800 = vmatprep.subr.bf16.mxu0 %v4798
    %5801 = vmatpush1.bf16.msra.mxu0 %v4797
    %5802 = vmatprep.subr.bf16.mxu0 %v4805
    %5803 = vmatpush1.bf16.msra.mxu0 %v4804
    %5804 = vmatprep.subr.bf16.mxu0 %v4812
    %5805 = vmatpush1.bf16.msra.mxu0 %v4811
    %5806 = vmatprep.subr.bf16.mxu0 %v4819
    %5807 = vmatpush1.bf16.msra.mxu0 %v4818
    %5808 = vmatprep.subr.bf16.mxu0 %v4826
    %5809 = vmatpush1.bf16.msra.mxu0 %v4825
    %5810 = vmatprep.mubr.bf16.mxu0 %v2754
    %5811 = vmatmul.mubr.bf16.gmra.mrb[0].mxu0 %v2753
    %v5812 = vpop.f32.mrb[0].mxu0
    %v5813 = vadd.f32 %v3286, %v5812
    %v5814 = vpop.f32.mrb[0].mxu0
    %v5815 = vadd.f32 %v3290, %v5814
    %v5816 = vpop.f32.mrb[0].mxu0
    %v5817 = vpop.f32.mrb[0].mxu0
    %5818 = vdwg.mxu0
    %5819 = vmatprep.subr.bf16.mxu0 %v4833
    %5820 = vmatpush1.bf16.msra.mxu0 %v4832
    %5821 = vmatprep.subr.bf16.mxu0 %v4840
    %5822 = vmatpush1.bf16.msra.mxu0 %v4839
    %5823 = vmatprep.subr.bf16.mxu0 %v4847
    %5824 = vmatpush1.bf16.msra.mxu0 %v4846
    %5825 = vmatprep.subr.bf16.mxu0 %v4854
    %5826 = vmatpush1.bf16.msra.mxu0 %v4853
    %5827 = vmatprep.subr.bf16.mxu0 %v4861
    %5828 = vmatpush1.bf16.msra.mxu0 %v4860
    %5829 = vmatprep.subr.bf16.mxu0 %v4868
    %5830 = vmatpush1.bf16.msra.mxu0 %v4867
    %5831 = vmatprep.subr.bf16.mxu0 %v4875
    %5832 = vmatpush1.bf16.msra.mxu0 %v4874
    %5833 = vmatprep.subr.bf16.mxu0 %v4882
    %5834 = vmatpush1.bf16.msra.mxu0 %v4881
    %5835 = vmatprep.subr.bf16.mxu0 %v4889
    %5836 = vmatpush1.bf16.msra.mxu0 %v4888
    %5837 = vmatprep.subr.bf16.mxu0 %v4896
    %5838 = vmatpush1.bf16.msra.mxu0 %v4895
    %5839 = vmatprep.subr.bf16.mxu0 %v4903
    %5840 = vmatpush1.bf16.msra.mxu0 %v4902
    %5841 = vmatprep.subr.bf16.mxu0 %v4910
    %5842 = vmatpush1.bf16.msra.mxu0 %v4909
    %5843 = vmatprep.subr.bf16.mxu0 %v4917
    %5844 = vmatpush1.bf16.msra.mxu0 %v4916
    %5845 = vmatprep.subr.bf16.mxu0 %v4924
    %5846 = vmatpush1.bf16.msra.mxu0 %v4923
    %5847 = vmatprep.subr.bf16.mxu0 %v4931
    %5848 = vmatpush1.bf16.msra.mxu0 %v4930
    %5849 = vmatprep.subr.bf16.mxu0 %v4938
    %5850 = vmatpush1.bf16.msra.mxu0 %v4937
    %5851 = vmatprep.mubr.bf16.mxu0 %v2756
    %5852 = vmatmul.mubr.bf16.gmra.mrb[0].mxu0 %v2755
    %v5853 = vpop.f32.mrb[0].mxu0
    %v5854 = vadd.f32 %v5813, %v5853
    %v5855 = vpop.f32.mrb[0].mxu0
    %v5856 = vadd.f32 %v5815, %v5855
    %v5857 = vpop.f32.mrb[0].mxu0
    %v5858 = vpop.f32.mrb[0].mxu0
    %5859 = vdwg.mxu0
    %5860 = vmatprep.subr.bf16.mxu0 %v4945
    %5861 = vmatpush1.bf16.msra.mxu0 %v4944
    %5862 = vmatprep.subr.bf16.mxu0 %v4952
    %5863 = vmatpush1.bf16.msra.mxu0 %v4951
    %5864 = vmatprep.subr.bf16.mxu0 %v4959
    %5865 = vmatpush1.bf16.msra.mxu0 %v4958
    %5866 = vmatprep.subr.bf16.mxu0 %v4966
    %5867 = vmatpush1.bf16.msra.mxu0 %v4965
    %5868 = vmatprep.subr.bf16.mxu0 %v4973
    %5869 = vmatpush1.bf16.msra.mxu0 %v4972
    %5870 = vmatprep.subr.bf16.mxu0 %v4980
    %5871 = vmatpush1.bf16.msra.mxu0 %v4979
    %5872 = vmatprep.subr.bf16.mxu0 %v4987
    %5873 = vmatpush1.bf16.msra.mxu0 %v4986
    %5874 = vmatprep.subr.bf16.mxu0 %v4994
    %5875 = vmatpush1.bf16.msra.mxu0 %v4993
    %5876 = vmatprep.subr.bf16.mxu0 %v5001
    %5877 = vmatpush1.bf16.msra.mxu0 %v5000
    %5878 = vmatprep.subr.bf16.mxu0 %v5008
    %5879 = vmatpush1.bf16.msra.mxu0 %v5007
    %5880 = vmatprep.subr.bf16.mxu0 %v5015
    %5881 = vmatpush1.bf16.msra.mxu0 %v5014
    %5882 = vmatprep.subr.bf16.mxu0 %v5022
    %5883 = vmatpush1.bf16.msra.mxu0 %v5021
    %5884 = vmatprep.subr.bf16.mxu0 %v5029
    %5885 = vmatpush1.bf16.msra.mxu0 %v5028
    %5886 = vmatprep.subr.bf16.mxu0 %v5036
    %5887 = vmatpush1.bf16.msra.mxu0 %v5035
    %5888 = vmatprep.subr.bf16.mxu0 %v5043
    %5889 = vmatpush1.bf16.msra.mxu0 %v5042
    %5890 = vmatprep.subr.bf16.mxu0 %v5050
    %5891 = vmatpush1.bf16.msra.mxu0 %v5049
    %5892 = vmatprep.mubr.bf16.mxu0 %v2758
    %5893 = vmatmul.mubr.bf16.gmra.mrb[0].mxu0 %v2757
    %v5894 = vpop.f32.mrb[0].mxu0
    %v5895 = vadd.f32 %v5854, %v5894
    %v5896 = vpop.f32.mrb[0].mxu0
    %v5897 = vadd.f32 %v5856, %v5896
    %v5898 = vpop.f32.mrb[0].mxu0
    %v5899 = vpop.f32.mrb[0].mxu0
    %5900 = vdwg.mxu0
    %5901 = vmatprep.subr.bf16.mxu0 %v5057
    %5902 = vmatpush1.bf16.msra.mxu0 %v5056
    %5903 = vmatprep.subr.bf16.mxu0 %v5064
    %5904 = vmatpush1.bf16.msra.mxu0 %v5063
    %5905 = vmatprep.subr.bf16.mxu0 %v5071
    %5906 = vmatpush1.bf16.msra.mxu0 %v5070
    %5907 = vmatprep.subr.bf16.mxu0 %v5078
    %5908 = vmatpush1.bf16.msra.mxu0 %v5077
    %5909 = vmatprep.subr.bf16.mxu0 %v5085
    %5910 = vmatpush1.bf16.msra.mxu0 %v5084
    %5911 = vmatprep.subr.bf16.mxu0 %v5092
    %5912 = vmatpush1.bf16.msra.mxu0 %v5091
    %5913 = vmatprep.subr.bf16.mxu0 %v5099
    %5914 = vmatpush1.bf16.msra.mxu0 %v5098
    %5915 = vmatprep.subr.bf16.mxu0 %v5106
    %5916 = vmatpush1.bf16.msra.mxu0 %v5105
    %5917 = vmatprep.subr.bf16.mxu0 %v5113
    %5918 = vmatpush1.bf16.msra.mxu0 %v5112
    %5919 = vmatprep.subr.bf16.mxu0 %v5120
    %5920 = vmatpush1.bf16.msra.mxu0 %v5119
    %5921 = vmatprep.subr.bf16.mxu0 %v5127
    %5922 = vmatpush1.bf16.msra.mxu0 %v5126
    %5923 = vmatprep.subr.bf16.mxu0 %v5134
    %5924 = vmatpush1.bf16.msra.mxu0 %v5133
    %5925 = vmatprep.subr.bf16.mxu0 %v5141
    %5926 = vmatpush1.bf16.msra.mxu0 %v5140
    %5927 = vmatprep.subr.bf16.mxu0 %v5148
    %5928 = vmatpush1.bf16.msra.mxu0 %v5147
    %5929 = vmatprep.subr.bf16.mxu0 %v5155
    %5930 = vmatpush1.bf16.msra.mxu0 %v5154
    %5931 = vmatprep.subr.bf16.mxu0 %v5162
    %5932 = vmatpush1.bf16.msra.mxu0 %v5161
    %5933 = vmatprep.mubr.bf16.mxu0 %v2760
    %5934 = vmatmul.mubr.bf16.gmra.mrb[0].mxu0 %v2759
    %v5935 = vpop.f32.mrb[0].mxu0
    %v5936 = vadd.f32 %v5895, %v5935
    %v5937 = vpop.f32.mrb[0].mxu0
    %v5938 = vadd.f32 %v5897, %v5937
    %v5939 = vpop.f32.mrb[0].mxu0
    %v5940 = vpop.f32.mrb[0].mxu0
    %5941 = vdwg.mxu0
    %5942 = vmatprep.subr.bf16.mxu0 %v4723
    %5943 = vmatpush1.bf16.msra.mxu0 %v4722
    %5944 = vmatprep.subr.bf16.mxu0 %v4730
    %5945 = vmatpush1.bf16.msra.mxu0 %v4729
    %5946 = vmatprep.subr.bf16.mxu0 %v4737
    %5947 = vmatpush1.bf16.msra.mxu0 %v4736
    %5948 = vmatprep.subr.bf16.mxu0 %v4744
    %5949 = vmatpush1.bf16.msra.mxu0 %v4743
    %5950 = vmatprep.subr.bf16.mxu0 %v4751
    %5951 = vmatpush1.bf16.msra.mxu0 %v4750
    %5952 = vmatprep.subr.bf16.mxu0 %v4758
    %5953 = vmatpush1.bf16.msra.mxu0 %v4757
    %5954 = vmatprep.subr.bf16.mxu0 %v4765
    %5955 = vmatpush1.bf16.msra.mxu0 %v4764
    %5956 = vmatprep.subr.bf16.mxu0 %v4772
    %5957 = vmatpush1.bf16.msra.mxu0 %v4771
    %5958 = vmatprep.subr.bf16.mxu0 %v4779
    %5959 = vmatpush1.bf16.msra.mxu0 %v4778
    %5960 = vmatprep.subr.bf16.mxu0 %v4786
    %5961 = vmatpush1.bf16.msra.mxu0 %v4785
    %5962 = vmatprep.subr.bf16.mxu0 %v4793
    %5963 = vmatpush1.bf16.msra.mxu0 %v4792
    %5964 = vmatprep.subr.bf16.mxu0 %v4800
    %5965 = vmatpush1.bf16.msra.mxu0 %v4799
    %5966 = vmatprep.subr.bf16.mxu0 %v4807
    %5967 = vmatpush1.bf16.msra.mxu0 %v4806
    %5968 = vmatprep.subr.bf16.mxu0 %v4814
    %5969 = vmatpush1.bf16.msra.mxu0 %v4813
    %5970 = vmatprep.subr.bf16.mxu0 %v4821
    %5971 = vmatpush1.bf16.msra.mxu0 %v4820
    %5972 = vmatprep.subr.bf16.mxu0 %v4828
    %5973 = vmatpush1.bf16.msra.mxu0 %v4827
    %5974 = vmatprep.mubr.bf16.mxu0 %v2754
    %5975 = vmatmul.mubr.bf16.gmra.mrb[0].mxu0 %v2753
    %v5976 = vpop.f32.mrb[0].mxu0
    %v5977 = vadd.f32 %v3294, %v5976
    %v5978 = vpop.f32.mrb[0].mxu0
    %v5979 = vadd.f32 %v3298, %v5978
    %v5980 = vpop.f32.mrb[0].mxu0
    %v5981 = vpop.f32.mrb[0].mxu0
    %5982 = vdwg.mxu0
    %5983 = vmatprep.subr.bf16.mxu0 %v4835
    %5984 = vmatpush1.bf16.msra.mxu0 %v4834
    %5985 = vmatprep.subr.bf16.mxu0 %v4842
    %5986 = vmatpush1.bf16.msra.mxu0 %v4841
    %5987 = vmatprep.subr.bf16.mxu0 %v4849
    %5988 = vmatpush1.bf16.msra.mxu0 %v4848
    %5989 = vmatprep.subr.bf16.mxu0 %v4856
    %5990 = vmatpush1.bf16.msra.mxu0 %v4855
    %5991 = vmatprep.subr.bf16.mxu0 %v4863
    %5992 = vmatpush1.bf16.msra.mxu0 %v4862
    %5993 = vmatprep.subr.bf16.mxu0 %v4870
    %5994 = vmatpush1.bf16.msra.mxu0 %v4869
    %5995 = vmatprep.subr.bf16.mxu0 %v4877
    %5996 = vmatpush1.bf16.msra.mxu0 %v4876
    %5997 = vmatprep.subr.bf16.mxu0 %v4884
    %5998 = vmatpush1.bf16.msra.mxu0 %v4883
    %5999 = vmatprep.subr.bf16.mxu0 %v4891
    %6000 = vmatpush1.bf16.msra.mxu0 %v4890
    %6001 = vmatprep.subr.bf16.mxu0 %v4898
    %6002 = vmatpush1.bf16.msra.mxu0 %v4897
    %6003 = vmatprep.subr.bf16.mxu0 %v4905
    %6004 = vmatpush1.bf16.msra.mxu0 %v4904
    %6005 = vmatprep.subr.bf16.mxu0 %v4912
    %6006 = vmatpush1.bf16.msra.mxu0 %v4911
    %6007 = vmatprep.subr.bf16.mxu0 %v4919
    %6008 = vmatpush1.bf16.msra.mxu0 %v4918
    %6009 = vmatprep.subr.bf16.mxu0 %v4926
    %6010 = vmatpush1.bf16.msra.mxu0 %v4925
    %6011 = vmatprep.subr.bf16.mxu0 %v4933
    %6012 = vmatpush1.bf16.msra.mxu0 %v4932
    %6013 = vmatprep.subr.bf16.mxu0 %v4940
    %6014 = vmatpush1.bf16.msra.mxu0 %v4939
    %6015 = vmatprep.mubr.bf16.mxu0 %v2756
    %6016 = vmatmul.mubr.bf16.gmra.mrb[0].mxu0 %v2755
    %v6017 = vpop.f32.mrb[0].mxu0
    %v6018 = vadd.f32 %v5977, %v6017
    %v6019 = vpop.f32.mrb[0].mxu0
    %v6020 = vadd.f32 %v5979, %v6019
    %v6021 = vpop.f32.mrb[0].mxu0
    %v6022 = vpop.f32.mrb[0].mxu0
    %6023 = vdwg.mxu0
    %6024 = vmatprep.subr.bf16.mxu0 %v4947
    %6025 = vmatpush1.bf16.msra.mxu0 %v4946
    %6026 = vmatprep.subr.bf16.mxu0 %v4954
    %6027 = vmatpush1.bf16.msra.mxu0 %v4953
    %6028 = vmatprep.subr.bf16.mxu0 %v4961
    %6029 = vmatpush1.bf16.msra.mxu0 %v4960
    %6030 = vmatprep.subr.bf16.mxu0 %v4968
    %6031 = vmatpush1.bf16.msra.mxu0 %v4967
    %6032 = vmatprep.subr.bf16.mxu0 %v4975
    %6033 = vmatpush1.bf16.msra.mxu0 %v4974
    %6034 = vmatprep.subr.bf16.mxu0 %v4982
    %6035 = vmatpush1.bf16.msra.mxu0 %v4981
    %6036 = vmatprep.subr.bf16.mxu0 %v4989
    %6037 = vmatpush1.bf16.msra.mxu0 %v4988
    %6038 = vmatprep.subr.bf16.mxu0 %v4996
    %6039 = vmatpush1.bf16.msra.mxu0 %v4995
    %6040 = vmatprep.subr.bf16.mxu0 %v5003
    %6041 = vmatpush1.bf16.msra.mxu0 %v5002
    %6042 = vmatprep.subr.bf16.mxu0 %v5010
    %6043 = vmatpush1.bf16.msra.mxu0 %v5009
    %6044 = vmatprep.subr.bf16.mxu0 %v5017
    %6045 = vmatpush1.bf16.msra.mxu0 %v5016
    %6046 = vmatprep.subr.bf16.mxu0 %v5024
    %6047 = vmatpush1.bf16.msra.mxu0 %v5023
    %6048 = vmatprep.subr.bf16.mxu0 %v5031
    %6049 = vmatpush1.bf16.msra.mxu0 %v5030
    %6050 = vmatprep.subr.bf16.mxu0 %v5038
    %6051 = vmatpush1.bf16.msra.mxu0 %v5037
    %6052 = vmatprep.subr.bf16.mxu0 %v5045
    %6053 = vmatpush1.bf16.msra.mxu0 %v5044
    %6054 = vmatprep.subr.bf16.mxu0 %v5052
    %6055 = vmatpush1.bf16.msra.mxu0 %v5051
    %6056 = vmatprep.mubr.bf16.mxu0 %v2758
    %6057 = vmatmul.mubr.bf16.gmra.mrb[0].mxu0 %v2757
    %v6058 = vpop.f32.mrb[0].mxu0
    %v6059 = vadd.f32 %v6018, %v6058
    %v6060 = vpop.f32.mrb[0].mxu0
    %v6061 = vadd.f32 %v6020, %v6060
    %v6062 = vpop.f32.mrb[0].mxu0
    %v6063 = vpop.f32.mrb[0].mxu0
    %6064 = vdwg.mxu0
    %6065 = vmatprep.subr.bf16.mxu0 %v5059
    %6066 = vmatpush1.bf16.msra.mxu0 %v5058
    %6067 = vmatprep.subr.bf16.mxu0 %v5066
    %6068 = vmatpush1.bf16.msra.mxu0 %v5065
    %6069 = vmatprep.subr.bf16.mxu0 %v5073
    %6070 = vmatpush1.bf16.msra.mxu0 %v5072
    %6071 = vmatprep.subr.bf16.mxu0 %v5080
    %6072 = vmatpush1.bf16.msra.mxu0 %v5079
    %6073 = vmatprep.subr.bf16.mxu0 %v5087
    %6074 = vmatpush1.bf16.msra.mxu0 %v5086
    %6075 = vmatprep.subr.bf16.mxu0 %v5094
    %6076 = vmatpush1.bf16.msra.mxu0 %v5093
    %6077 = vmatprep.subr.bf16.mxu0 %v5101
    %6078 = vmatpush1.bf16.msra.mxu0 %v5100
    %6079 = vmatprep.subr.bf16.mxu0 %v5108
    %6080 = vmatpush1.bf16.msra.mxu0 %v5107
    %6081 = vmatprep.subr.bf16.mxu0 %v5115
    %6082 = vmatpush1.bf16.msra.mxu0 %v5114
    %6083 = vmatprep.subr.bf16.mxu0 %v5122
    %6084 = vmatpush1.bf16.msra.mxu0 %v5121
    %6085 = vmatprep.subr.bf16.mxu0 %v5129
    %6086 = vmatpush1.bf16.msra.mxu0 %v5128
    %6087 = vmatprep.subr.bf16.mxu0 %v5136
    %6088 = vmatpush1.bf16.msra.mxu0 %v5135
    %6089 = vmatprep.subr.bf16.mxu0 %v5143
    %6090 = vmatpush1.bf16.msra.mxu0 %v5142
    %6091 = vmatprep.subr.bf16.mxu0 %v5150
    %6092 = vmatpush1.bf16.msra.mxu0 %v5149
    %6093 = vmatprep.subr.bf16.mxu0 %v5157
    %6094 = vmatpush1.bf16.msra.mxu0 %v5156
    %6095 = vmatprep.subr.bf16.mxu0 %v5164
    %6096 = vmatpush1.bf16.msra.mxu0 %v5163
    %6097 = vmatprep.mubr.bf16.mxu0 %v2760
    %6098 = vmatmul.mubr.bf16.gmra.mrb[0].mxu0 %v2759
    %v6099 = vpop.f32.mrb[0].mxu0
    %v6100 = vadd.f32 %v6059, %v6099
    %v6101 = vpop.f32.mrb[0].mxu0
    %v6102 = vadd.f32 %v6061, %v6101
    %v6103 = vpop.f32.mrb[0].mxu0
    %v6104 = vpop.f32.mrb[0].mxu0
    %6105 = vdwg.mxu0
    %6106 = vmatprep.subr.bf16.mxu0 0
    %6107 = vmatpush1.bf16.msra.mxu0 %v4724
    %6108 = vmatprep.subr.bf16.mxu0 0
    %6109 = vmatpush1.bf16.msra.mxu0 %v4731
    %6110 = vmatprep.subr.bf16.mxu0 0
    %6111 = vmatpush1.bf16.msra.mxu0 %v4738
    %6112 = vmatprep.subr.bf16.mxu0 0
    %6113 = vmatpush1.bf16.msra.mxu0 %v4745
    %6114 = vmatprep.subr.bf16.mxu0 0
    %6115 = vmatpush1.bf16.msra.mxu0 %v4752
    %6116 = vmatprep.subr.bf16.mxu0 0
    %6117 = vmatpush1.bf16.msra.mxu0 %v4759
    %6118 = vmatprep.subr.bf16.mxu0 0
    %6119 = vmatpush1.bf16.msra.mxu0 %v4766
    %6120 = vmatprep.subr.bf16.mxu0 0
    %6121 = vmatpush1.bf16.msra.mxu0 %v4773
    %6122 = vmatprep.subr.bf16.mxu0 0
    %6123 = vmatpush1.bf16.msra.mxu0 %v4780
    %6124 = vmatprep.subr.bf16.mxu0 0
    %6125 = vmatpush1.bf16.msra.mxu0 %v4787
    %6126 = vmatprep.subr.bf16.mxu0 0
    %6127 = vmatpush1.bf16.msra.mxu0 %v4794
    %6128 = vmatprep.subr.bf16.mxu0 0
    %6129 = vmatpush1.bf16.msra.mxu0 %v4801
    %6130 = vmatprep.subr.bf16.mxu0 0
    %6131 = vmatpush1.bf16.msra.mxu0 %v4808
    %6132 = vmatprep.subr.bf16.mxu0 0
    %6133 = vmatpush1.bf16.msra.mxu0 %v4815
    %6134 = vmatprep.subr.bf16.mxu0 0
    %6135 = vmatpush1.bf16.msra.mxu0 %v4822
    %6136 = vmatprep.subr.bf16.mxu0 0
    %6137 = vmatpush1.bf16.msra.mxu0 %v4829
    %6138 = vmatprep.mubr.bf16.mxu0 %v2754
    %6139 = vmatmul.mubr.bf16.gmra.mrb[0].mxu0 %v2753
    %v6140 = vpop.f32.mrb[0].mxu0
    %v6141 = vadd.f32 %v3302, %v6140
    %v6142 = vpop.f32.mrb[0].mxu0
    %v6143 = vpop.f32.mrb[0].mxu0
    %v6144 = vpop.f32.mrb[0].mxu0
    %6145 = vdwg.mxu0
    %6146 = vmatprep.subr.bf16.mxu0 0
    %6147 = vmatpush1.bf16.msra.mxu0 %v4836
    %6148 = vmatprep.subr.bf16.mxu0 0
    %6149 = vmatpush1.bf16.msra.mxu0 %v4843
    %6150 = vmatprep.subr.bf16.mxu0 0
    %6151 = vmatpush1.bf16.msra.mxu0 %v4850
    %6152 = vmatprep.subr.bf16.mxu0 0
    %6153 = vmatpush1.bf16.msra.mxu0 %v4857
    %6154 = vmatprep.subr.bf16.mxu0 0
    %6155 = vmatpush1.bf16.msra.mxu0 %v4864
    %6156 = vmatprep.subr.bf16.mxu0 0
    %6157 = vmatpush1.bf16.msra.mxu0 %v4871
    %6158 = vmatprep.subr.bf16.mxu0 0
    %6159 = vmatpush1.bf16.msra.mxu0 %v4878
    %6160 = vmatprep.subr.bf16.mxu0 0
    %6161 = vmatpush1.bf16.msra.mxu0 %v4885
    %6162 = vmatprep.subr.bf16.mxu0 0
    %6163 = vmatpush1.bf16.msra.mxu0 %v4892
    %6164 = vmatprep.subr.bf16.mxu0 0
    %6165 = vmatpush1.bf16.msra.mxu0 %v4899
    %6166 = vmatprep.subr.bf16.mxu0 0
    %6167 = vmatpush1.bf16.msra.mxu0 %v4906
    %6168 = vmatprep.subr.bf16.mxu0 0
    %6169 = vmatpush1.bf16.msra.mxu0 %v4913
    %6170 = vmatprep.subr.bf16.mxu0 0
    %6171 = vmatpush1.bf16.msra.mxu0 %v4920
    %6172 = vmatprep.subr.bf16.mxu0 0
    %6173 = vmatpush1.bf16.msra.mxu0 %v4927
    %6174 = vmatprep.subr.bf16.mxu0 0
    %6175 = vmatpush1.bf16.msra.mxu0 %v4934
    %6176 = vmatprep.subr.bf16.mxu0 0
    %6177 = vmatpush1.bf16.msra.mxu0 %v4941
    %6178 = vmatprep.mubr.bf16.mxu0 %v2756
    %6179 = vmatmul.mubr.bf16.gmra.mrb[0].mxu0 %v2755
    %v6180 = vpop.f32.mrb[0].mxu0
    %v6181 = vadd.f32 %v6141, %v6180
    %v6182 = vpop.f32.mrb[0].mxu0
    %v6183 = vpop.f32.mrb[0].mxu0
    %v6184 = vpop.f32.mrb[0].mxu0
    %6185 = vdwg.mxu0
    %6186 = vmatprep.subr.bf16.mxu0 0
    %6187 = vmatpush1.bf16.msra.mxu0 %v4948
    %6188 = vmatprep.subr.bf16.mxu0 0
    %6189 = vmatpush1.bf16.msra.mxu0 %v4955
    %6190 = vmatprep.subr.bf16.mxu0 0
    %6191 = vmatpush1.bf16.msra.mxu0 %v4962
    %6192 = vmatprep.subr.bf16.mxu0 0
    %6193 = vmatpush1.bf16.msra.mxu0 %v4969
    %6194 = vmatprep.subr.bf16.mxu0 0
    %6195 = vmatpush1.bf16.msra.mxu0 %v4976
    %6196 = vmatprep.subr.bf16.mxu0 0
    %6197 = vmatpush1.bf16.msra.mxu0 %v4983
    %6198 = vmatprep.subr.bf16.mxu0 0
    %6199 = vmatpush1.bf16.msra.mxu0 %v4990
    %6200 = vmatprep.subr.bf16.mxu0 0
    %6201 = vmatpush1.bf16.msra.mxu0 %v4997
    %6202 = vmatprep.subr.bf16.mxu0 0
    %6203 = vmatpush1.bf16.msra.mxu0 %v5004
    %6204 = vmatprep.subr.bf16.mxu0 0
    %6205 = vmatpush1.bf16.msra.mxu0 %v5011
    %6206 = vmatprep.subr.bf16.mxu0 0
    %6207 = vmatpush1.bf16.msra.mxu0 %v5018
    %6208 = vmatprep.subr.bf16.mxu0 0
    %6209 = vmatpush1.bf16.msra.mxu0 %v5025
    %6210 = vmatprep.subr.bf16.mxu0 0
    %6211 = vmatpush1.bf16.msra.mxu0 %v5032
    %6212 = vmatprep.subr.bf16.mxu0 0
    %6213 = vmatpush1.bf16.msra.mxu0 %v5039
    %6214 = vmatprep.subr.bf16.mxu0 0
    %6215 = vmatpush1.bf16.msra.mxu0 %v5046
    %6216 = vmatprep.subr.bf16.mxu0 0
    %6217 = vmatpush1.bf16.msra.mxu0 %v5053
    %6218 = vmatprep.mubr.bf16.mxu0 %v2758
    %6219 = vmatmul.mubr.bf16.gmra.mrb[0].mxu0 %v2757
    %v6220 = vpop.f32.mrb[0].mxu0
    %v6221 = vadd.f32 %v6181, %v6220
    %v6222 = vpop.f32.mrb[0].mxu0
    %v6223 = vpop.f32.mrb[0].mxu0
    %v6224 = vpop.f32.mrb[0].mxu0
    %6225 = vdwg.mxu0
    %6226 = vmatprep.subr.bf16.mxu0 0
    %6227 = vmatpush1.bf16.msra.mxu0 %v5060
    %6228 = vmatprep.subr.bf16.mxu0 0
    %6229 = vmatpush1.bf16.msra.mxu0 %v5067
    %6230 = vmatprep.subr.bf16.mxu0 0
    %6231 = vmatpush1.bf16.msra.mxu0 %v5074
    %6232 = vmatprep.subr.bf16.mxu0 0
    %6233 = vmatpush1.bf16.msra.mxu0 %v5081
    %6234 = vmatprep.subr.bf16.mxu0 0
    %6235 = vmatpush1.bf16.msra.mxu0 %v5088
    %6236 = vmatprep.subr.bf16.mxu0 0
    %6237 = vmatpush1.bf16.msra.mxu0 %v5095
    %6238 = vmatprep.subr.bf16.mxu0 0
    %6239 = vmatpush1.bf16.msra.mxu0 %v5102
    %6240 = vmatprep.subr.bf16.mxu0 0
    %6241 = vmatpush1.bf16.msra.mxu0 %v5109
    %6242 = vmatprep.subr.bf16.mxu0 0
    %6243 = vmatpush1.bf16.msra.mxu0 %v5116
    %6244 = vmatprep.subr.bf16.mxu0 0
    %6245 = vmatpush1.bf16.msra.mxu0 %v5123
    %6246 = vmatprep.subr.bf16.mxu0 0
    %6247 = vmatpush1.bf16.msra.mxu0 %v5130
    %6248 = vmatprep.subr.bf16.mxu0 0
    %6249 = vmatpush1.bf16.msra.mxu0 %v5137
    %6250 = vmatprep.subr.bf16.mxu0 0
    %6251 = vmatpush1.bf16.msra.mxu0 %v5144
    %6252 = vmatprep.subr.bf16.mxu0 0
    %6253 = vmatpush1.bf16.msra.mxu0 %v5151
    %6254 = vmatprep.subr.bf16.mxu0 0
    %6255 = vmatpush1.bf16.msra.mxu0 %v5158
    %6256 = vmatprep.subr.bf16.mxu0 0
    %6257 = vmatpush1.bf16.msra.mxu0 %v5165
    %6258 = vmatprep.mubr.bf16.mxu0 %v2760
    %6259 = vmatmul.mubr.bf16.gmra.mrb[0].mxu0 %v2759
    %v6260 = vpop.f32.mrb[0].mxu0
    %v6261 = vadd.f32 %v6221, %v6260
    %v6262 = vpop.f32.mrb[0].mxu0
    %v6263 = vpop.f32.mrb[0].mxu0
    %v6264 = vpop.f32.mrb[0].mxu0
    %6265 = vdwg.mxu0
    %v6266 = vtanh.pop %v5772
    %v6267 = vtanh.pop %v5774
    %v6268 = vtanh.pop %v5936
    %v6269 = vtanh.pop %v5938
    %v6270 = vtanh.pop %v6100
    %v6271 = vtanh.pop %v6102
    %v6272 = vtanh.pop %v6261
    %6273 = vst [vmem:[#allocation2] sm:$0xff] %v6266
    %6274 = vst [vmem:[#allocation2 + $0x8] sm:$0xff] %v6267
    %6275 = vst [vmem:[#allocation2 + $0x10] sm:$0xff] %v6268
    %6276 = vst [vmem:[#allocation2 + $0x18] sm:$0xff] %v6269
    %6277 = vst [vmem:[#allocation2 + $0x20] sm:$0xff] %v6270
    %6278 = vst [vmem:[#allocation2 + $0x28] sm:$0xff] %v6271
    %vm6279 = vcmask 130048
    %6280 = vst.msk [vmem:[#allocation2 + $0x30] sm:$0xff] %vm6279, %v6272
    // Predicated region
    $region38: #{tpu_custom_call.1} parent=1 // pred_check
      _
    $region39: #{tpu_custom_call.1} parent=1 // pred_check_branch
      %6282 = sbr.rel (0) target = $region41
    $region40: #{tpu_custom_call.1} parent=1 // pred_region
      %s6284 = ssub.s32 896, 896
      %6285 = vsyncadd [#allocation3], %s6284
      %s6287 = sshll.u32 [#allocation2], 4
      %s6288 = int_to_ptr.vmem [resolvable:$true] %s6287
      %6290 = dma.vmem_to_hbm [thread:$0]  %s6288, 896, %s9, [#allocation3]
    $region41: #{tpu_custom_call.1} parent=1 // pred_fallthru
      _
    // Predicated region
    $region42: #{tpu_custom_call.1} parent=1 // pred_check
      _
    $region43: #{tpu_custom_call.1} parent=1 // pred_check_branch
      %6292 = sbr.rel (0) target = $region45
    $region44: #{tpu_custom_call.1} parent=1 // pred_region
      %6293 = dma.done [#allocation3], 896
    $region45: #{tpu_custom_call.1} parent=1 // pred_fallthru
      _
    %6294 = vsyncpa [#allocation3], 1

</llo_original>
